<compile_context>
chip_gen: v5e
topology: v5e:2x2
jax: 0.10.0
libtpu: 0.0.40
codegen_flags: <defaults>
</compile_context>

<pallas_src>
import functools

import jax
import jax.numpy as jnp
from jax import lax
from jax.experimental import pallas as pl
from jax.experimental.pallas import tpu as pltpu

_VMEM_LIMIT = 32 * 1024 * 1024  # safe on v5e/v6e (128 MiB) and v7x (64 MiB)


def _round_up(x, m):
    return ((x + m - 1) // m) * m


def _row_tile(m, cap=1024):
    """Largest multiple-of-8 divisor of m that is <= cap (None if none)."""
    best, t = None, 8
    while t <= min(cap, m):
        if m % t == 0:
            best = t
        t += 8
    return best


# ----------------------------- Pallas kernels -----------------------------

def conv_pass_a_kernel(x_ref, w_ref, z_ref, sum_ref, sq_ref, *, nb, lout, wc, offs):
    """Fused 3x3/stride-2 conv (phase layout) + per-channel sum / sum-of-squares.

    x_ref:   (NB, Rp, 4*Cin) bf16 phase-layout input block (Rp rows per sample)
    w_ref:   (4, 4*Cin, Cout) bf16 tap-group weight slabs
    z_ref:   (NB, Lout, Cout) bf16 pre-BN output (Lout = Ho*(Wo+1); col Wo junk)
    sum_ref: (1, 8, Cout) f32 accumulator, resident across the inner grid axis
    sq_ref:  (1, 8, Cout) f32 accumulator
    """
    @pl.when(pl.program_id(1) == 0)
    def _():
        sum_ref[...] = jnp.zeros_like(sum_ref)
        sq_ref[...] = jnp.zeros_like(sq_ref)

    cout = z_ref.shape[-1]
    # output slot q = i*wc + j is junk when j == wc-1
    q = lax.broadcasted_iota(jnp.int32, (lout, cout), 0)
    valid = (q % wc) != (wc - 1)

    psum = jnp.zeros((1, cout), jnp.float32)
    psq = jnp.zeros((1, cout), jnp.float32)
    for s in range(nb):
        acc = jnp.zeros((lout, cout), jnp.float32)
        for g in range(4):
            win = x_ref[s, offs[g]:offs[g] + lout, :]          # (Lout, 4*Cin)
            acc = acc + jnp.dot(win, w_ref[g],
                                preferred_element_type=jnp.float32)
        acc = jnp.where(valid, acc, 0.0)                       # zero junk rows
        z_ref[s] = acc.astype(z_ref.dtype)
        psum = psum + jnp.sum(acc, axis=0, keepdims=True)
        psq = psq + jnp.sum(acc * acc, axis=0, keepdims=True)

    sum_ref[...] += psum[None]
    sq_ref[...] += psq[None]


def bn_relu_kernel(z_ref, scale_ref, shift_ref, o_ref):
    """y = max(z * scale + shift, 0) over a lane-dense (>=128-wide) 2-D view."""
    y = z_ref[...].astype(jnp.float32) * scale_ref[...] + shift_ref[...]
    o_ref[...] = jnp.maximum(y, 0.0).astype(o_ref.dtype)


def fc_kernel(x_ref, w_ref, b_ref, o_ref):
    """Fused classifier: (N, d) @ (d, classes) + bias (fc1 o fc2 pre-fused)."""
    o_ref[...] = (jnp.dot(x_ref[...], w_ref[...],
                          preferred_element_type=jnp.float32) + b_ref[...])


# ------------------------------ call helpers -------------------------------

def conv_bn_relu(x_nhwc, w_slab, gamma, beta, *, eps=1e-5):
    """3x3/stride-2/pad-1 conv (no bias) + BatchNorm2d (batch stats) + ReLU.

    x_nhwc: (N, H, W, Cin)   w_slab: (4, 4*Cin, Cout) bf16   gamma/beta: (Cout,)
    returns: (N, H//2, W//2, Cout) bf16
    """
    n, h, w, cin = x_nhwc.shape
    kin, cout = w_slab.shape[1], w_slab.shape[2]
    assert kin == 4 * cin
    assert h % 2 == 0 and w % 2 == 0, "expects even spatial dims"
    ho, wo = h // 2, w // 2
    hc, wc = ho + 1, wo + 1
    r = hc * wc
    lout = ho * wc                      # output rows per sample (incl. junk col)
    rp = _round_up(r + 1, 8)            # per-sample input rows (tail zero-padded)

    # batch tiling: NB samples per grid step; leading size-2 axis -> 2 TCs on v7x
    nb = max(1, min(8, 1024 // lout, pl.cdiv(n, 2)))
    g2 = pl.cdiv(n, 2 * nb)
    n_pad = 2 * nb * g2

    # Space-to-depth phase relayout (glue, ~1x input bytes; replaces im2col).
    xb = x_nhwc.astype(jnp.bfloat16)
    xp = jnp.pad(xb, ((0, n_pad - n), (1, 1), (1, 1), (0, 0)))
    xq = (xp.reshape(n_pad, hc, 2, wc, 2, cin)
            .transpose(0, 1, 3, 2, 4, 5)
            .reshape(n_pad, r, kin))
    xq = jnp.pad(xq, ((0, 0), (0, rp - r), (0, 0)))

    offs = (0, 1, wc, wc + 1)
    kern = functools.partial(conv_pass_a_kernel, nb=nb, lout=lout, wc=wc, offs=offs)

    z, s_sum, s_sq = pl.pallas_call(
        kern,
        out_shape=(jax.ShapeDtypeStruct((n_pad, lout, cout), jnp.bfloat16),
                   jax.ShapeDtypeStruct((2, 8, cout), jnp.float32),
                   jax.ShapeDtypeStruct((2, 8, cout), jnp.float32)),
        grid=(2, g2),
        in_specs=[pl.BlockSpec((nb, rp, kin), lambda c, i: (c * g2 + i, 0, 0)),
                  pl.BlockSpec((4, kin, cout), lambda c, i: (0, 0, 0))],
        out_specs=(pl.BlockSpec((nb, lout, cout), lambda c, i: (c * g2 + i, 0, 0)),
                   pl.BlockSpec((1, 8, cout), lambda c, i: (c, 0, 0)),
                   pl.BlockSpec((1, 8, cout), lambda c, i: (c, 0, 0))),
        compiler_params=pltpu.CompilerParams(
            dimension_semantics=("parallel", "arbitrary"),
            vmem_limit_bytes=_VMEM_LIMIT),
    )(xq, w_slab)

    # Fold BN (training-mode biased batch stats, eps) into scale/shift.
    # Zero-padded samples & masked junk rows contribute 0 to both sums.
    m_true = n * ho * wo
    s1 = s_sum[:, 0, :].sum(axis=0)
    s2 = s_sq[:, 0, :].sum(axis=0)
    mean = s1 / m_true
    # TODO(synk): E[x^2]-E[x]^2 can cancel for very large M; use a shifted /
    # two-pass variance if the batch grows.
    var = jnp.maximum(s2 / m_true - mean * mean, 0.0)
    inv = lax.rsqrt(var + eps)
    scale = gamma * inv
    shift = beta - mean * scale

    # Pass B: lane-dense normalize + ReLU ("parallel" -> sharded across TCs).
    fold = 128 // cout if (cout < 128 and 128 % cout == 0) else 1
    lanes = cout * fold
    z2d = z.reshape(-1, lanes)
    scale_l = jnp.tile(scale.reshape(1, cout), (1, fold)).astype(jnp.float32)
    shift_l = jnp.tile(shift.reshape(1, cout), (1, fold)).astype(jnp.float32)

    mfold = z2d.shape[0]
    tb = _row_tile(mfold)
    mpad = mfold
    if tb is None:                       # robust tail handling: pad, never OOM
        mpad = _round_up(mfold, 256)
        z2d = jnp.pad(z2d, ((0, mpad - mfold), (0, 0)))
        tb = 256

    y2d = pl.pallas_call(
        bn_relu_kernel,
        out_shape=jax.ShapeDtypeStruct((mpad, lanes), jnp.bfloat16),
        grid=(mpad // tb,),
        in_specs=[pl.BlockSpec((tb, lanes), lambda i: (i, 0)),
                  pl.BlockSpec((1, lanes), lambda i: (0, 0)),
                  pl.BlockSpec((1, lanes), lambda i: (0, 0))],
        out_specs=pl.BlockSpec((tb, lanes), lambda i: (i, 0)),
        compiler_params=pltpu.CompilerParams(
            dimension_semantics=("parallel",),
            vmem_limit_bytes=_VMEM_LIMIT),
    )(z2d, scale_l, shift_l)

    if mpad != mfold:
        y2d = y2d[:mfold]
    # drop junk column and batch padding
    y = y2d.reshape(n_pad, ho, wc, cout)[:n, :, :wo, :]
    return y


def fc_forward(feat_bf16, w_fc, b_fc):
    n, d = feat_bf16.shape
    classes = w_fc.shape[1]
    return pl.pallas_call(
        fc_kernel,
        out_shape=jax.ShapeDtypeStruct((n, classes), jnp.float32),
        grid=(1,),
        in_specs=[pl.BlockSpec((n, d), lambda i: (0, 0)),
                  pl.BlockSpec((d, classes), lambda i: (0, 0)),
                  pl.BlockSpec((1, classes), lambda i: (0, 0))],
        out_specs=pl.BlockSpec((n, classes), lambda i: (0, 0)),
        compiler_params=pltpu.CompilerParams(
            dimension_semantics=("arbitrary",),
            vmem_limit_bytes=_VMEM_LIMIT),
    )(feat_bf16, w_fc, b_fc)


# ------------------------------- forward -----------------------------------

def shallow_cnn_forward(x_nchw, params):
    n = x_nchw.shape[0]
    x = jnp.transpose(x_nchw, (0, 2, 3, 1))            # NCHW -> NHWC (glue)

    y1 = conv_bn_relu(x, params["w1"], params["g1"], params["b1"])
    y2 = conv_bn_relu(y1, params["w2"], params["g2"], params["b2"])

    # NHWC flatten (no transpose): fc1 weight rows were permuted at init.
    feat = y2.reshape(n, -1)
    return fc_forward(feat, params["fc_w"], params["fc_b"])


# --------------------------- parameter init --------------------------------

def _conv_weight_slabs(w4):
    """(3,3,Cin,Cout) conv weight -> (4, 4*Cin, Cout) bf16 tap-group slabs.

    Group g=(di,dj) covers taps (kh,kw)=(2*di+pi, 2*dj+pj) for pi,pj in {0,1}
    with kh,kw<=2; phase block order (2*pi+pj) matches the phase-layout lanes.
    """
    cin, cout = w4.shape[2], w4.shape[3]
    zero = jnp.zeros((cin, cout), w4.dtype)
    slabs = []
    for di in (0, 1):
        for dj in (0, 1):
            blocks = []
            for pi in (0, 1):
                for pj in (0, 1):
                    kh, kw = 2 * di + pi, 2 * dj + pj
                    blocks.append(w4[kh, kw] if (kh <= 2 and kw <= 2) else zero)
            slabs.append(jnp.concatenate(blocks, axis=0))
    return jnp.stack(slabs, axis=0).astype(jnp.bfloat16)


def init_params(key, cin, classes, ho2, wo2):
    ks = jax.random.split(key, 6)
    d = 128 * ho2 * wo2
    # Conv: kaiming_normal, mode='fan_out', relu -> std = sqrt(2/(Cout*9))
    w1 = jax.random.normal(ks[0], (3, 3, cin, 64), jnp.float32) * (2.0 / (64 * 9)) ** 0.5
    w2 = jax.random.normal(ks[1], (3, 3, 64, 128), jnp.float32) * (2.0 / (128 * 9)) ** 0.5
    # BatchNorm: weight=1, bias=0 (as in the module's init)
    g1, b1 = jnp.ones((64,), jnp.float32), jnp.zeros((64,), jnp.float32)
    g2, b2 = jnp.ones((128,), jnp.float32), jnp.zeros((128,), jnp.float32)
    # Linear layers: PyTorch default uniform(+-1/sqrt(fan_in)), stored (in, out).
    lim1 = 1.0 / d ** 0.5
    fc1_w_t = jax.random.uniform(ks[2], (d, 64), jnp.float32, -lim1, lim1)
    # Permute rows once from PyTorch's (C,H,W) flatten order to NHWC (H,W,C).
    fc1_w = (fc1_w_t.reshape(128, ho2, wo2, 64).transpose(1, 2, 0, 3).reshape(d, 64))
    fc1_b = jax.random.uniform(ks[3], (64,), jnp.float32, -lim1, lim1)
    lim2 = 1.0 / 64.0 ** 0.5
    fc2_w = jax.random.uniform(ks[4], (64, classes), jnp.float32, -lim2, lim2)
    fc2_b = jax.random.uniform(ks[5], (classes,), jnp.float32, -lim2, lim2)
    # Fuse Linear(d,64) o Linear(64,classes) once at init (pure param prep).
    fc_w = (fc1_w @ fc2_w).astype(jnp.bfloat16)
    fc_b = (fc1_b @ fc2_w + fc2_b).reshape(1, classes).astype(jnp.float32)
    return dict(w1=_conv_weight_slabs(w1), g1=g1, b1=b1,
                w2=_conv_weight_slabs(w2), g2=g2, b2=b2,
                fc_w=fc_w, fc_b=fc_b)


if __name__ == "__main__":
    key = jax.random.PRNGKey(0)
    kx, kp = jax.random.split(key)

    # Small shapes consistent with ShallowCNN(input_shape=(4,16,16), classes=16)
    N, C, H, W = 2, 4, 16, 16
    classes = 16
    x = jax.random.normal(kx, (N, C, H, W), jnp.float32)

    ho1, wo1 = H // 2, W // 2            # 8, 8
    ho2, wo2 = ho1 // 2, wo1 // 2        # 4, 4

    params = init_params(kp, C, classes, ho2, wo2)

    logits = jax.jit(shallow_cnn_forward)(x, params)
    jax.block_until_ready(logits)
    assert logits.shape == (N, classes) and logits.dtype == jnp.float32
    assert bool(jnp.all(jnp.isfinite(logits)))
    print("KERNEL_OK")
</pallas_src>

<mosaic_0001>
module attributes {stable_mosaic.version = 11 : i64} {
  func.func @conv_pass_a_kernel(%arg0: i32, %arg1: i32, %arg2: memref<1x88x16xbf16, #tpu.memory_space<vmem>>, %arg3: memref<4x16x64xbf16, #tpu.memory_space<vmem>>, %arg4: memref<1x72x64xbf16, #tpu.memory_space<vmem>>, %arg5: memref<1x8x64xf32, #tpu.memory_space<vmem>>, %arg6: memref<1x8x64xf32, #tpu.memory_space<vmem>>) attributes {dimension_semantics = [#tpu.dimension_semantics<parallel>, #tpu.dimension_semantics<arbitrary>], iteration_bounds = array<i64: 2, 1>, scalar_prefetch = 0 : i64, scratch_operands = 0 : i64, tpu.core_type = #tpu.core_type<tc>, window_params = [{transform_indices = @transform_0, window_bounds = array<i64: 1, 88, 16>}, {pipeline_mode = #tpu.pipeline_mode<synchronous>, transform_indices = @transform_1, window_bounds = array<i64: 4, 16, 64>}, {transform_indices = @transform_2, window_bounds = array<i64: 1, 72, 64>}, {transform_indices = @transform_3, window_bounds = array<i64: 1, 8, 64>}, {transform_indices = @transform_4, window_bounds = array<i64: 1, 8, 64>}]} {
    %c0_i32 = arith.constant 0 : i32
    %0 = arith.cmpi eq, %arg1, %c0_i32 : i32
    %1 = arith.extui %0 : i1 to i32
    %c0_i32_0 = arith.constant 0 : i32
    %2 = arith.cmpi ne, %1, %c0_i32_0 : i32
    scf.if %2 {
      %cst_47 = arith.constant 0.000000e+00 : f32
      %72 = vector.broadcast %cst_47 : f32 to vector<1x8x64xf32>
      %c0_48 = arith.constant 0 : index
      %c0_49 = arith.constant 0 : index
      %c0_50 = arith.constant 0 : index
      %73 = vector.load %arg5[%c0_48, %c0_49, %c0_50] : memref<1x8x64xf32, #tpu.memory_space<vmem>>, vector<1x8x64xf32>
      tpu.vector_store %arg5[%c0_48, %c0_49, %c0_50], %72 {strides = array<i32>} : memref<1x8x64xf32, #tpu.memory_space<vmem>>, vector<1x8x64xf32>,
      %cst_51 = arith.constant 0.000000e+00 : f32
      %74 = vector.broadcast %cst_51 : f32 to vector<1x8x64xf32>
      %c0_52 = arith.constant 0 : index
      %c0_53 = arith.constant 0 : index
      %c0_54 = arith.constant 0 : index
      %75 = vector.load %arg6[%c0_52, %c0_53, %c0_54] : memref<1x8x64xf32, #tpu.memory_space<vmem>>, vector<1x8x64xf32>
      tpu.vector_store %arg6[%c0_52, %c0_53, %c0_54], %74 {strides = array<i32>} : memref<1x8x64xf32, #tpu.memory_space<vmem>>, vector<1x8x64xf32>,
    } else {
    }
    %3 = tpu.iota {dimensions = array<i32: 0>} : vector<72x64xi32>
    %c9_i32 = arith.constant 9 : i32
    %c0_i32_1 = arith.constant 0 : i32
    %4 = arith.cmpi eq, %c9_i32, %c0_i32_1 : i32
    %c1_i32 = arith.constant 1 : i32
    %5 = arith.select %4, %c1_i32, %c9_i32 : i32
    %6 = vector.broadcast %5 : i32 to vector<72x64xi32>
    %7 = arith.remsi %3, %6 : vector<72x64xi32>
    %c0_i32_2 = arith.constant 0 : i32
    %8 = vector.broadcast %c0_i32_2 : i32 to vector<72x64xi32>
    %9 = arith.cmpi ne, %7, %8 : vector<72x64xi32>
    %c0_i32_3 = arith.constant 0 : i32
    %10 = vector.broadcast %c0_i32_3 : i32 to vector<72x64xi32>
    %11 = arith.cmpi slt, %7, %10 : vector<72x64xi32>
    %c0_i32_4 = arith.constant 0 : i32
    %12 = arith.cmpi slt, %5, %c0_i32_4 : i32
    %13 = vector.broadcast %12 : i1 to vector<72x64xi1>
    %14 = vector.broadcast %13 : vector<72x64xi1> to vector<72x64xi1>
    %15 = arith.xori %11, %14 : vector<72x64xi1>
    %16 = arith.andi %15, %9 : vector<72x64xi1>
    %17 = vector.broadcast %5 : i32 to vector<72x64xi32>
    %18 = arith.addi %7, %17 : vector<72x64xi32>
    %19 = arith.select %16, %18, %7 : vector<72x64xi1>, vector<72x64xi32>
    %c8_i32 = arith.constant 8 : i32
    %20 = vector.broadcast %c8_i32 : i32 to vector<72x64xi32>
    %21 = arith.cmpi ne, %19, %20 : vector<72x64xi32>
    %cst = arith.constant 0.000000e+00 : f32
    %22 = vector.broadcast %cst : f32 to vector<1x64xf32>
    %cst_5 = arith.constant 0.000000e+00 : f32
    %23 = vector.broadcast %cst_5 : f32 to vector<1x64xf32>
    %cst_6 = arith.constant 0.000000e+00 : f32
    %24 = vector.broadcast %cst_6 : f32 to vector<72x64xf32>
    %c0 = arith.constant 0 : index
    %c0_7 = arith.constant 0 : index
    %c0_8 = arith.constant 0 : index
    %25 = vector.load %arg2[%c0, %c0_7, %c0_8] : memref<1x88x16xbf16, #tpu.memory_space<vmem>>, vector<1x72x16xbf16>
    %26 = vector.shape_cast %25 : vector<1x72x16xbf16> to vector<72x16xbf16>
    %c0_9 = arith.constant 0 : index
    %c0_10 = arith.constant 0 : index
    %c0_11 = arith.constant 0 : index
    %27 = vector.load %arg3[%c0_9, %c0_10, %c0_11] : memref<4x16x64xbf16, #tpu.memory_space<vmem>>, vector<1x16x64xbf16>
    %28 = vector.shape_cast %27 : vector<1x16x64xbf16> to vector<16x64xbf16>
    %cst_12 = arith.constant dense<0.000000e+00> : vector<72x64xf32>
    %29 = tpu.matmul %26, %28, %cst_12 {dimension_numbers = #tpu.dot_dimension_numbers<[1], [0], [0], [1], [0, 0, 1, 1], [], []>} : vector<72x16xbf16>, vector<16x64xbf16>, vector<72x64xf32> -> vector<72x64xf32>
    %30 = arith.addf %24, %29 : vector<72x64xf32>
    %c0_13 = arith.constant 0 : index
    %c1 = arith.constant 1 : index
    %c0_14 = arith.constant 0 : index
    %31 = vector.load %arg2[%c0_13, %c1, %c0_14] : memref<1x88x16xbf16, #tpu.memory_space<vmem>>, vector<1x72x16xbf16>
    %32 = vector.shape_cast %31 : vector<1x72x16xbf16> to vector<72x16xbf16>
    %c1_15 = arith.constant 1 : index
    %c0_16 = arith.constant 0 : index
    %c0_17 = arith.constant 0 : index
    %33 = vector.load %arg3[%c1_15, %c0_16, %c0_17] : memref<4x16x64xbf16, #tpu.memory_space<vmem>>, vector<1x16x64xbf16>
    %34 = vector.shape_cast %33 : vector<1x16x64xbf16> to vector<16x64xbf16>
    %cst_18 = arith.constant dense<0.000000e+00> : vector<72x64xf32>
    %35 = tpu.matmul %32, %34, %cst_18 {dimension_numbers = #tpu.dot_dimension_numbers<[1], [0], [0], [1], [0, 0, 1, 1], [], []>} : vector<72x16xbf16>, vector<16x64xbf16>, vector<72x64xf32> -> vector<72x64xf32>
    %36 = arith.addf %30, %35 : vector<72x64xf32>
    %c0_19 = arith.constant 0 : index
    %c9 = arith.constant 9 : index
    %c0_20 = arith.constant 0 : index
    %37 = vector.load %arg2[%c0_19, %c9, %c0_20] : memref<1x88x16xbf16, #tpu.memory_space<vmem>>, vector<1x72x16xbf16>
    %38 = vector.shape_cast %37 : vector<1x72x16xbf16> to vector<72x16xbf16>
    %c2 = arith.constant 2 : index
    %c0_21 = arith.constant 0 : index
    %c0_22 = arith.constant 0 : index
    %39 = vector.load %arg3[%c2, %c0_21, %c0_22] : memref<4x16x64xbf16, #tpu.memory_space<vmem>>, vector<1x16x64xbf16>
    %40 = vector.shape_cast %39 : vector<1x16x64xbf16> to vector<16x64xbf16>
    %cst_23 = arith.constant dense<0.000000e+00> : vector<72x64xf32>
    %41 = tpu.matmul %38, %40, %cst_23 {dimension_numbers = #tpu.dot_dimension_numbers<[1], [0], [0], [1], [0, 0, 1, 1], [], []>} : vector<72x16xbf16>, vector<16x64xbf16>, vector<72x64xf32> -> vector<72x64xf32>
    %42 = arith.addf %36, %41 : vector<72x64xf32>
    %c0_24 = arith.constant 0 : index
    %c10 = arith.constant 10 : index
    %c0_25 = arith.constant 0 : index
    %43 = vector.load %arg2[%c0_24, %c10, %c0_25] : memref<1x88x16xbf16, #tpu.memory_space<vmem>>, vector<1x72x16xbf16>
    %44 = vector.shape_cast %43 : vector<1x72x16xbf16> to vector<72x16xbf16>
    %c3 = arith.constant 3 : index
    %c0_26 = arith.constant 0 : index
    %c0_27 = arith.constant 0 : index
    %45 = vector.load %arg3[%c3, %c0_26, %c0_27] : memref<4x16x64xbf16, #tpu.memory_space<vmem>>, vector<1x16x64xbf16>
    %46 = vector.shape_cast %45 : vector<1x16x64xbf16> to vector<16x64xbf16>
    %cst_28 = arith.constant dense<0.000000e+00> : vector<72x64xf32>
    %47 = tpu.matmul %44, %46, %cst_28 {dimension_numbers = #tpu.dot_dimension_numbers<[1], [0], [0], [1], [0, 0, 1, 1], [], []>} : vector<72x16xbf16>, vector<16x64xbf16>, vector<72x64xf32> -> vector<72x64xf32>
    %48 = arith.addf %42, %47 : vector<72x64xf32>
    %cst_29 = arith.constant 0.000000e+00 : f32
    %49 = vector.broadcast %cst_29 : f32 to vector<72x64xf32>
    %50 = arith.select %21, %48, %49 : vector<72x64xi1>, vector<72x64xf32>
    %51 = arith.truncf %50 : vector<72x64xf32> to vector<72x64xbf16>
    %c0_30 = arith.constant 0 : index
    %c0_31 = arith.constant 0 : index
    %c0_32 = arith.constant 0 : index
    %52 = vector.load %arg4[%c0_30, %c0_31, %c0_32] : memref<1x72x64xbf16, #tpu.memory_space<vmem>>, vector<1x72x64xbf16>
    %53 = vector.shape_cast %52 : vector<1x72x64xbf16> to vector<72x64xbf16>
    %54 = vector.shape_cast %51 : vector<72x64xbf16> to vector<1x72x64xbf16>
    tpu.vector_store %arg4[%c0_30, %c0_31, %c0_32], %54 {strides = array<i32>} : memref<1x72x64xbf16, #tpu.memory_space<vmem>>, vector<1x72x64xbf16>,
    %cst_33 = arith.constant dense<0.000000e+00> : vector<64xf32>
    %55 = vector.multi_reduction <add>, %50, %cst_33 [0] : vector<72x64xf32> to vector<64xf32>
    %56 = vector.shape_cast %55 : vector<64xf32> to vector<1x64xf32>
    %57 = arith.addf %22, %56 : vector<1x64xf32>
    %58 = arith.mulf %50, %50 : vector<72x64xf32>
    %cst_34 = arith.constant dense<0.000000e+00> : vector<64xf32>
    %59 = vector.multi_reduction <add>, %58, %cst_34 [0] : vector<72x64xf32> to vector<64xf32>
    %60 = vector.shape_cast %59 : vector<64xf32> to vector<1x64xf32>
    %61 = arith.addf %23, %60 : vector<1x64xf32>
    %c0_35 = arith.constant 0 : index
    %c0_36 = arith.constant 0 : index
    %c0_37 = arith.constant 0 : index
    %62 = vector.load %arg5[%c0_35, %c0_36, %c0_37] : memref<1x8x64xf32, #tpu.memory_space<vmem>>, vector<1x8x64xf32>
    %63 = vector.shape_cast %57 : vector<1x64xf32> to vector<1x1x64xf32>
    %64 = vector.broadcast %63 : vector<1x1x64xf32> to vector<1x8x64xf32>
    %65 = arith.addf %62, %64 : vector<1x8x64xf32>
    %c0_38 = arith.constant 0 : index
    %c0_39 = arith.constant 0 : index
    %c0_40 = arith.constant 0 : index
    %66 = vector.load %arg5[%c0_38, %c0_39, %c0_40] : memref<1x8x64xf32, #tpu.memory_space<vmem>>, vector<1x8x64xf32>
    tpu.vector_store %arg5[%c0_38, %c0_39, %c0_40], %65 {strides = array<i32>} : memref<1x8x64xf32, #tpu.memory_space<vmem>>, vector<1x8x64xf32>,
    %c0_41 = arith.constant 0 : index
    %c0_42 = arith.constant 0 : index
    %c0_43 = arith.constant 0 : index
    %67 = vector.load %arg6[%c0_41, %c0_42, %c0_43] : memref<1x8x64xf32, #tpu.memory_space<vmem>>, vector<1x8x64xf32>
    %68 = vector.shape_cast %61 : vector<1x64xf32> to vector<1x1x64xf32>
    %69 = vector.broadcast %68 : vector<1x1x64xf32> to vector<1x8x64xf32>
    %70 = arith.addf %67, %69 : vector<1x8x64xf32>
    %c0_44 = arith.constant 0 : index
    %c0_45 = arith.constant 0 : index
    %c0_46 = arith.constant 0 : index
    %71 = vector.load %arg6[%c0_44, %c0_45, %c0_46] : memref<1x8x64xf32, #tpu.memory_space<vmem>>, vector<1x8x64xf32>
    tpu.vector_store %arg6[%c0_44, %c0_45, %c0_46], %70 {strides = array<i32>} : memref<1x8x64xf32, #tpu.memory_space<vmem>>, vector<1x8x64xf32>,
    return
  }
  func.func @transform_0(%arg0: i32, %arg1: i32) -> (i32, i32, i32) {
    %c1_i32 = arith.constant 1 : i32
    %0 = arith.muli %arg0, %c1_i32 : i32
    %1 = arith.addi %0, %arg1 : i32
    %c0_i32 = arith.constant 0 : i32
    %c0_i32_0 = arith.constant 0 : i32
    %c0_i32_1 = arith.constant 0 : i32
    return %1, %c0_i32, %c0_i32_0 : i32, i32, i32
  }
  func.func @transform_1(%arg0: i32, %arg1: i32) -> (i32, i32, i32) {
    %c0_i32 = arith.constant 0 : i32
    %c0_i32_0 = arith.constant 0 : i32
    %c0_i32_1 = arith.constant 0 : i32
    %c0_i32_2 = arith.constant 0 : i32
    return %c0_i32, %c0_i32_0, %c0_i32_1 : i32, i32, i32
  }
  func.func @transform_2(%arg0: i32, %arg1: i32) -> (i32, i32, i32) {
    %c1_i32 = arith.constant 1 : i32
    %0 = arith.muli %arg0, %c1_i32 : i32
    %1 = arith.addi %0, %arg1 : i32
    %c0_i32 = arith.constant 0 : i32
    %c0_i32_0 = arith.constant 0 : i32
    %c0_i32_1 = arith.constant 0 : i32
    return %1, %c0_i32, %c0_i32_0 : i32, i32, i32
  }
  func.func @transform_3(%arg0: i32, %arg1: i32) -> (i32, i32, i32) {
    %c0_i32 = arith.constant 0 : i32
    %c0_i32_0 = arith.constant 0 : i32
    %c0_i32_1 = arith.constant 0 : i32
    return %arg0, %c0_i32, %c0_i32_0 : i32, i32, i32
  }
  func.func @transform_4(%arg0: i32, %arg1: i32) -> (i32, i32, i32) {
    %c0_i32 = arith.constant 0 : i32
    %c0_i32_0 = arith.constant 0 : i32
    %c0_i32_1 = arith.constant 0 : i32
    return %arg0, %c0_i32, %c0_i32_0 : i32, i32, i32
  }
}

module attributes {stable_mosaic.version = 11 : i64} {
  func.func @bn_relu_kernel(%arg0: i32, %arg1: memref<72x128xbf16, #tpu.memory_space<vmem>>, %arg2: memref<1x128xf32, #tpu.memory_space<vmem>>, %arg3: memref<1x128xf32, #tpu.memory_space<vmem>>, %arg4: memref<72x128xbf16, #tpu.memory_space<vmem>>) attributes {dimension_semantics = [#tpu.dimension_semantics<parallel>], iteration_bounds = array<i64: 1>, scalar_prefetch = 0 : i64, scratch_operands = 0 : i64, tpu.core_type = #tpu.core_type<tc>, window_params = [{transform_indices = @transform_0, window_bounds = array<i64: 72, 128>}, {pipeline_mode = #tpu.pipeline_mode<synchronous>, transform_indices = @transform_1, window_bounds = array<i64: 1, 128>}, {pipeline_mode = #tpu.pipeline_mode<synchronous>, transform_indices = @transform_2, window_bounds = array<i64: 1, 128>}, {transform_indices = @transform_3, window_bounds = array<i64: 72, 128>}]} {
    %c0 = arith.constant 0 : index
    %c0_0 = arith.constant 0 : index
    %0 = vector.load %arg1[%c0, %c0_0] : memref<72x128xbf16, #tpu.memory_space<vmem>>, vector<72x128xbf16>
    %1 = arith.extf %0 : vector<72x128xbf16> to vector<72x128xf32>
    %c0_1 = arith.constant 0 : index
    %c0_2 = arith.constant 0 : index
    %2 = vector.load %arg2[%c0_1, %c0_2] : memref<1x128xf32, #tpu.memory_space<vmem>>, vector<1x128xf32>
    %3 = vector.broadcast %2 : vector<1x128xf32> to vector<72x128xf32>
    %4 = arith.mulf %1, %3 : vector<72x128xf32>
    %c0_3 = arith.constant 0 : index
    %c0_4 = arith.constant 0 : index
    %5 = vector.load %arg3[%c0_3, %c0_4] : memref<1x128xf32, #tpu.memory_space<vmem>>, vector<1x128xf32>
    %6 = vector.broadcast %5 : vector<1x128xf32> to vector<72x128xf32>
    %7 = arith.addf %4, %6 : vector<72x128xf32>
    %cst = arith.constant 0.000000e+00 : f32
    %8 = vector.broadcast %cst : f32 to vector<72x128xf32>
    %9 = arith.maximumf %7, %8 : vector<72x128xf32>
    %10 = arith.truncf %9 : vector<72x128xf32> to vector<72x128xbf16>
    %c0_5 = arith.constant 0 : index
    %c0_6 = arith.constant 0 : index
    %11 = vector.load %arg4[%c0_5, %c0_6] : memref<72x128xbf16, #tpu.memory_space<vmem>>, vector<72x128xbf16>
    tpu.vector_store %arg4[%c0_5, %c0_6], %10 {strides = array<i32>} : memref<72x128xbf16, #tpu.memory_space<vmem>>, vector<72x128xbf16>,
    return
  }
  func.func @transform_0(%arg0: i32) -> (i32, i32) {
    %c0_i32 = arith.constant 0 : i32
    %c0_i32_0 = arith.constant 0 : i32
    return %arg0, %c0_i32 : i32, i32
  }
  func.func @transform_1(%arg0: i32) -> (i32, i32) {
    %c0_i32 = arith.constant 0 : i32
    %c0_i32_0 = arith.constant 0 : i32
    %c0_i32_1 = arith.constant 0 : i32
    return %c0_i32, %c0_i32_0 : i32, i32
  }
  func.func @transform_2(%arg0: i32) -> (i32, i32) {
    %c0_i32 = arith.constant 0 : i32
    %c0_i32_0 = arith.constant 0 : i32
    %c0_i32_1 = arith.constant 0 : i32
    return %c0_i32, %c0_i32_0 : i32, i32
  }
  func.func @transform_3(%arg0: i32) -> (i32, i32) {
    %c0_i32 = arith.constant 0 : i32
    %c0_i32_0 = arith.constant 0 : i32
    return %arg0, %c0_i32 : i32, i32
  }
}

module attributes {stable_mosaic.version = 11 : i64} {
  func.func @conv_pass_a_kernel(%arg0: i32, %arg1: i32, %arg2: memref<1x32x256xbf16, #tpu.memory_space<vmem>>, %arg3: memref<4x256x128xbf16, #tpu.memory_space<vmem>>, %arg4: memref<1x20x128xbf16, #tpu.memory_space<vmem>>, %arg5: memref<1x8x128xf32, #tpu.memory_space<vmem>>, %arg6: memref<1x8x128xf32, #tpu.memory_space<vmem>>) attributes {dimension_semantics = [#tpu.dimension_semantics<parallel>, #tpu.dimension_semantics<arbitrary>], iteration_bounds = array<i64: 2, 1>, scalar_prefetch = 0 : i64, scratch_operands = 0 : i64, tpu.core_type = #tpu.core_type<tc>, window_params = [{transform_indices = @transform_0, window_bounds = array<i64: 1, 32, 256>}, {pipeline_mode = #tpu.pipeline_mode<synchronous>, transform_indices = @transform_1, window_bounds = array<i64: 4, 256, 128>}, {transform_indices = @transform_2, window_bounds = array<i64: 1, 20, 128>}, {transform_indices = @transform_3, window_bounds = array<i64: 1, 8, 128>}, {transform_indices = @transform_4, window_bounds = array<i64: 1, 8, 128>}]} {
    %c0_i32 = arith.constant 0 : i32
    %0 = arith.cmpi eq, %arg1, %c0_i32 : i32
    %1 = arith.extui %0 : i1 to i32
    %c0_i32_0 = arith.constant 0 : i32
    %2 = arith.cmpi ne, %1, %c0_i32_0 : i32
    scf.if %2 {
      %cst_47 = arith.constant 0.000000e+00 : f32
      %72 = vector.broadcast %cst_47 : f32 to vector<1x8x128xf32>
      %c0_48 = arith.constant 0 : index
      %c0_49 = arith.constant 0 : index
      %c0_50 = arith.constant 0 : index
      %73 = vector.load %arg5[%c0_48, %c0_49, %c0_50] : memref<1x8x128xf32, #tpu.memory_space<vmem>>, vector<1x8x128xf32>
      tpu.vector_store %arg5[%c0_48, %c0_49, %c0_50], %72 {strides = array<i32>} : memref<1x8x128xf32, #tpu.memory_space<vmem>>, vector<1x8x128xf32>,
      %cst_51 = arith.constant 0.000000e+00 : f32
      %74 = vector.broadcast %cst_51 : f32 to vector<1x8x128xf32>
      %c0_52 = arith.constant 0 : index
      %c0_53 = arith.constant 0 : index
      %c0_54 = arith.constant 0 : index
      %75 = vector.load %arg6[%c0_52, %c0_53, %c0_54] : memref<1x8x128xf32, #tpu.memory_space<vmem>>, vector<1x8x128xf32>
      tpu.vector_store %arg6[%c0_52, %c0_53, %c0_54], %74 {strides = array<i32>} : memref<1x8x128xf32, #tpu.memory_space<vmem>>, vector<1x8x128xf32>,
    } else {
    }
    %3 = tpu.iota {dimensions = array<i32: 0>} : vector<20x128xi32>
    %c5_i32 = arith.constant 5 : i32
    %c0_i32_1 = arith.constant 0 : i32
    %4 = arith.cmpi eq, %c5_i32, %c0_i32_1 : i32
    %c1_i32 = arith.constant 1 : i32
    %5 = arith.select %4, %c1_i32, %c5_i32 : i32
    %6 = vector.broadcast %5 : i32 to vector<20x128xi32>
    %7 = arith.remsi %3, %6 : vector<20x128xi32>
    %c0_i32_2 = arith.constant 0 : i32
    %8 = vector.broadcast %c0_i32_2 : i32 to vector<20x128xi32>
    %9 = arith.cmpi ne, %7, %8 : vector<20x128xi32>
    %c0_i32_3 = arith.constant 0 : i32
    %10 = vector.broadcast %c0_i32_3 : i32 to vector<20x128xi32>
    %11 = arith.cmpi slt, %7, %10 : vector<20x128xi32>
    %c0_i32_4 = arith.constant 0 : i32
    %12 = arith.cmpi slt, %5, %c0_i32_4 : i32
    %13 = vector.broadcast %12 : i1 to vector<20x128xi1>
    %14 = vector.broadcast %13 : vector<20x128xi1> to vector<20x128xi1>
    %15 = arith.xori %11, %14 : vector<20x128xi1>
    %16 = arith.andi %15, %9 : vector<20x128xi1>
    %17 = vector.broadcast %5 : i32 to vector<20x128xi32>
    %18 = arith.addi %7, %17 : vector<20x128xi32>
    %19 = arith.select %16, %18, %7 : vector<20x128xi1>, vector<20x128xi32>
    %c4_i32 = arith.constant 4 : i32
    %20 = vector.broadcast %c4_i32 : i32 to vector<20x128xi32>
    %21 = arith.cmpi ne, %19, %20 : vector<20x128xi32>
    %cst = arith.constant 0.000000e+00 : f32
    %22 = vector.broadcast %cst : f32 to vector<1x128xf32>
    %cst_5 = arith.constant 0.000000e+00 : f32
    %23 = vector.broadcast %cst_5 : f32 to vector<1x128xf32>
    %cst_6 = arith.constant 0.000000e+00 : f32
    %24 = vector.broadcast %cst_6 : f32 to vector<20x128xf32>
    %c0 = arith.constant 0 : index
    %c0_7 = arith.constant 0 : index
    %c0_8 = arith.constant 0 : index
    %25 = vector.load %arg2[%c0, %c0_7, %c0_8] : memref<1x32x256xbf16, #tpu.memory_space<vmem>>, vector<1x20x256xbf16>
    %26 = vector.shape_cast %25 : vector<1x20x256xbf16> to vector<20x256xbf16>
    %c0_9 = arith.constant 0 : index
    %c0_10 = arith.constant 0 : index
    %c0_11 = arith.constant 0 : index
    %27 = vector.load %arg3[%c0_9, %c0_10, %c0_11] : memref<4x256x128xbf16, #tpu.memory_space<vmem>>, vector<1x256x128xbf16>
    %28 = vector.shape_cast %27 : vector<1x256x128xbf16> to vector<256x128xbf16>
    %cst_12 = arith.constant dense<0.000000e+00> : vector<20x128xf32>
    %29 = tpu.matmul %26, %28, %cst_12 {dimension_numbers = #tpu.dot_dimension_numbers<[1], [0], [0], [1], [0, 0, 1, 1], [], []>} : vector<20x256xbf16>, vector<256x128xbf16>, vector<20x128xf32> -> vector<20x128xf32>
    %30 = arith.addf %24, %29 : vector<20x128xf32>
    %c0_13 = arith.constant 0 : index
    %c1 = arith.constant 1 : index
    %c0_14 = arith.constant 0 : index
    %31 = vector.load %arg2[%c0_13, %c1, %c0_14] : memref<1x32x256xbf16, #tpu.memory_space<vmem>>, vector<1x20x256xbf16>
    %32 = vector.shape_cast %31 : vector<1x20x256xbf16> to vector<20x256xbf16>
    %c1_15 = arith.constant 1 : index
    %c0_16 = arith.constant 0 : index
    %c0_17 = arith.constant 0 : index
    %33 = vector.load %arg3[%c1_15, %c0_16, %c0_17] : memref<4x256x128xbf16, #tpu.memory_space<vmem>>, vector<1x256x128xbf16>
    %34 = vector.shape_cast %33 : vector<1x256x128xbf16> to vector<256x128xbf16>
    %cst_18 = arith.constant dense<0.000000e+00> : vector<20x128xf32>
    %35 = tpu.matmul %32, %34, %cst_18 {dimension_numbers = #tpu.dot_dimension_numbers<[1], [0], [0], [1], [0, 0, 1, 1], [], []>} : vector<20x256xbf16>, vector<256x128xbf16>, vector<20x128xf32> -> vector<20x128xf32>
    %36 = arith.addf %30, %35 : vector<20x128xf32>
    %c0_19 = arith.constant 0 : index
    %c5 = arith.constant 5 : index
    %c0_20 = arith.constant 0 : index
    %37 = vector.load %arg2[%c0_19, %c5, %c0_20] : memref<1x32x256xbf16, #tpu.memory_space<vmem>>, vector<1x20x256xbf16>
    %38 = vector.shape_cast %37 : vector<1x20x256xbf16> to vector<20x256xbf16>
    %c2 = arith.constant 2 : index
    %c0_21 = arith.constant 0 : index
    %c0_22 = arith.constant 0 : index
    %39 = vector.load %arg3[%c2, %c0_21, %c0_22] : memref<4x256x128xbf16, #tpu.memory_space<vmem>>, vector<1x256x128xbf16>
    %40 = vector.shape_cast %39 : vector<1x256x128xbf16> to vector<256x128xbf16>
    %cst_23 = arith.constant dense<0.000000e+00> : vector<20x128xf32>
    %41 = tpu.matmul %38, %40, %cst_23 {dimension_numbers = #tpu.dot_dimension_numbers<[1], [0], [0], [1], [0, 0, 1, 1], [], []>} : vector<20x256xbf16>, vector<256x128xbf16>, vector<20x128xf32> -> vector<20x128xf32>
    %42 = arith.addf %36, %41 : vector<20x128xf32>
    %c0_24 = arith.constant 0 : index
    %c6 = arith.constant 6 : index
    %c0_25 = arith.constant 0 : index
    %43 = vector.load %arg2[%c0_24, %c6, %c0_25] : memref<1x32x256xbf16, #tpu.memory_space<vmem>>, vector<1x20x256xbf16>
    %44 = vector.shape_cast %43 : vector<1x20x256xbf16> to vector<20x256xbf16>
    %c3 = arith.constant 3 : index
    %c0_26 = arith.constant 0 : index
    %c0_27 = arith.constant 0 : index
    %45 = vector.load %arg3[%c3, %c0_26, %c0_27] : memref<4x256x128xbf16, #tpu.memory_space<vmem>>, vector<1x256x128xbf16>
    %46 = vector.shape_cast %45 : vector<1x256x128xbf16> to vector<256x128xbf16>
    %cst_28 = arith.constant dense<0.000000e+00> : vector<20x128xf32>
    %47 = tpu.matmul %44, %46, %cst_28 {dimension_numbers = #tpu.dot_dimension_numbers<[1], [0], [0], [1], [0, 0, 1, 1], [], []>} : vector<20x256xbf16>, vector<256x128xbf16>, vector<20x128xf32> -> vector<20x128xf32>
    %48 = arith.addf %42, %47 : vector<20x128xf32>
    %cst_29 = arith.constant 0.000000e+00 : f32
    %49 = vector.broadcast %cst_29 : f32 to vector<20x128xf32>
    %50 = arith.select %21, %48, %49 : vector<20x128xi1>, vector<20x128xf32>
    %51 = arith.truncf %50 : vector<20x128xf32> to vector<20x128xbf16>
    %c0_30 = arith.constant 0 : index
    %c0_31 = arith.constant 0 : index
    %c0_32 = arith.constant 0 : index
    %52 = vector.load %arg4[%c0_30, %c0_31, %c0_32] : memref<1x20x128xbf16, #tpu.memory_space<vmem>>, vector<1x20x128xbf16>
    %53 = vector.shape_cast %52 : vector<1x20x128xbf16> to vector<20x128xbf16>
    %54 = vector.shape_cast %51 : vector<20x128xbf16> to vector<1x20x128xbf16>
    tpu.vector_store %arg4[%c0_30, %c0_31, %c0_32], %54 {strides = array<i32>} : memref<1x20x128xbf16, #tpu.memory_space<vmem>>, vector<1x20x128xbf16>,
    %cst_33 = arith.constant dense<0.000000e+00> : vector<128xf32>
    %55 = vector.multi_reduction <add>, %50, %cst_33 [0] : vector<20x128xf32> to vector<128xf32>
    %56 = vector.shape_cast %55 : vector<128xf32> to vector<1x128xf32>
    %57 = arith.addf %22, %56 : vector<1x128xf32>
    %58 = arith.mulf %50, %50 : vector<20x128xf32>
    %cst_34 = arith.constant dense<0.000000e+00> : vector<128xf32>
    %59 = vector.multi_reduction <add>, %58, %cst_34 [0] : vector<20x128xf32> to vector<128xf32>
    %60 = vector.shape_cast %59 : vector<128xf32> to vector<1x128xf32>
    %61 = arith.addf %23, %60 : vector<1x128xf32>
    %c0_35 = arith.constant 0 : index
    %c0_36 = arith.constant 0 : index
    %c0_37 = arith.constant 0 : index
    %62 = vector.load %arg5[%c0_35, %c0_36, %c0_37] : memref<1x8x128xf32, #tpu.memory_space<vmem>>, vector<1x8x128xf32>
    %63 = vector.shape_cast %57 : vector<1x128xf32> to vector<1x1x128xf32>
    %64 = vector.broadcast %63 : vector<1x1x128xf32> to vector<1x8x128xf32>
    %65 = arith.addf %62, %64 : vector<1x8x128xf32>
    %c0_38 = arith.constant 0 : index
    %c0_39 = arith.constant 0 : index
    %c0_40 = arith.constant 0 : index
    %66 = vector.load %arg5[%c0_38, %c0_39, %c0_40] : memref<1x8x128xf32, #tpu.memory_space<vmem>>, vector<1x8x128xf32>
    tpu.vector_store %arg5[%c0_38, %c0_39, %c0_40], %65 {strides = array<i32>} : memref<1x8x128xf32, #tpu.memory_space<vmem>>, vector<1x8x128xf32>,
    %c0_41 = arith.constant 0 : index
    %c0_42 = arith.constant 0 : index
    %c0_43 = arith.constant 0 : index
    %67 = vector.load %arg6[%c0_41, %c0_42, %c0_43] : memref<1x8x128xf32, #tpu.memory_space<vmem>>, vector<1x8x128xf32>
    %68 = vector.shape_cast %61 : vector<1x128xf32> to vector<1x1x128xf32>
    %69 = vector.broadcast %68 : vector<1x1x128xf32> to vector<1x8x128xf32>
    %70 = arith.addf %67, %69 : vector<1x8x128xf32>
    %c0_44 = arith.constant 0 : index
    %c0_45 = arith.constant 0 : index
    %c0_46 = arith.constant 0 : index
    %71 = vector.load %arg6[%c0_44, %c0_45, %c0_46] : memref<1x8x128xf32, #tpu.memory_space<vmem>>, vector<1x8x128xf32>
    tpu.vector_store %arg6[%c0_44, %c0_45, %c0_46], %70 {strides = array<i32>} : memref<1x8x128xf32, #tpu.memory_space<vmem>>, vector<1x8x128xf32>,
    return
  }
  func.func @transform_0(%arg0: i32, %arg1: i32) -> (i32, i32, i32) {
    %c1_i32 = arith.constant 1 : i32
    %0 = arith.muli %arg0, %c1_i32 : i32
    %1 = arith.addi %0, %arg1 : i32
    %c0_i32 = arith.constant 0 : i32
    %c0_i32_0 = arith.constant 0 : i32
    %c0_i32_1 = arith.constant 0 : i32
    return %1, %c0_i32, %c0_i32_0 : i32, i32, i32
  }
  func.func @transform_1(%arg0: i32, %arg1: i32) -> (i32, i32, i32) {
    %c0_i32 = arith.constant 0 : i32
    %c0_i32_0 = arith.constant 0 : i32
    %c0_i32_1 = arith.constant 0 : i32
    %c0_i32_2 = arith.constant 0 : i32
    return %c0_i32, %c0_i32_0, %c0_i32_1 : i32, i32, i32
  }
  func.func @transform_2(%arg0: i32, %arg1: i32) -> (i32, i32, i32) {
    %c1_i32 = arith.constant 1 : i32
    %0 = arith.muli %arg0, %c1_i32 : i32
    %1 = arith.addi %0, %arg1 : i32
    %c0_i32 = arith.constant 0 : i32
    %c0_i32_0 = arith.constant 0 : i32
    %c0_i32_1 = arith.constant 0 : i32
    return %1, %c0_i32, %c0_i32_0 : i32, i32, i32
  }
  func.func @transform_3(%arg0: i32, %arg1: i32) -> (i32, i32, i32) {
    %c0_i32 = arith.constant 0 : i32
    %c0_i32_0 = arith.constant 0 : i32
    %c0_i32_1 = arith.constant 0 : i32
    return %arg0, %c0_i32, %c0_i32_0 : i32, i32, i32
  }
  func.func @transform_4(%arg0: i32, %arg1: i32) -> (i32, i32, i32) {
    %c0_i32 = arith.constant 0 : i32
    %c0_i32_0 = arith.constant 0 : i32
    %c0_i32_1 = arith.constant 0 : i32
    return %arg0, %c0_i32, %c0_i32_0 : i32, i32, i32
  }
}

module attributes {stable_mosaic.version = 11 : i64} {
  func.func @bn_relu_kernel(%arg0: i32, %arg1: memref<40x128xbf16, #tpu.memory_space<vmem>>, %arg2: memref<1x128xf32, #tpu.memory_space<vmem>>, %arg3: memref<1x128xf32, #tpu.memory_space<vmem>>, %arg4: memref<40x128xbf16, #tpu.memory_space<vmem>>) attributes {dimension_semantics = [#tpu.dimension_semantics<parallel>], iteration_bounds = array<i64: 1>, scalar_prefetch = 0 : i64, scratch_operands = 0 : i64, tpu.core_type = #tpu.core_type<tc>, window_params = [{transform_indices = @transform_0, window_bounds = array<i64: 40, 128>}, {pipeline_mode = #tpu.pipeline_mode<synchronous>, transform_indices = @transform_1, window_bounds = array<i64: 1, 128>}, {pipeline_mode = #tpu.pipeline_mode<synchronous>, transform_indices = @transform_2, window_bounds = array<i64: 1, 128>}, {transform_indices = @transform_3, window_bounds = array<i64: 40, 128>}]} {
    %c0 = arith.constant 0 : index
    %c0_0 = arith.constant 0 : index
    %0 = vector.load %arg1[%c0, %c0_0] : memref<40x128xbf16, #tpu.memory_space<vmem>>, vector<40x128xbf16>
    %1 = arith.extf %0 : vector<40x128xbf16> to vector<40x128xf32>
    %c0_1 = arith.constant 0 : index
    %c0_2 = arith.constant 0 : index
    %2 = vector.load %arg2[%c0_1, %c0_2] : memref<1x128xf32, #tpu.memory_space<vmem>>, vector<1x128xf32>
    %3 = vector.broadcast %2 : vector<1x128xf32> to vector<40x128xf32>
    %4 = arith.mulf %1, %3 : vector<40x128xf32>
    %c0_3 = arith.constant 0 : index
    %c0_4 = arith.constant 0 : index
    %5 = vector.load %arg3[%c0_3, %c0_4] : memref<1x128xf32, #tpu.memory_space<vmem>>, vector<1x128xf32>
    %6 = vector.broadcast %5 : vector<1x128xf32> to vector<40x128xf32>
    %7 = arith.addf %4, %6 : vector<40x128xf32>
    %cst = arith.constant 0.000000e+00 : f32
    %8 = vector.broadcast %cst : f32 to vector<40x128xf32>
    %9 = arith.maximumf %7, %8 : vector<40x128xf32>
    %10 = arith.truncf %9 : vector<40x128xf32> to vector<40x128xbf16>
    %c0_5 = arith.constant 0 : index
    %c0_6 = arith.constant 0 : index
    %11 = vector.load %arg4[%c0_5, %c0_6] : memref<40x128xbf16, #tpu.memory_space<vmem>>, vector<40x128xbf16>
    tpu.vector_store %arg4[%c0_5, %c0_6], %10 {strides = array<i32>} : memref<40x128xbf16, #tpu.memory_space<vmem>>, vector<40x128xbf16>,
    return
  }
  func.func @transform_0(%arg0: i32) -> (i32, i32) {
    %c0_i32 = arith.constant 0 : i32
    %c0_i32_0 = arith.constant 0 : i32
    return %arg0, %c0_i32 : i32, i32
  }
  func.func @transform_1(%arg0: i32) -> (i32, i32) {
    %c0_i32 = arith.constant 0 : i32
    %c0_i32_0 = arith.constant 0 : i32
    %c0_i32_1 = arith.constant 0 : i32
    return %c0_i32, %c0_i32_0 : i32, i32
  }
  func.func @transform_2(%arg0: i32) -> (i32, i32) {
    %c0_i32 = arith.constant 0 : i32
    %c0_i32_0 = arith.constant 0 : i32
    %c0_i32_1 = arith.constant 0 : i32
    return %c0_i32, %c0_i32_0 : i32, i32
  }
  func.func @transform_3(%arg0: i32) -> (i32, i32) {
    %c0_i32 = arith.constant 0 : i32
    %c0_i32_0 = arith.constant 0 : i32
    return %arg0, %c0_i32 : i32, i32
  }
}

module attributes {stable_mosaic.version = 11 : i64} {
  func.func @fc_kernel(%arg0: i32, %arg1: memref<2x2048xbf16, #tpu.memory_space<vmem>>, %arg2: memref<2048x16xbf16, #tpu.memory_space<vmem>>, %arg3: memref<1x16xf32, #tpu.memory_space<vmem>>, %arg4: memref<2x16xf32, #tpu.memory_space<vmem>>) attributes {dimension_semantics = [#tpu.dimension_semantics<arbitrary>], iteration_bounds = array<i64: 1>, scalar_prefetch = 0 : i64, scratch_operands = 0 : i64, tpu.core_type = #tpu.core_type<tc>, window_params = [{pipeline_mode = #tpu.pipeline_mode<synchronous>, transform_indices = @transform_0, window_bounds = array<i64: 2, 2048>}, {pipeline_mode = #tpu.pipeline_mode<synchronous>, transform_indices = @transform_1, window_bounds = array<i64: 2048, 16>}, {pipeline_mode = #tpu.pipeline_mode<synchronous>, transform_indices = @transform_2, window_bounds = array<i64: 1, 16>}, {pipeline_mode = #tpu.pipeline_mode<synchronous>, transform_indices = @transform_3, window_bounds = array<i64: 2, 16>}]} {
    %c0 = arith.constant 0 : index
    %c0_0 = arith.constant 0 : index
    %0 = vector.load %arg1[%c0, %c0_0] : memref<2x2048xbf16, #tpu.memory_space<vmem>>, vector<2x2048xbf16>
    %c0_1 = arith.constant 0 : index
    %c0_2 = arith.constant 0 : index
    %1 = vector.load %arg2[%c0_1, %c0_2] : memref<2048x16xbf16, #tpu.memory_space<vmem>>, vector<2048x16xbf16>
    %cst = arith.constant dense<0.000000e+00> : vector<2x16xf32>
    %2 = tpu.matmul %0, %1, %cst {dimension_numbers = #tpu.dot_dimension_numbers<[1], [0], [0], [1], [0, 0, 1, 1], [], []>} : vector<2x2048xbf16>, vector<2048x16xbf16>, vector<2x16xf32> -> vector<2x16xf32>
    %c0_3 = arith.constant 0 : index
    %c0_4 = arith.constant 0 : index
    %3 = vector.load %arg3[%c0_3, %c0_4] : memref<1x16xf32, #tpu.memory_space<vmem>>, vector<1x16xf32>
    %4 = vector.broadcast %3 : vector<1x16xf32> to vector<2x16xf32>
    %5 = arith.addf %2, %4 : vector<2x16xf32>
    %c0_5 = arith.constant 0 : index
    %c0_6 = arith.constant 0 : index
    %6 = vector.load %arg4[%c0_5, %c0_6] : memref<2x16xf32, #tpu.memory_space<vmem>>, vector<2x16xf32>
    tpu.vector_store %arg4[%c0_5, %c0_6], %5 {strides = array<i32>} : memref<2x16xf32, #tpu.memory_space<vmem>>, vector<2x16xf32>,
    return
  }
  func.func @transform_0(%arg0: i32) -> (i32, i32) {
    %c0_i32 = arith.constant 0 : i32
    %c0_i32_0 = arith.constant 0 : i32
    %c0_i32_1 = arith.constant 0 : i32
    return %c0_i32, %c0_i32_0 : i32, i32
  }
  func.func @transform_1(%arg0: i32) -> (i32, i32) {
    %c0_i32 = arith.constant 0 : i32
    %c0_i32_0 = arith.constant 0 : i32
    %c0_i32_1 = arith.constant 0 : i32
    return %c0_i32, %c0_i32_0 : i32, i32
  }
  func.func @transform_2(%arg0: i32) -> (i32, i32) {
    %c0_i32 = arith.constant 0 : i32
    %c0_i32_0 = arith.constant 0 : i32
    %c0_i32_1 = arith.constant 0 : i32
    return %c0_i32, %c0_i32_0 : i32, i32
  }
  func.func @transform_3(%arg0: i32) -> (i32, i32) {
    %c0_i32 = arith.constant 0 : i32
    %c0_i32_0 = arith.constant 0 : i32
    %c0_i32_1 = arith.constant 0 : i32
    return %c0_i32, %c0_i32_0 : i32, i32
  }
}

</mosaic_0001>

<llo_original>
// kernel: shallow_cnn_forward.6
$region0: #{shallow_cnn_forward.6}
  #allocation0 [shape = 'u32[]', space=smem, size = 0x4, offset = 0x4, fixed_abs, tag = 'smem constant byte address 0x4 - core index']
  #allocation1 [shape = 'u32[72,128]{1,0:T(1,128)}', space=vmem, size = 0x9000, scoped, tag = 'internal scratch']
  %s0 = inlined_call_operand.vmem [shape: bf16[72,128], index: 0, kind: input, shape index: {}]
  %s1 = inlined_call_operand.vmem [shape: f32[1,128], index: 1, kind: input, shape index: {}]
  %s2 = inlined_call_operand.vmem [shape: f32[1,128], index: 2, kind: input, shape index: {}]
  %s3 = inlined_call_operand.vmem [shape: bf16[72,128], index: 3, kind: output, shape index: {}]
  %s4 = sld [smem:[#allocation0]]
  $region22: #{shallow_cnn_forward.6} parent=0
    _
  %s6 = ssub.s32 1, %s4
  %s7 = scalar_select 0, %s6, %s4
  // Predicated region
  $region2: #{shallow_cnn_forward.6} parent=0 // pred_check
    _
  $region3: #{shallow_cnn_forward.6} parent=0 // pred_check_branch
    %9 = sbr.rel (0) target = $region5
  $region4: #{shallow_cnn_forward.6} parent=0 // pred_region
    _
  $region5: #{shallow_cnn_forward.6} parent=0 // pred_fallthru
    _
  // Predicated region
  $region6: #{shallow_cnn_forward.6} parent=0 // pred_check
    _
  $region7: #{shallow_cnn_forward.6} parent=0 // pred_check_branch
    %11 = sbr.rel (0) target = $region9
  $region8: #{shallow_cnn_forward.6} parent=0 // pred_region
    _
  $region9: #{shallow_cnn_forward.6} parent=0 // pred_fallthru
    _
  // Predicated region
  $region10: #{shallow_cnn_forward.6} parent=0 // pred_check
    _
  $region11: #{shallow_cnn_forward.6} parent=0 // pred_check_branch
    %13 = sbr.rel (0) target = $region13
  $region12: #{shallow_cnn_forward.6} parent=0 // pred_region
    _
  $region13: #{shallow_cnn_forward.6} parent=0 // pred_fallthru
    _
  %v14 = vld [vmem:[%s0] sm:$0xf]
  %v15 = vld [vmem:[%s0 + $0x4] sm:$0xf]
  %v16 = vld [vmem:[%s0 + $0x8] sm:$0xf]
  %v17 = vld [vmem:[%s0 + $0xc] sm:$0xf]
  %v18 = vld [vmem:[%s0 + $0x10] sm:$0xf]
  %v19 = vld [vmem:[%s0 + $0x14] sm:$0xf]
  %v20 = vld [vmem:[%s0 + $0x18] sm:$0xf]
  %v21 = vld [vmem:[%s0 + $0x1c] sm:$0xf]
  %v22 = vld [vmem:[%s0 + $0x20] sm:$0xf]
  %v23 = vunpack.c.l.bf16 %v14
  %v24 = vunpack.c.l.bf16 %v15
  %v25 = vunpack.c.l.bf16 %v16
  %v26 = vunpack.c.l.bf16 %v17
  %v27 = vunpack.c.l.bf16 %v18
  %v28 = vunpack.c.l.bf16 %v19
  %v29 = vunpack.c.l.bf16 %v20
  %v30 = vunpack.c.l.bf16 %v21
  %v31 = vunpack.c.l.bf16 %v22
  %v32 = vld [vmem:[%s1] sm:$0x1]
  %v34 = vperm.slane %v32, 0
  %v36 = vmul.f32 %v23, %v34
  %v37 = vmul.f32 %v24, %v34
  %v38 = vmul.f32 %v25, %v34
  %v39 = vmul.f32 %v26, %v34
  %v40 = vmul.f32 %v27, %v34
  %v41 = vmul.f32 %v28, %v34
  %v42 = vmul.f32 %v29, %v34
  %v43 = vmul.f32 %v30, %v34
  %v44 = vmul.f32 %v31, %v34
  %v45 = vld [vmem:[%s2] sm:$0x1]
  %v47 = vperm.slane %v45, 0
  %v49 = vadd.f32 %v36, %v47
  %v50 = vadd.f32 %v37, %v47
  %v51 = vadd.f32 %v38, %v47
  %v52 = vadd.f32 %v39, %v47
  %v53 = vadd.f32 %v40, %v47
  %v54 = vadd.f32 %v41, %v47
  %v55 = vadd.f32 %v42, %v47
  %v56 = vadd.f32 %v43, %v47
  %v57 = vadd.f32 %v44, %v47
  %v58 = vmax.f32 %v49, 0.0
  %v59 = vmax.f32 %v50, 0.0
  %v60 = vmax.f32 %v51, 0.0
  %v61 = vmax.f32 %v52, 0.0
  %v62 = vmax.f32 %v53, 0.0
  %v63 = vmax.f32 %v54, 0.0
  %v64 = vmax.f32 %v55, 0.0
  %v65 = vmax.f32 %v56, 0.0
  %v66 = vmax.f32 %v57, 0.0
  %v67 = vpack.c.bf16 %v58, %v58
  %v68 = vpack.c.bf16 %v59, %v59
  %v69 = vpack.c.bf16 %v60, %v60
  %v70 = vpack.c.bf16 %v61, %v61
  %v71 = vpack.c.bf16 %v62, %v62
  %v72 = vpack.c.bf16 %v63, %v63
  %v73 = vpack.c.bf16 %v64, %v64
  %v74 = vpack.c.bf16 %v65, %v65
  %v75 = vpack.c.bf16 %v66, %v66
  %76 = vst [vmem:[%s3] sm:$0xf] %v67
  %77 = vst [vmem:[%s3 + $0x4] sm:$0xf] %v68
  %78 = vst [vmem:[%s3 + $0x8] sm:$0xf] %v69
  %79 = vst [vmem:[%s3 + $0xc] sm:$0xf] %v70
  %80 = vst [vmem:[%s3 + $0x10] sm:$0xf] %v71
  %81 = vst [vmem:[%s3 + $0x14] sm:$0xf] %v72
  %82 = vst [vmem:[%s3 + $0x18] sm:$0xf] %v73
  %83 = vst [vmem:[%s3 + $0x1c] sm:$0xf] %v74
  %84 = vst [vmem:[%s3 + $0x20] sm:$0xf] %v75
  // Predicated region
  $region14: #{shallow_cnn_forward.6} parent=0 // pred_check
    _
  $region15: #{shallow_cnn_forward.6} parent=0 // pred_check_branch
    %86 = sbr.rel (0) target = $region17
  $region16: #{shallow_cnn_forward.6} parent=0 // pred_region
    _
  $region17: #{shallow_cnn_forward.6} parent=0 // pred_fallthru
    _
  // Predicated region
  $region18: #{shallow_cnn_forward.6} parent=0 // pred_check
    _
  $region19: #{shallow_cnn_forward.6} parent=0 // pred_check_branch
    %88 = sbr.rel (0) target = $region21
  $region20: #{shallow_cnn_forward.6} parent=0 // pred_region
    _
  $region21: #{shallow_cnn_forward.6} parent=0 // pred_fallthru
    _

// kernel: shallow_cnn_forward.5
$region0: #{shallow_cnn_forward.5}
  #allocation0 [shape = 'u32[]', space=smem, size = 0x4, offset = 0x4, fixed_abs, tag = 'smem constant byte address 0x4 - core index']
  #allocation1 [shape = 'u32[72,128]{1,0:T(1,128)}', space=vmem, size = 0x9000, scoped, tag = 'internal scratch']
  %s0 = inlined_call_operand.vmem [shape: bf16[2,88,16], index: 0, kind: input, shape index: {}]
  %s1 = inlined_call_operand.vmem [shape: bf16[4,16,64], index: 1, kind: input, shape index: {}]
  %s2 = inlined_call_operand.vmem [shape: bf16[2,72,64], index: 2, kind: output, shape index: {0}]
  %s3 = inlined_call_operand.vmem [shape: f32[2,8,64], index: 3, kind: output, shape index: {1}]
  %s4 = inlined_call_operand.vmem [shape: f32[2,8,64], index: 4, kind: output, shape index: {2}]
  %5 = xla_tuple %s2, %s3, %s4
  %s6 = sld [smem:[#allocation0]]
  $region61: #{shallow_cnn_forward.5} parent=0
    _
  %s8 = ssub.s32 1, %s6
  %s9 = scalar_select 0, %s8, %s6
  loop: start=0, step=1, limit=4
  $region2: #{shallow_cnn_forward.5} parent=0 // loop_pre_header
    _
  $region3: #{shallow_cnn_forward.5} parent=0 // loop_header
    %s11 = sphi 0, %s15
    %p12 = scmp.ge.s32.totalorder %s11, 4
    %s18 = sphi 0, %s30
    %s19 = sphi 0, %s26
    %s20 = sphi 0, %s18
    %s21 = sphi 0, %s19
    %s22 = sphi 0, %s20
    %s23 = sphi 0, %s21
    %s35 = sphi 0, %s37
    %s38 = sphi 0, %s35
    %s39 = sphi 0, %s38
    %s55 = sphi 0, %s39
    %s59 = sphi 0, %s59
    %s61 = sphi 0, %s59
    %s62 = sphi 0, %s61
    %s76 = sphi 0, %s62
    %s84 = sphi 0, %s86
    %s87 = sphi 0, %s84
    %s88 = sphi 0, %s87
    %s104 = sphi 0, %s88
    %s110 = sphi 0, %s112
    %s113 = sphi 0, %s110
    %s114 = sphi 0, %s113
    %s130 = sphi 0, %s114
    %s136 = sphi 0, %s138
    %s139 = sphi 0, %s136
    %s140 = sphi 0, %s139
    %s156 = sphi 0, %s140
  $region4: #{shallow_cnn_forward.5} parent=0 // loop_header_branch
    %14 = sbr.rel (%p12) target = $region8
  $region5: #{shallow_cnn_forward.5} parent=0 // loop_body
    %s16 = ssub.s32 %s11, 1
    %s17 = ssub.s32 %s11, 2
    %s24 = sadd.s32 1, %s19
    %p25 = scmp.ge.s32.totalorder %s24, 1
    %s26 = scalar_select %p25, 0, %s24
    %s27 = sadd.s32 1, %s18
    %s28 = scalar_select %p25, %s27, %s18
    %p29 = scmp.ge.s32.totalorder %s28, 2
    %s30 = scalar_select %p29, 0, %s28
    %s31 = sadd.s32 %s18, %s19
    %s32 = sadd.s32 %s30, %s26
    %s33 = ssub.s32 %s31, %s32
    %p34 = scmp.eq.s32.totalorder %s33, 0
    %s36 = sadd.s32 %s35, 1
    %s37 = scalar_select %p34, %s35, %s36
    %p40 = pneg %p34
    %p41 = scmp.eq.s32.totalorder %s11, 1
    %p42 = por %p40, %p41
    %p43 = scmp.ne.s32.totalorder %s35, %s38
    %p44 = scmp.eq.s32.totalorder %s11, 0
    %p45 = por %p43, %p44
    %p46 = scmp.ne.s32.totalorder %s35, %s38
    %p47 = scmp.eq.s32.totalorder %s16, 1
    %p48 = por %p46, %p47
    %p49 = scmp.ne.s32.totalorder %s38, %s39
    %p50 = scmp.eq.s32.totalorder %s16, 0
    %p51 = por %p49, %p50
    %p52 = scmp.ne.s32.totalorder %s38, %s39
    %p53 = scmp.eq.s32.totalorder %s17, 1
    %p54 = por %p52, %p53
    %p56 = scmp.ne.s32.totalorder %s39, %s55
    %p57 = scmp.eq.s32.totalorder %s17, 0
    %p58 = por %p56, %p57
    %s60 = sadd.s32 %s59, 1
    %p63 = scmp.eq.s32.totalorder %s11, 1
    %p64 = scmp.ne.s32.totalorder %s59, %s61
    %p65 = scmp.eq.s32.totalorder %s11, 0
    %p66 = por %p64, %p65
    %p67 = scmp.ne.s32.totalorder %s59, %s61
    %p68 = scmp.eq.s32.totalorder %s16, 1
    %p69 = por %p67, %p68
    %p70 = scmp.ne.s32.totalorder %s61, %s62
    %p71 = scmp.eq.s32.totalorder %s16, 0
    %p72 = por %p70, %p71
    %p73 = scmp.ne.s32.totalorder %s61, %s62
    %p74 = scmp.eq.s32.totalorder %s17, 1
    %p75 = por %p73, %p74
    %p77 = scmp.ne.s32.totalorder %s62, %s76
    %p78 = scmp.eq.s32.totalorder %s17, 0
    %p79 = por %p77, %p78
    %s80 = sadd.s32 %s18, %s19
    %s81 = sadd.s32 %s30, %s26
    %s82 = ssub.s32 %s80, %s81
    %p83 = scmp.eq.s32.totalorder %s82, 0
    %s85 = sadd.s32 %s84, 1
    %s86 = scalar_select %p83, %s84, %s85
    %p89 = pneg %p83
    %p90 = scmp.eq.s32.totalorder %s11, 1
    %p91 = por %p89, %p90
    %p92 = scmp.ne.s32.totalorder %s84, %s87
    %p93 = scmp.eq.s32.totalorder %s11, 0
    %p94 = por %p92, %p93
    %p95 = scmp.ne.s32.totalorder %s84, %s87
    %p96 = scmp.eq.s32.totalorder %s16, 1
    %p97 = por %p95, %p96
    %p98 = scmp.ne.s32.totalorder %s87, %s88
    %p99 = scmp.eq.s32.totalorder %s16, 0
    %p100 = por %p98, %p99
    %p101 = scmp.ne.s32.totalorder %s87, %s88
    %p102 = scmp.eq.s32.totalorder %s17, 1
    %p103 = por %p101, %p102
    %p105 = scmp.ne.s32.totalorder %s88, %s104
    %p106 = scmp.eq.s32.totalorder %s17, 0
    %p107 = por %p105, %p106
    %s108 = ssub.s32 %s18, %s30
    %p109 = scmp.eq.s32.totalorder %s108, 0
    %s111 = sadd.s32 %s110, 1
    %s112 = scalar_select %p109, %s110, %s111
    %p115 = pneg %p109
    %p116 = scmp.eq.s32.totalorder %s11, 1
    %p117 = por %p115, %p116
    %p118 = scmp.ne.s32.totalorder %s110, %s113
    %p119 = scmp.eq.s32.totalorder %s11, 0
    %p120 = por %p118, %p119
    %p121 = scmp.ne.s32.totalorder %s110, %s113
    %p122 = scmp.eq.s32.totalorder %s16, 1
    %p123 = por %p121, %p122
    %p124 = scmp.ne.s32.totalorder %s113, %s114
    %p125 = scmp.eq.s32.totalorder %s16, 0
    %p126 = por %p124, %p125
    %p127 = scmp.ne.s32.totalorder %s113, %s114
    %p128 = scmp.eq.s32.totalorder %s17, 1
    %p129 = por %p127, %p128
    %p131 = scmp.ne.s32.totalorder %s114, %s130
    %p132 = scmp.eq.s32.totalorder %s17, 0
    %p133 = por %p131, %p132
    %s134 = ssub.s32 %s18, %s30
    %p135 = scmp.eq.s32.totalorder %s134, 0
    %s137 = sadd.s32 %s136, 1
    %s138 = scalar_select %p135, %s136, %s137
    %p141 = pneg %p135
    %p142 = scmp.eq.s32.totalorder %s11, 1
    %p143 = por %p141, %p142
    %p144 = scmp.ne.s32.totalorder %s136, %s139
    %p145 = scmp.eq.s32.totalorder %s11, 0
    %p146 = por %p144, %p145
    %p147 = scmp.ne.s32.totalorder %s136, %s139
    %p148 = scmp.eq.s32.totalorder %s16, 1
    %p149 = por %p147, %p148
    %p150 = scmp.ne.s32.totalorder %s139, %s140
    %p151 = scmp.eq.s32.totalorder %s16, 0
    %p152 = por %p150, %p151
    %p153 = scmp.ne.s32.totalorder %s139, %s140
    %p154 = scmp.eq.s32.totalorder %s17, 1
    %p155 = por %p153, %p154
    %p157 = scmp.ne.s32.totalorder %s140, %s156
    %p158 = scmp.eq.s32.totalorder %s17, 0
    %p159 = por %p157, %p158
    %p160 = scmp.le.s32.totalorder 1, %s11
    %p161 = scmp.lt.s32.totalorder %s11, 3
    %p162 = pnand %p160, %p161
    %p163 = pneg %p162
    // Predicated region
    $region9: #{shallow_cnn_forward.5} parent=5 // pred_check
      _
    $region10: #{shallow_cnn_forward.5} parent=5 // pred_check_branch
      %165 = sbr.rel (%p162) target = $region12
    $region11: #{shallow_cnn_forward.5} parent=5 // pred_region
      %s166 = ssub.s32 %s11, 1
      // Predicated region
      $region13: #{shallow_cnn_forward.5} parent=11 // pred_check
        %p167 = pneg %p72
      $region14: #{shallow_cnn_forward.5} parent=11 // pred_check_branch
        %169 = sbr.rel (%p167) target = $region16
      $region15: #{shallow_cnn_forward.5} parent=11 // pred_region
        _
      $region16: #{shallow_cnn_forward.5} parent=11 // pred_fallthru
        _
    $region12: #{shallow_cnn_forward.5} parent=5 // pred_fallthru
      _
    %p170 = scmp.lt.s32.totalorder %s11, 2
    // Predicated region
    $region17: #{shallow_cnn_forward.5} parent=5 // pred_check
      %p171 = pneg %p170
    $region18: #{shallow_cnn_forward.5} parent=5 // pred_check_branch
      %173 = sbr.rel (%p171) target = $region20
    $region19: #{shallow_cnn_forward.5} parent=5 // pred_region
      // Predicated region
      $region21: #{shallow_cnn_forward.5} parent=19 // pred_check
        %p174 = pneg %p45
      $region22: #{shallow_cnn_forward.5} parent=19 // pred_check_branch
        %176 = sbr.rel (%p174) target = $region24
      $region23: #{shallow_cnn_forward.5} parent=19 // pred_region
        %s177 = sadd.s32 %s18, %s19
        %p178 = scmp.lt.s32.totalorder %s177, 1
        %s179 = scalar_select %p178, %s177, 1
        %s180 = smul.addr %s179, 11
        %s181 = smul.addr %s180, 4
        %s182 = scalar_lea.vmem %s0, %s181
        %s183 = sadd.s32 %s18, %s19
      $region24: #{shallow_cnn_forward.5} parent=19 // pred_fallthru
        _
    $region20: #{shallow_cnn_forward.5} parent=5 // pred_fallthru
      _
    %p184 = scmp.le.s32.totalorder 1, %s11
    %p185 = scmp.lt.s32.totalorder %s11, 3
    %p186 = pnand %p184, %p185
    %p187 = pneg %p186
    // Predicated region
    $region25: #{shallow_cnn_forward.5} parent=5 // pred_check
      _
    $region26: #{shallow_cnn_forward.5} parent=5 // pred_check_branch
      %189 = sbr.rel (%p186) target = $region28
    $region27: #{shallow_cnn_forward.5} parent=5 // pred_region
      %s190 = ssub.s32 %s11, 1
      %s191 = sadd.s32 %s20, %s21
      %p192 = scmp.lt.s32.totalorder %s191, 1
      %s193 = scalar_select %p192, %s191, 1
      %s194 = smul.addr %s193, 11
      %s195 = smul.addr %s194, 4
      %s196 = scalar_lea.vmem %s0, %s195
      %p197 = pneg %p51
      %p198 = pneg %p48
      %p199 = pneg %p72
      %p200 = pneg %p69
      %p201 = pneg %p100
      %p202 = pneg %p97
      %s203 = sadd.s32 %s20, %s21
      %p204 = scmp.lt.s32.totalorder %s203, 1
      %s205 = scalar_select %p204, %s203, 1
      %s206 = smul.addr %s205, 9
      %s207 = smul.addr %s206, 4
      %s208 = scalar_lea.vmem %s2, %s207
      %p209 = pneg %p126
      %p210 = pneg %p123
      %p211 = scmp.lt.s32.totalorder %s20, 1
      %s212 = scalar_select %p211, %s20, 1
      %s213 = smul.addr %s212, 8
      %s214 = scalar_lea.vmem %s3, %s213
      %p215 = pneg %p152
      %p216 = pneg %p149
      %p217 = scmp.lt.s32.totalorder %s20, 1
      %s218 = scalar_select %p217, %s20, 1
      %s219 = smul.addr %s218, 8
      %s220 = scalar_lea.vmem %s4, %s219
      %s221 = sadd.s32 %s20, %s21
      %p222 = scmp.lt.s32.totalorder %s221, 1
      %s223 = scalar_select %p222, %s221, 1
      %s224 = smul.addr %s223, 11
      %s225 = smul.addr %s224, 4
      %s226 = scalar_lea.vmem %s0, %s225
      %s227 = sadd.s32 %s20, %s21
      %s228 = sadd.s32 %s20, %s21
      %p229 = scmp.lt.s32.totalorder %s228, 1
      %s230 = scalar_select %p229, %s228, 1
      %s231 = smul.addr %s230, 9
      %s232 = smul.addr %s231, 4
      %s233 = scalar_lea.vmem %s2, %s232
      %s234 = sadd.s32 %s20, %s21
      %p235 = scmp.lt.s32.totalorder %s20, 1
      %s236 = scalar_select %p235, %s20, 1
      %s237 = smul.addr %s236, 8
      %s238 = scalar_lea.vmem %s3, %s237
      %p239 = scmp.lt.s32.totalorder %s20, 1
      %s240 = scalar_select %p239, %s20, 1
      %s241 = smul.addr %s240, 8
      %s242 = scalar_lea.vmem %s4, %s241
      %p244 = scmp.eq.s32.totalorder %s21, 0
      // Predicated region
      $region29: #{shallow_cnn_forward.5} parent=27 // pred_check
        %p245 = pneg %p244
      $region30: #{shallow_cnn_forward.5} parent=27 // pred_check_branch
        %247 = sbr.rel (%p245) target = $region32
      $region31: #{shallow_cnn_forward.5} parent=27 // pred_region
        %vm248 = vcmask 523264
        %249 = vst.msk [vmem:[%s238] sm:$0xff] %vm248, 0.0
        %250 = vst.msk [vmem:[%s242] sm:$0xff] %vm248, 0.0
      $region32: #{shallow_cnn_forward.5} parent=27 // pred_fallthru
        _
      %v251 = vlaneseq
      %v252 = vshrl.u32 %v251, 7
      %v253 = vadd.s32 %v252, 8
      %v254 = vadd.s32 %v252, 16
      %v255 = vadd.s32 %v252, 24
      %v256 = vadd.s32 %v252, 32
      %v257 = vadd.s32 %v252, 40
      %v258 = vadd.s32 %v252, 48
      %v259 = vadd.s32 %v252, 56
      %v260 = vadd.s32 %v252, 64
      %vm261 = vcmp.lt.s32.totalorder %v252, 0
      %v262 = vsub.s32 0, %v252
      %v263 = vsel %vm261, %v262, %v252
      %v264 = vand.u32 %v263, 65535
      %v265 = vshrl.u32 %v263, 16
      %v267 = vmul.u32 %v264, 14564
      %v268 = vmul.u32 %v264, 58254
      %v269 = vmul.u32 %v265, 14564
      %v270 = vmul.u32 %v265, 58254
      %v271 = vshll.u32 %v268, 16
      %v272 = vshrl.u32 %v268, 16
      %v273 = vshll.u32 %v269, 16
      %v274 = vshrl.u32 %v269, 16
      %vm275 = vc.u32 %v267, %v271
      %v276 = vsel %vm275, 1, 0
      %v277 = vadd.s32 %v267, %v271
      %v278 = vadd.s32 %v270, %v276
      %vm279 = vc.u32 %v277, %v273
      %v280 = vsel %vm279, 1, 0
      %v281 = vadd.s32 %v277, %v273
      %v282 = vadd.s32 %v278, %v280
      %v283 = vadd.s32 %v282, %v272
      %v284 = vadd.s32 %v283, %v274
      %v285 = vshrl.u32 %v284, 3
      %v286 = vmul.u32 %v285, 9
      %v287 = vsub.s32 %v263, %v286
      %v288 = vsub.s32 0, %v287
      %v289 = vsel %vm261, %v288, %v287
      %vm290 = vcmp.lt.s32.totalorder %v253, 0
      %v291 = vsub.s32 0, %v253
      %v292 = vsel %vm290, %v291, %v253
      %v293 = vand.u32 %v292, 65535
      %v294 = vshrl.u32 %v292, 16
      %v296 = vmul.u32 %v293, 14564
      %v297 = vmul.u32 %v293, 58254
      %v298 = vmul.u32 %v294, 14564
      %v299 = vmul.u32 %v294, 58254
      %v300 = vshll.u32 %v297, 16
      %v301 = vshrl.u32 %v297, 16
      %v302 = vshll.u32 %v298, 16
      %v303 = vshrl.u32 %v298, 16
      %vm304 = vc.u32 %v296, %v300
      %v305 = vsel %vm304, 1, 0
      %v306 = vadd.s32 %v296, %v300
      %v307 = vadd.s32 %v299, %v305
      %vm308 = vc.u32 %v306, %v302
      %v309 = vsel %vm308, 1, 0
      %v310 = vadd.s32 %v306, %v302
      %v311 = vadd.s32 %v307, %v309
      %v312 = vadd.s32 %v311, %v301
      %v313 = vadd.s32 %v312, %v303
      %v314 = vshrl.u32 %v313, 3
      %v315 = vmul.u32 %v314, 9
      %v316 = vsub.s32 %v292, %v315
      %v317 = vsub.s32 0, %v316
      %v318 = vsel %vm290, %v317, %v316
      %vm319 = vcmp.lt.s32.totalorder %v254, 0
      %v320 = vsub.s32 0, %v254
      %v321 = vsel %vm319, %v320, %v254
      %v322 = vand.u32 %v321, 65535
      %v323 = vshrl.u32 %v321, 16
      %v325 = vmul.u32 %v322, 14564
      %v326 = vmul.u32 %v322, 58254
      %v327 = vmul.u32 %v323, 14564
      %v328 = vmul.u32 %v323, 58254
      %v329 = vshll.u32 %v326, 16
      %v330 = vshrl.u32 %v326, 16
      %v331 = vshll.u32 %v327, 16
      %v332 = vshrl.u32 %v327, 16
      %vm333 = vc.u32 %v325, %v329
      %v334 = vsel %vm333, 1, 0
      %v335 = vadd.s32 %v325, %v329
      %v336 = vadd.s32 %v328, %v334
      %vm337 = vc.u32 %v335, %v331
      %v338 = vsel %vm337, 1, 0
      %v339 = vadd.s32 %v335, %v331
      %v340 = vadd.s32 %v336, %v338
      %v341 = vadd.s32 %v340, %v330
      %v342 = vadd.s32 %v341, %v332
      %v343 = vshrl.u32 %v342, 3
      %v344 = vmul.u32 %v343, 9
      %v345 = vsub.s32 %v321, %v344
      %v346 = vsub.s32 0, %v345
      %v347 = vsel %vm319, %v346, %v345
      %vm348 = vcmp.lt.s32.totalorder %v255, 0
      %v349 = vsub.s32 0, %v255
      %v350 = vsel %vm348, %v349, %v255
      %v351 = vand.u32 %v350, 65535
      %v352 = vshrl.u32 %v350, 16
      %v354 = vmul.u32 %v351, 14564
      %v355 = vmul.u32 %v351, 58254
      %v356 = vmul.u32 %v352, 14564
      %v357 = vmul.u32 %v352, 58254
      %v358 = vshll.u32 %v355, 16
      %v359 = vshrl.u32 %v355, 16
      %v360 = vshll.u32 %v356, 16
      %v361 = vshrl.u32 %v356, 16
      %vm362 = vc.u32 %v354, %v358
      %v363 = vsel %vm362, 1, 0
      %v364 = vadd.s32 %v354, %v358
      %v365 = vadd.s32 %v357, %v363
      %vm366 = vc.u32 %v364, %v360
      %v367 = vsel %vm366, 1, 0
      %v368 = vadd.s32 %v364, %v360
      %v369 = vadd.s32 %v365, %v367
      %v370 = vadd.s32 %v369, %v359
      %v371 = vadd.s32 %v370, %v361
      %v372 = vshrl.u32 %v371, 3
      %v373 = vmul.u32 %v372, 9
      %v374 = vsub.s32 %v350, %v373
      %v375 = vsub.s32 0, %v374
      %v376 = vsel %vm348, %v375, %v374
      %vm377 = vcmp.lt.s32.totalorder %v256, 0
      %v378 = vsub.s32 0, %v256
      %v379 = vsel %vm377, %v378, %v256
      %v380 = vand.u32 %v379, 65535
      %v381 = vshrl.u32 %v379, 16
      %v383 = vmul.u32 %v380, 14564
      %v384 = vmul.u32 %v380, 58254
      %v385 = vmul.u32 %v381, 14564
      %v386 = vmul.u32 %v381, 58254
      %v387 = vshll.u32 %v384, 16
      %v388 = vshrl.u32 %v384, 16
      %v389 = vshll.u32 %v385, 16
      %v390 = vshrl.u32 %v385, 16
      %vm391 = vc.u32 %v383, %v387
      %v392 = vsel %vm391, 1, 0
      %v393 = vadd.s32 %v383, %v387
      %v394 = vadd.s32 %v386, %v392
      %vm395 = vc.u32 %v393, %v389
      %v396 = vsel %vm395, 1, 0
      %v397 = vadd.s32 %v393, %v389
      %v398 = vadd.s32 %v394, %v396
      %v399 = vadd.s32 %v398, %v388
      %v400 = vadd.s32 %v399, %v390
      %v401 = vshrl.u32 %v400, 3
      %v402 = vmul.u32 %v401, 9
      %v403 = vsub.s32 %v379, %v402
      %v404 = vsub.s32 0, %v403
      %v405 = vsel %vm377, %v404, %v403
      %vm406 = vcmp.lt.s32.totalorder %v257, 0
      %v407 = vsub.s32 0, %v257
      %v408 = vsel %vm406, %v407, %v257
      %v409 = vand.u32 %v408, 65535
      %v410 = vshrl.u32 %v408, 16
      %v412 = vmul.u32 %v409, 14564
      %v413 = vmul.u32 %v409, 58254
      %v414 = vmul.u32 %v410, 14564
      %v415 = vmul.u32 %v410, 58254
      %v416 = vshll.u32 %v413, 16
      %v417 = vshrl.u32 %v413, 16
      %v418 = vshll.u32 %v414, 16
      %v419 = vshrl.u32 %v414, 16
      %vm420 = vc.u32 %v412, %v416
      %v421 = vsel %vm420, 1, 0
      %v422 = vadd.s32 %v412, %v416
      %v423 = vadd.s32 %v415, %v421
      %vm424 = vc.u32 %v422, %v418
      %v425 = vsel %vm424, 1, 0
      %v426 = vadd.s32 %v422, %v418
      %v427 = vadd.s32 %v423, %v425
      %v428 = vadd.s32 %v427, %v417
      %v429 = vadd.s32 %v428, %v419
      %v430 = vshrl.u32 %v429, 3
      %v431 = vmul.u32 %v430, 9
      %v432 = vsub.s32 %v408, %v431
      %v433 = vsub.s32 0, %v432
      %v434 = vsel %vm406, %v433, %v432
      %vm435 = vcmp.lt.s32.totalorder %v258, 0
      %v436 = vsub.s32 0, %v258
      %v437 = vsel %vm435, %v436, %v258
      %v438 = vand.u32 %v437, 65535
      %v439 = vshrl.u32 %v437, 16
      %v441 = vmul.u32 %v438, 14564
      %v442 = vmul.u32 %v438, 58254
      %v443 = vmul.u32 %v439, 14564
      %v444 = vmul.u32 %v439, 58254
      %v445 = vshll.u32 %v442, 16
      %v446 = vshrl.u32 %v442, 16
      %v447 = vshll.u32 %v443, 16
      %v448 = vshrl.u32 %v443, 16
      %vm449 = vc.u32 %v441, %v445
      %v450 = vsel %vm449, 1, 0
      %v451 = vadd.s32 %v441, %v445
      %v452 = vadd.s32 %v444, %v450
      %vm453 = vc.u32 %v451, %v447
      %v454 = vsel %vm453, 1, 0
      %v455 = vadd.s32 %v451, %v447
      %v456 = vadd.s32 %v452, %v454
      %v457 = vadd.s32 %v456, %v446
      %v458 = vadd.s32 %v457, %v448
      %v459 = vshrl.u32 %v458, 3
      %v460 = vmul.u32 %v459, 9
      %v461 = vsub.s32 %v437, %v460
      %v462 = vsub.s32 0, %v461
      %v463 = vsel %vm435, %v462, %v461
      %vm464 = vcmp.lt.s32.totalorder %v259, 0
      %v465 = vsub.s32 0, %v259
      %v466 = vsel %vm464, %v465, %v259
      %v467 = vand.u32 %v466, 65535
      %v468 = vshrl.u32 %v466, 16
      %v470 = vmul.u32 %v467, 14564
      %v471 = vmul.u32 %v467, 58254
      %v472 = vmul.u32 %v468, 14564
      %v473 = vmul.u32 %v468, 58254
      %v474 = vshll.u32 %v471, 16
      %v475 = vshrl.u32 %v471, 16
      %v476 = vshll.u32 %v472, 16
      %v477 = vshrl.u32 %v472, 16
      %vm478 = vc.u32 %v470, %v474
      %v479 = vsel %vm478, 1, 0
      %v480 = vadd.s32 %v470, %v474
      %v481 = vadd.s32 %v473, %v479
      %vm482 = vc.u32 %v480, %v476
      %v483 = vsel %vm482, 1, 0
      %v484 = vadd.s32 %v480, %v476
      %v485 = vadd.s32 %v481, %v483
      %v486 = vadd.s32 %v485, %v475
      %v487 = vadd.s32 %v486, %v477
      %v488 = vshrl.u32 %v487, 3
      %v489 = vmul.u32 %v488, 9
      %v490 = vsub.s32 %v466, %v489
      %v491 = vsub.s32 0, %v490
      %v492 = vsel %vm464, %v491, %v490
      %vm493 = vcmp.lt.s32.totalorder %v260, 0
      %v494 = vsub.s32 0, %v260
      %v495 = vsel %vm493, %v494, %v260
      %v496 = vand.u32 %v495, 65535
      %v497 = vshrl.u32 %v495, 16
      %v499 = vmul.u32 %v496, 14564
      %v500 = vmul.u32 %v496, 58254
      %v501 = vmul.u32 %v497, 14564
      %v502 = vmul.u32 %v497, 58254
      %v503 = vshll.u32 %v500, 16
      %v504 = vshrl.u32 %v500, 16
      %v505 = vshll.u32 %v501, 16
      %v506 = vshrl.u32 %v501, 16
      %vm507 = vc.u32 %v499, %v503
      %v508 = vsel %vm507, 1, 0
      %v509 = vadd.s32 %v499, %v503
      %v510 = vadd.s32 %v502, %v508
      %vm511 = vc.u32 %v509, %v505
      %v512 = vsel %vm511, 1, 0
      %v513 = vadd.s32 %v509, %v505
      %v514 = vadd.s32 %v510, %v512
      %v515 = vadd.s32 %v514, %v504
      %v516 = vadd.s32 %v515, %v506
      %v517 = vshrl.u32 %v516, 3
      %v518 = vmul.u32 %v517, 9
      %v519 = vsub.s32 %v495, %v518
      %v520 = vsub.s32 0, %v519
      %v521 = vsel %vm493, %v520, %v519
      %vm522 = vcmp.ne.s32.totalorder %v289, 0
      %vm523 = vcmp.ne.s32.totalorder %v318, 0
      %vm524 = vcmp.ne.s32.totalorder %v347, 0
      %vm525 = vcmp.ne.s32.totalorder %v376, 0
      %vm526 = vcmp.ne.s32.totalorder %v405, 0
      %vm527 = vcmp.ne.s32.totalorder %v434, 0
      %vm528 = vcmp.ne.s32.totalorder %v463, 0
      %vm529 = vcmp.ne.s32.totalorder %v492, 0
      %vm530 = vcmp.ne.s32.totalorder %v521, 0
      %vm531 = vcmp.lt.s32.totalorder %v289, 0
      %vm532 = vcmp.lt.s32.totalorder %v318, 0
      %vm533 = vcmp.lt.s32.totalorder %v347, 0
      %vm534 = vcmp.lt.s32.totalorder %v376, 0
      %vm535 = vcmp.lt.s32.totalorder %v405, 0
      %vm536 = vcmp.lt.s32.totalorder %v434, 0
      %vm537 = vcmp.lt.s32.totalorder %v463, 0
      %vm538 = vcmp.lt.s32.totalorder %v492, 0
      %vm539 = vcmp.lt.s32.totalorder %v521, 0
      %vm540 = vmand %vm531, %vm522
      %vm541 = vmand %vm532, %vm523
      %vm542 = vmand %vm533, %vm524
      %vm543 = vmand %vm534, %vm525
      %vm544 = vmand %vm535, %vm526
      %vm545 = vmand %vm536, %vm527
      %vm546 = vmand %vm537, %vm528
      %vm547 = vmand %vm538, %vm529
      %vm548 = vmand %vm539, %vm530
      %v549 = vadd.s32 %v289, 9
      %v550 = vadd.s32 %v318, 9
      %v551 = vadd.s32 %v347, 9
      %v552 = vadd.s32 %v376, 9
      %v553 = vadd.s32 %v405, 9
      %v554 = vadd.s32 %v434, 9
      %v555 = vadd.s32 %v463, 9
      %v556 = vadd.s32 %v492, 9
      %v557 = vadd.s32 %v521, 9
      %v558 = vsel %vm540, %v549, %v289
      %v559 = vsel %vm541, %v550, %v318
      %v560 = vsel %vm542, %v551, %v347
      %v561 = vsel %vm543, %v552, %v376
      %v562 = vsel %vm544, %v553, %v405
      %v563 = vsel %vm545, %v554, %v434
      %v564 = vsel %vm546, %v555, %v463
      %v565 = vsel %vm547, %v556, %v492
      %v566 = vsel %vm548, %v557, %v521
      %vm567 = vcmp.ne.s32.totalorder %v558, 8
      %vm568 = vcmp.ne.s32.totalorder %v559, 8
      %vm569 = vcmp.ne.s32.totalorder %v560, 8
      %vm570 = vcmp.ne.s32.totalorder %v561, 8
      %vm571 = vcmp.ne.s32.totalorder %v562, 8
      %vm572 = vcmp.ne.s32.totalorder %v563, 8
      %vm573 = vcmp.ne.s32.totalorder %v564, 8
      %vm574 = vcmp.ne.s32.totalorder %v565, 8
      %vm575 = vcmp.ne.s32.totalorder %v566, 8
      %v576 = vld [vmem:[%s226] sm:$0xf]
      %v577 = vld [vmem:[%s226 + $0x4] sm:$0xf]
      %v578 = vld [vmem:[%s226 + $0x8] sm:$0xf]
      %v579 = vld [vmem:[%s226 + $0xc] sm:$0xf]
      %v580 = vld [vmem:[%s226 + $0x10] sm:$0xf]
      %v581 = vld [vmem:[%s226 + $0x14] sm:$0xf]
      %v582 = vld [vmem:[%s226 + $0x18] sm:$0xf]
      %v583 = vld [vmem:[%s226 + $0x1c] sm:$0xf]
      %v584 = vld [vmem:[%s226 + $0x20] sm:$0xf]
      %v585 = vld [vmem:[%s1] sm:$0xf]
      %v586 = vld [vmem:[%s1 + $0x4] sm:$0xf]
      %v587 = vld [vmem:[%s226 + $0x24] sm:$0x1]
      %s588 = scalar_lea.vmem %s1, 8
      %v589 = vld [vmem:[%s588] sm:$0xf]
      %v590 = vld [vmem:[%s588 + $0x4] sm:$0xf]
      %v601 = vunpack.c.l.b16 %v576
      %v602 = vunpack.c.l.b16 %v577
      %v603 = vunpack.c.l.b16 %v578
      %v604 = vunpack.c.l.b16 %v579
      %v605 = vunpack.c.l.b16 %v580
      %v606 = vunpack.c.l.b16 %v581
      %v607 = vunpack.c.l.b16 %v582
      %v608 = vunpack.c.l.b16 %v583
      %v609 = vunpack.c.l.b16 %v584
      %v610 = vunpack.c.l.b16 %v587
      %v611 = vpack.c.b16 %v602, %v601
      %v612 = vpack.c.b16 %v604, %v603
      %v613 = vpack.c.b16 %v606, %v605
      %v614 = vpack.c.b16 %v608, %v607
      %v615 = vpack.c.b16 %v610, %v609
      %vm616 = vsmask.f32 7424
      %v618 = vshrl.u32 %v611, 16
      %v620 = vshll.u32 %v611, 16
      %v622 = vrot.slane %v620, 1
      %v623 = vor.u32 %v618, %v622
      %v625 = vshll.u32 %v612, 16
      %v627 = vrot.slane %v625, 1
      %v628 = vsel %vm616, %v623, %v627
      %v629 = vshrl.u32 %v612, 16
      %v631 = vor.u32 %v629, %v627
      %v633 = vshll.u32 %v613, 16
      %v635 = vrot.slane %v633, 1
      %v636 = vsel %vm616, %v631, %v635
      %v637 = vshrl.u32 %v613, 16
      %v639 = vor.u32 %v637, %v635
      %v641 = vshll.u32 %v614, 16
      %v643 = vrot.slane %v641, 1
      %v644 = vsel %vm616, %v639, %v643
      %v645 = vshrl.u32 %v614, 16
      %v647 = vor.u32 %v645, %v643
      %v649 = vshll.u32 %v615, 16
      %v651 = vrot.slane %v649, 1
      %v652 = vsel %vm616, %v647, %v651
      %v653 = vshrl.u32 %v615, 16
      %v655 = vor.u32 %v653, %v651
      %v658 = vunpack.c.l.b16 %v589
      %v659 = vunpack.c.l.b16 %v590
      %v660 = vpack.c.b16 %v659, %v658
      %vm662 = vcmask 130048
      %v664 = vsel %vm662, %v628, 0
      %v667 = vsel %vm662, %v636, 0
      %v670 = vsel %vm662, %v644, 0
      %v673 = vsel %vm662, %v652, 0
      %v676 = vsel %vm662, %v655, 0
      %678 = vmatpush.bf16.msra.mxu0 0
      %679 = vmatpush.bf16.msra.mxu0 0
      %680 = vmatpush.bf16.msra.mxu0 0
      %681 = vmatpush.bf16.msra.mxu0 0
      %682 = vmatpush.bf16.msra.mxu0 0
      %683 = vmatpush.bf16.msra.mxu0 0
      %684 = vmatpush.bf16.msra.mxu0 0
      %685 = vmatpush.bf16.msra.mxu0 %v660
      %686 = vmatmul.bf16.gmra.mxu0 %v664
      %v687 = vpop.f32.mrf.mxu0
      %v688 = vadd.f32 0.0, %v687
      %v689 = vpop.f32.mrf.mxu0
      %v690 = vadd.f32 0.0, %v689
      %691 = vmatmul.bf16.gmra.mxu0 %v667
      %v692 = vpop.f32.mrf.mxu0
      %v693 = vadd.f32 0.0, %v692
      %v694 = vpop.f32.mrf.mxu0
      %v695 = vadd.f32 0.0, %v694
      %696 = vmatmul.bf16.gmra.mxu0 %v670
      %v697 = vpop.f32.mrf.mxu0
      %v698 = vadd.f32 0.0, %v697
      %v699 = vpop.f32.mrf.mxu0
      %v700 = vadd.f32 0.0, %v699
      %701 = vmatmul.bf16.gmra.mxu0 %v673
      %v702 = vpop.f32.mrf.mxu0
      %v703 = vadd.f32 0.0, %v702
      %v704 = vpop.f32.mrf.mxu0
      %v705 = vadd.f32 0.0, %v704
      %706 = vmatmul.bf16.gmra.mxu0 %v676
      %v707 = vpop.f32.mrf.mxu0
      %v708 = vadd.f32 0.0, %v707
      %v709 = vpop.f32.mrf.mxu0
      %710 = vdwg.mxu0
      %v711 = vpack.c.b16 %v609, %v609
      %v714 = vunpack.c.l.b16 %v585
      %v715 = vunpack.c.l.b16 %v586
      %v716 = vpack.c.b16 %v715, %v714
      %v718 = vsel %vm662, %v611, 0
      %v720 = vsel %vm662, %v612, 0
      %v722 = vsel %vm662, %v613, 0
      %v724 = vsel %vm662, %v614, 0
      %v727 = vsel %vm662, %v711, 0
      %729 = vmatpush.bf16.msra.mxu0 0
      %730 = vmatpush.bf16.msra.mxu0 0
      %731 = vmatpush.bf16.msra.mxu0 0
      %732 = vmatpush.bf16.msra.mxu0 0
      %733 = vmatpush.bf16.msra.mxu0 0
      %734 = vmatpush.bf16.msra.mxu0 0
      %735 = vmatpush.bf16.msra.mxu0 0
      %736 = vmatpush.bf16.msra.mxu0 %v716
      %737 = vmatmul.bf16.gmra.mxu0 %v718
      %v738 = vpop.f32.mrf.mxu0
      %v739 = vadd.f32 %v688, %v738
      %v740 = vpop.f32.mrf.mxu0
      %v741 = vadd.f32 %v690, %v740
      %742 = vmatmul.bf16.gmra.mxu0 %v720
      %v743 = vpop.f32.mrf.mxu0
      %v744 = vadd.f32 %v693, %v743
      %v745 = vpop.f32.mrf.mxu0
      %v746 = vadd.f32 %v695, %v745
      %747 = vmatmul.bf16.gmra.mxu0 %v722
      %v748 = vpop.f32.mrf.mxu0
      %v749 = vadd.f32 %v698, %v748
      %v750 = vpop.f32.mrf.mxu0
      %v751 = vadd.f32 %v700, %v750
      %752 = vmatmul.bf16.gmra.mxu0 %v724
      %v753 = vpop.f32.mrf.mxu0
      %v754 = vadd.f32 %v703, %v753
      %v755 = vpop.f32.mrf.mxu0
      %v756 = vadd.f32 %v705, %v755
      %757 = vmatmul.bf16.gmra.mxu0 %v727
      %v758 = vpop.f32.mrf.mxu0
      %v759 = vadd.f32 %v708, %v758
      %v760 = vpop.f32.mrf.mxu0
      %761 = vdwg.mxu0
      %v762 = vld [vmem:[%s226 + $0x4] sm:$0xf]
      %v763 = vld [vmem:[%s226 + $0x8] sm:$0xf]
      %v764 = vld [vmem:[%s226 + $0xc] sm:$0xf]
      %v765 = vld [vmem:[%s226 + $0x10] sm:$0xf]
      %v766 = vld [vmem:[%s226 + $0x14] sm:$0xf]
      %v767 = vld [vmem:[%s226 + $0x18] sm:$0xf]
      %v768 = vld [vmem:[%s226 + $0x1c] sm:$0xf]
      %v769 = vld [vmem:[%s226 + $0x20] sm:$0xf]
      %v770 = vld [vmem:[%s226 + $0x24] sm:$0xf]
      %v771 = vld [vmem:[%s226 + $0x28] sm:$0x1]
      %s772 = scalar_lea.vmem %s1, 16
      %v773 = vld [vmem:[%s772] sm:$0xf]
      %v774 = vld [vmem:[%s772 + $0x4] sm:$0xf]
      %v785 = vunpack.c.l.b16 %v762
      %v786 = vunpack.c.l.b16 %v763
      %v787 = vunpack.c.l.b16 %v764
      %v788 = vunpack.c.l.b16 %v765
      %v789 = vunpack.c.l.b16 %v766
      %v790 = vunpack.c.l.b16 %v767
      %v791 = vunpack.c.l.b16 %v768
      %v792 = vunpack.c.l.b16 %v769
      %v793 = vunpack.c.l.b16 %v770
      %v794 = vunpack.c.l.b16 %v771
      %v795 = vpack.c.b16 %v786, %v785
      %v796 = vpack.c.b16 %v788, %v787
      %v797 = vpack.c.b16 %v790, %v789
      %v798 = vpack.c.b16 %v792, %v791
      %v799 = vpack.c.b16 %v794, %v793
      %v801 = vshrl.u32 %v795, 16
      %v803 = vshll.u32 %v795, 16
      %v805 = vrot.slane %v803, 1
      %v806 = vor.u32 %v801, %v805
      %v808 = vshll.u32 %v796, 16
      %v810 = vrot.slane %v808, 1
      %v811 = vsel %vm616, %v806, %v810
      %v812 = vshrl.u32 %v796, 16
      %v814 = vor.u32 %v812, %v810
      %v816 = vshll.u32 %v797, 16
      %v818 = vrot.slane %v816, 1
      %v819 = vsel %vm616, %v814, %v818
      %v820 = vshrl.u32 %v797, 16
      %v822 = vor.u32 %v820, %v818
      %v824 = vshll.u32 %v798, 16
      %v826 = vrot.slane %v824, 1
      %v827 = vsel %vm616, %v822, %v826
      %v828 = vshrl.u32 %v798, 16
      %v830 = vor.u32 %v828, %v826
      %v832 = vshll.u32 %v799, 16
      %v834 = vrot.slane %v832, 1
      %v835 = vsel %vm616, %v830, %v834
      %v836 = vshrl.u32 %v799, 16
      %v838 = vor.u32 %v836, %v834
      %v841 = vunpack.c.l.b16 %v773
      %v842 = vunpack.c.l.b16 %v774
      %v843 = vpack.c.b16 %v842, %v841
      %v846 = vsel %vm662, %v811, 0
      %v849 = vsel %vm662, %v819, 0
      %v852 = vsel %vm662, %v827, 0
      %v855 = vsel %vm662, %v835, 0
      %v858 = vsel %vm662, %v838, 0
      %860 = vmatpush.bf16.msra.mxu0 0
      %861 = vmatpush.bf16.msra.mxu0 0
      %862 = vmatpush.bf16.msra.mxu0 0
      %863 = vmatpush.bf16.msra.mxu0 0
      %864 = vmatpush.bf16.msra.mxu0 0
      %865 = vmatpush.bf16.msra.mxu0 0
      %866 = vmatpush.bf16.msra.mxu0 0
      %867 = vmatpush.bf16.msra.mxu0 %v843
      %868 = vmatmul.bf16.gmra.mxu0 %v846
      %v869 = vpop.f32.mrf.mxu0
      %v870 = vadd.f32 0.0, %v869
      %v871 = vpop.f32.mrf.mxu0
      %v872 = vadd.f32 0.0, %v871
      %873 = vmatmul.bf16.gmra.mxu0 %v849
      %v874 = vpop.f32.mrf.mxu0
      %v875 = vadd.f32 0.0, %v874
      %v876 = vpop.f32.mrf.mxu0
      %v877 = vadd.f32 0.0, %v876
      %878 = vmatmul.bf16.gmra.mxu0 %v852
      %v879 = vpop.f32.mrf.mxu0
      %v880 = vadd.f32 0.0, %v879
      %v881 = vpop.f32.mrf.mxu0
      %v882 = vadd.f32 0.0, %v881
      %883 = vmatmul.bf16.gmra.mxu0 %v855
      %v884 = vpop.f32.mrf.mxu0
      %v885 = vadd.f32 0.0, %v884
      %v886 = vpop.f32.mrf.mxu0
      %v887 = vadd.f32 0.0, %v886
      %888 = vmatmul.bf16.gmra.mxu0 %v858
      %v889 = vpop.f32.mrf.mxu0
      %v890 = vadd.f32 0.0, %v889
      %v891 = vpop.f32.mrf.mxu0
      %892 = vdwg.mxu0
      %v893 = vadd.f32 %v739, %v870
      %v894 = vadd.f32 %v741, %v872
      %v895 = vadd.f32 %v744, %v875
      %v896 = vadd.f32 %v746, %v877
      %v897 = vadd.f32 %v749, %v880
      %v898 = vadd.f32 %v751, %v882
      %v899 = vadd.f32 %v754, %v885
      %v900 = vadd.f32 %v756, %v887
      %v901 = vadd.f32 %v759, %v890
      %v902 = vld [vmem:[%s226 + $0x4] sm:$0xe]
      %s903 = scalar_lea.vmem %s1, 24
      %v904 = vld [vmem:[%s903] sm:$0xf]
      %v905 = vld [vmem:[%s903 + $0x4] sm:$0xf]
      %v907 = vunpack.c.l.b16 %v902
      %v908 = vpack.c.b16 %v786, %v907
      %vm909 = vcmask 1046528
      %v910 = vrot.slane %v908, 1
      %v911 = vrot.slane %v796, 1
      %v912 = vsel %vm909, %v910, %v911
      %v913 = vrot.slane %v797, 1
      %v914 = vsel %vm909, %v911, %v913
      %v915 = vrot.slane %v798, 1
      %v916 = vsel %vm909, %v913, %v915
      %v917 = vrot.slane %v799, 1
      %v918 = vsel %vm909, %v915, %v917
      %v921 = vunpack.c.l.b16 %v904
      %v922 = vunpack.c.l.b16 %v905
      %v923 = vpack.c.b16 %v922, %v921
      %v926 = vsel %vm662, %v912, 0
      %v929 = vsel %vm662, %v914, 0
      %v932 = vsel %vm662, %v916, 0
      %v935 = vsel %vm662, %v918, 0
      %v938 = vsel %vm662, %v917, 0
      %940 = vmatpush.bf16.msra.mxu0 0
      %941 = vmatpush.bf16.msra.mxu0 0
      %942 = vmatpush.bf16.msra.mxu0 0
      %943 = vmatpush.bf16.msra.mxu0 0
      %944 = vmatpush.bf16.msra.mxu0 0
      %945 = vmatpush.bf16.msra.mxu0 0
      %946 = vmatpush.bf16.msra.mxu0 0
      %947 = vmatpush.bf16.msra.mxu0 %v923
      %948 = vmatmul.bf16.gmra.mxu0 %v926
      %v949 = vpop.f32.mrf.mxu0
      %v950 = vadd.f32 0.0, %v949
      %v951 = vpop.f32.mrf.mxu0
      %v952 = vadd.f32 0.0, %v951
      %953 = vmatmul.bf16.gmra.mxu0 %v929
      %v954 = vpop.f32.mrf.mxu0
      %v955 = vadd.f32 0.0, %v954
      %v956 = vpop.f32.mrf.mxu0
      %v957 = vadd.f32 0.0, %v956
      %958 = vmatmul.bf16.gmra.mxu0 %v932
      %v959 = vpop.f32.mrf.mxu0
      %v960 = vadd.f32 0.0, %v959
      %v961 = vpop.f32.mrf.mxu0
      %v962 = vadd.f32 0.0, %v961
      %963 = vmatmul.bf16.gmra.mxu0 %v935
      %v964 = vpop.f32.mrf.mxu0
      %v965 = vadd.f32 0.0, %v964
      %v966 = vpop.f32.mrf.mxu0
      %v967 = vadd.f32 0.0, %v966
      %968 = vmatmul.bf16.gmra.mxu0 %v938
      %v969 = vpop.f32.mrf.mxu0
      %v970 = vadd.f32 0.0, %v969
      %v971 = vpop.f32.mrf.mxu0
      %972 = vdwg.mxu0
      %v973 = vadd.f32 %v893, %v950
      %v974 = vadd.f32 %v894, %v952
      %v975 = vadd.f32 %v895, %v955
      %v976 = vadd.f32 %v896, %v957
      %v977 = vadd.f32 %v897, %v960
      %v978 = vadd.f32 %v898, %v962
      %v979 = vadd.f32 %v899, %v965
      %v980 = vadd.f32 %v900, %v967
      %v981 = vadd.f32 %v901, %v970
      %v982 = vsel %vm567, %v973, 0.0
      %v983 = vsel %vm568, %v974, 0.0
      %v984 = vsel %vm569, %v975, 0.0
      %v985 = vsel %vm570, %v976, 0.0
      %v986 = vsel %vm571, %v977, 0.0
      %v987 = vsel %vm572, %v978, 0.0
      %v988 = vsel %vm573, %v979, 0.0
      %v989 = vsel %vm574, %v980, 0.0
      %v990 = vsel %vm575, %v981, 0.0
      %v991 = vpack.c.bf16 %v982, %v982
      %v992 = vpack.c.bf16 %v983, %v983
      %v993 = vpack.c.bf16 %v984, %v984
      %v994 = vpack.c.bf16 %v985, %v985
      %v995 = vpack.c.bf16 %v986, %v986
      %v996 = vpack.c.bf16 %v987, %v987
      %v997 = vpack.c.bf16 %v988, %v988
      %v998 = vpack.c.bf16 %v989, %v989
      %v999 = vpack.c.bf16 %v990, %v990
      %vm1000 = vcmask 519168
      %1001 = vst.msk [vmem:[%s233] sm:$0xf] %vm1000, %v991
      %1002 = vst.msk [vmem:[%s233 + $0x4] sm:$0xf] %vm1000, %v992
      %1003 = vst.msk [vmem:[%s233 + $0x8] sm:$0xf] %vm1000, %v993
      %1004 = vst.msk [vmem:[%s233 + $0xc] sm:$0xf] %vm1000, %v994
      %1005 = vst.msk [vmem:[%s233 + $0x10] sm:$0xf] %vm1000, %v995
      %1006 = vst.msk [vmem:[%s233 + $0x14] sm:$0xf] %vm1000, %v996
      %1007 = vst.msk [vmem:[%s233 + $0x18] sm:$0xf] %vm1000, %v997
      %1008 = vst.msk [vmem:[%s233 + $0x1c] sm:$0xf] %vm1000, %v998
      %1009 = vst.msk [vmem:[%s233 + $0x20] sm:$0xf] %vm1000, %v999
      %vm1010 = vcmask 523264
      %v1011 = vsel %vm1010, %v982, 0.0
      %v1012 = vsel %vm1010, %v983, 0.0
      %v1013 = vadd.f32 %v1011, %v1012
      %v1014 = vsel %vm1010, %v984, 0.0
      %v1015 = vadd.f32 %v1013, %v1014
      %v1016 = vsel %vm1010, %v985, 0.0
      %v1017 = vadd.f32 %v1015, %v1016
      %v1018 = vsel %vm1010, %v986, 0.0
      %v1019 = vadd.f32 %v1017, %v1018
      %v1020 = vsel %vm1010, %v987, 0.0
      %v1021 = vadd.f32 %v1019, %v1020
      %v1022 = vsel %vm1010, %v988, 0.0
      %v1023 = vadd.f32 %v1021, %v1022
      %v1024 = vsel %vm1010, %v989, 0.0
      %v1025 = vadd.f32 %v1023, %v1024
      %v1026 = vsel %vm1010, %v990, 0.0
      %v1027 = vadd.f32 %v1025, %v1026
      %v1028 = vrot.slane %v1027, 4
      %v1029 = vadd.f32 %v1027, %v1028
      %v1030 = vrot.slane %v1029, 2
      %v1031 = vadd.f32 %v1029, %v1030
      %v1032 = vrot.slane %v1031, 1
      %v1033 = vadd.f32 %v1031, %v1032
      %v1034 = vadd.f32 %v1033, 0.0
      %v1035 = vmul.f32 %v982, %v982
      %v1036 = vmul.f32 %v983, %v983
      %v1037 = vmul.f32 %v984, %v984
      %v1038 = vmul.f32 %v985, %v985
      %v1039 = vmul.f32 %v986, %v986
      %v1040 = vmul.f32 %v987, %v987
      %v1041 = vmul.f32 %v988, %v988
      %v1042 = vmul.f32 %v989, %v989
      %v1043 = vmul.f32 %v990, %v990
      %v1044 = vsel %vm1010, %v1035, 0.0
      %v1045 = vsel %vm1010, %v1036, 0.0
      %v1046 = vadd.f32 %v1044, %v1045
      %v1047 = vsel %vm1010, %v1037, 0.0
      %v1048 = vadd.f32 %v1046, %v1047
      %v1049 = vsel %vm1010, %v1038, 0.0
      %v1050 = vadd.f32 %v1048, %v1049
      %v1051 = vsel %vm1010, %v1039, 0.0
      %v1052 = vadd.f32 %v1050, %v1051
      %v1053 = vsel %vm1010, %v1040, 0.0
      %v1054 = vadd.f32 %v1052, %v1053
      %v1055 = vsel %vm1010, %v1041, 0.0
      %v1056 = vadd.f32 %v1054, %v1055
      %v1057 = vsel %vm1010, %v1042, 0.0
      %v1058 = vadd.f32 %v1056, %v1057
      %v1059 = vsel %vm1010, %v1043, 0.0
      %v1060 = vadd.f32 %v1058, %v1059
      %v1061 = vrot.slane %v1060, 4
      %v1062 = vadd.f32 %v1060, %v1061
      %v1063 = vrot.slane %v1062, 2
      %v1064 = vadd.f32 %v1062, %v1063
      %v1065 = vrot.slane %v1064, 1
      %v1066 = vadd.f32 %v1064, %v1065
      %v1067 = vadd.f32 %v1066, 0.0
      %v1068 = vld [vmem:[%s238] sm:$0xff]
      %v1069 = vadd.f32 %v1068, %v1034
      %1070 = vst.msk [vmem:[%s238] sm:$0xff] %vm1010, %v1069
      %v1071 = vld [vmem:[%s242] sm:$0xff]
      %v1072 = vadd.f32 %v1071, %v1067
      %1073 = vst.msk [vmem:[%s242] sm:$0xff] %vm1010, %v1072
      %s1074 = sadd.s32 %s20, %s21
      %p1075 = scmp.lt.s32.totalorder %s1074, 1
      %s1076 = scalar_select %p1075, %s1074, 1
      %s1077 = smul.addr %s1076, 9
      %s1078 = smul.addr %s1077, 4
      %s1079 = scalar_lea.vmem %s2, %s1078
      %p1080 = scmp.lt.s32.totalorder %s20, 1
      %s1081 = scalar_select %p1080, %s20, 1
      %s1082 = smul.addr %s1081, 8
      %s1083 = scalar_lea.vmem %s3, %s1082
      %p1084 = scmp.lt.s32.totalorder %s20, 1
      %s1085 = scalar_select %p1084, %s20, 1
      %s1086 = smul.addr %s1085, 8
      %s1087 = scalar_lea.vmem %s4, %s1086
      // Predicated region
      $region33: #{shallow_cnn_forward.5} parent=27 // pred_check
        %p1088 = pneg %p97
      $region34: #{shallow_cnn_forward.5} parent=27 // pred_check_branch
        %1090 = sbr.rel (%p1088) target = $region36
      $region35: #{shallow_cnn_forward.5} parent=27 // pred_region
        %s1091 = sadd.s32 %s20, %s21
      $region36: #{shallow_cnn_forward.5} parent=27 // pred_fallthru
        _
      // Predicated region
      $region37: #{shallow_cnn_forward.5} parent=27 // pred_check
        %p1092 = pneg %p123
      $region38: #{shallow_cnn_forward.5} parent=27 // pred_check_branch
        %1094 = sbr.rel (%p1092) target = $region40
      $region39: #{shallow_cnn_forward.5} parent=27 // pred_region
        _
      $region40: #{shallow_cnn_forward.5} parent=27 // pred_fallthru
        _
      // Predicated region
      $region41: #{shallow_cnn_forward.5} parent=27 // pred_check
        %p1095 = pneg %p149
      $region42: #{shallow_cnn_forward.5} parent=27 // pred_check_branch
        %1097 = sbr.rel (%p1095) target = $region44
      $region43: #{shallow_cnn_forward.5} parent=27 // pred_region
        _
      $region44: #{shallow_cnn_forward.5} parent=27 // pred_fallthru
        _
    $region28: #{shallow_cnn_forward.5} parent=5 // pred_fallthru
      _
    %p1098 = scmp.le.s32.totalorder 2, %s11
    // Predicated region
    $region45: #{shallow_cnn_forward.5} parent=5 // pred_check
      %p1099 = pneg %p1098
    $region46: #{shallow_cnn_forward.5} parent=5 // pred_check_branch
      %1101 = sbr.rel (%p1099) target = $region48
    $region47: #{shallow_cnn_forward.5} parent=5 // pred_region
      %s1102 = ssub.s32 %s11, 2
      // Predicated region
      $region49: #{shallow_cnn_forward.5} parent=47 // pred_check
        %p1103 = pneg %p103
      $region50: #{shallow_cnn_forward.5} parent=47 // pred_check_branch
        %1105 = sbr.rel (%p1103) target = $region52
      $region51: #{shallow_cnn_forward.5} parent=47 // pred_region
        %s1106 = sadd.s32 %s22, %s23
        %p1107 = scmp.lt.s32.totalorder %s1106, 1
        %s1108 = scalar_select %p1107, %s1106, 1
        %s1109 = smul.addr %s1108, 9
        %s1110 = smul.addr %s1109, 4
        %s1111 = scalar_lea.vmem %s2, %s1110
      $region52: #{shallow_cnn_forward.5} parent=47 // pred_fallthru
        _
      // Predicated region
      $region53: #{shallow_cnn_forward.5} parent=47 // pred_check
        %p1112 = pneg %p129
      $region54: #{shallow_cnn_forward.5} parent=47 // pred_check_branch
        %1114 = sbr.rel (%p1112) target = $region56
      $region55: #{shallow_cnn_forward.5} parent=47 // pred_region
        %p1115 = scmp.lt.s32.totalorder %s22, 1
        %s1116 = scalar_select %p1115, %s22, 1
        %s1117 = smul.addr %s1116, 8
        %s1118 = scalar_lea.vmem %s3, %s1117
      $region56: #{shallow_cnn_forward.5} parent=47 // pred_fallthru
        _
      // Predicated region
      $region57: #{shallow_cnn_forward.5} parent=47 // pred_check
        %p1119 = pneg %p155
      $region58: #{shallow_cnn_forward.5} parent=47 // pred_check_branch
        %1121 = sbr.rel (%p1119) target = $region60
      $region59: #{shallow_cnn_forward.5} parent=47 // pred_region
        %p1122 = scmp.lt.s32.totalorder %s22, 1
        %s1123 = scalar_select %p1122, %s22, 1
        %s1124 = smul.addr %s1123, 8
        %s1125 = scalar_lea.vmem %s4, %s1124
      $region60: #{shallow_cnn_forward.5} parent=47 // pred_fallthru
        _
    $region48: #{shallow_cnn_forward.5} parent=5 // pred_fallthru
      _
  $region6: #{shallow_cnn_forward.5} parent=0 // loop_footer
    %s15 = sadd.s32 1, %s11
  $region7: #{shallow_cnn_forward.5} parent=0 // loop_footer_branch
    %10 = sbr.rel target = $region3
  $region8: #{shallow_cnn_forward.5} parent=0 // loop_exit
    _

// kernel: shallow_cnn_forward.8
$region0: #{shallow_cnn_forward.8}
  #allocation0 [shape = 'u32[]', space=smem, size = 0x4, offset = 0x4, fixed_abs, tag = 'smem constant byte address 0x4 - core index']
  #allocation1 [shape = 'u32[72,128]{1,0:T(1,128)}', space=vmem, size = 0x9000, scoped, tag = 'internal scratch']
  %s0 = inlined_call_operand.vmem [shape: bf16[40,128], index: 0, kind: input, shape index: {}]
  %s1 = inlined_call_operand.vmem [shape: f32[1,128], index: 1, kind: input, shape index: {}]
  %s2 = inlined_call_operand.vmem [shape: f32[1,128], index: 2, kind: input, shape index: {}]
  %s3 = inlined_call_operand.vmem [shape: bf16[40,128], index: 3, kind: output, shape index: {}]
  %s4 = sld [smem:[#allocation0]]
  $region22: #{shallow_cnn_forward.8} parent=0
    _
  %s6 = ssub.s32 1, %s4
  %s7 = scalar_select 0, %s6, %s4
  // Predicated region
  $region2: #{shallow_cnn_forward.8} parent=0 // pred_check
    _
  $region3: #{shallow_cnn_forward.8} parent=0 // pred_check_branch
    %9 = sbr.rel (0) target = $region5
  $region4: #{shallow_cnn_forward.8} parent=0 // pred_region
    _
  $region5: #{shallow_cnn_forward.8} parent=0 // pred_fallthru
    _
  // Predicated region
  $region6: #{shallow_cnn_forward.8} parent=0 // pred_check
    _
  $region7: #{shallow_cnn_forward.8} parent=0 // pred_check_branch
    %11 = sbr.rel (0) target = $region9
  $region8: #{shallow_cnn_forward.8} parent=0 // pred_region
    _
  $region9: #{shallow_cnn_forward.8} parent=0 // pred_fallthru
    _
  // Predicated region
  $region10: #{shallow_cnn_forward.8} parent=0 // pred_check
    _
  $region11: #{shallow_cnn_forward.8} parent=0 // pred_check_branch
    %13 = sbr.rel (0) target = $region13
  $region12: #{shallow_cnn_forward.8} parent=0 // pred_region
    _
  $region13: #{shallow_cnn_forward.8} parent=0 // pred_fallthru
    _
  %v14 = vld [vmem:[%s0] sm:$0xf]
  %v15 = vld [vmem:[%s0 + $0x4] sm:$0xf]
  %v16 = vld [vmem:[%s0 + $0x8] sm:$0xf]
  %v17 = vld [vmem:[%s0 + $0xc] sm:$0xf]
  %v18 = vld [vmem:[%s0 + $0x10] sm:$0xf]
  %v19 = vunpack.c.l.bf16 %v14
  %v20 = vunpack.c.l.bf16 %v15
  %v21 = vunpack.c.l.bf16 %v16
  %v22 = vunpack.c.l.bf16 %v17
  %v23 = vunpack.c.l.bf16 %v18
  %v24 = vld [vmem:[%s1] sm:$0x1]
  %v26 = vperm.slane %v24, 0
  %v28 = vmul.f32 %v19, %v26
  %v29 = vmul.f32 %v20, %v26
  %v30 = vmul.f32 %v21, %v26
  %v31 = vmul.f32 %v22, %v26
  %v32 = vmul.f32 %v23, %v26
  %v33 = vld [vmem:[%s2] sm:$0x1]
  %v35 = vperm.slane %v33, 0
  %v37 = vadd.f32 %v28, %v35
  %v38 = vadd.f32 %v29, %v35
  %v39 = vadd.f32 %v30, %v35
  %v40 = vadd.f32 %v31, %v35
  %v41 = vadd.f32 %v32, %v35
  %v42 = vmax.f32 %v37, 0.0
  %v43 = vmax.f32 %v38, 0.0
  %v44 = vmax.f32 %v39, 0.0
  %v45 = vmax.f32 %v40, 0.0
  %v46 = vmax.f32 %v41, 0.0
  %v47 = vpack.c.bf16 %v42, %v42
  %v48 = vpack.c.bf16 %v43, %v43
  %v49 = vpack.c.bf16 %v44, %v44
  %v50 = vpack.c.bf16 %v45, %v45
  %v51 = vpack.c.bf16 %v46, %v46
  %52 = vst [vmem:[%s3] sm:$0xf] %v47
  %53 = vst [vmem:[%s3 + $0x4] sm:$0xf] %v48
  %54 = vst [vmem:[%s3 + $0x8] sm:$0xf] %v49
  %55 = vst [vmem:[%s3 + $0xc] sm:$0xf] %v50
  %56 = vst [vmem:[%s3 + $0x10] sm:$0xf] %v51
  // Predicated region
  $region14: #{shallow_cnn_forward.8} parent=0 // pred_check
    _
  $region15: #{shallow_cnn_forward.8} parent=0 // pred_check_branch
    %58 = sbr.rel (0) target = $region17
  $region16: #{shallow_cnn_forward.8} parent=0 // pred_region
    _
  $region17: #{shallow_cnn_forward.8} parent=0 // pred_fallthru
    _
  // Predicated region
  $region18: #{shallow_cnn_forward.8} parent=0 // pred_check
    _
  $region19: #{shallow_cnn_forward.8} parent=0 // pred_check_branch
    %60 = sbr.rel (0) target = $region21
  $region20: #{shallow_cnn_forward.8} parent=0 // pred_region
    _
  $region21: #{shallow_cnn_forward.8} parent=0 // pred_fallthru
    _

// kernel: shallow_cnn_forward.7
$region0: #{shallow_cnn_forward.7}
  #allocation0 [shape = 'u32[]', space=smem, size = 0x4, offset = 0x4, fixed_abs, tag = 'smem constant byte address 0x4 - core index']
  #allocation1 [shape = 'u32[72,128]{1,0:T(1,128)}', space=vmem, size = 0x9000, scoped, tag = 'internal scratch']
  %s0 = inlined_call_operand.vmem [shape: bf16[2,32,256], index: 0, kind: input, shape index: {}]
  %s1 = inlined_call_operand.vmem [shape: bf16[4,256,128], index: 1, kind: input, shape index: {}]
  %s2 = inlined_call_operand.vmem [shape: bf16[2,20,128], index: 2, kind: output, shape index: {0}]
  %s3 = inlined_call_operand.vmem [shape: f32[2,8,128], index: 3, kind: output, shape index: {1}]
  %s4 = inlined_call_operand.vmem [shape: f32[2,8,128], index: 4, kind: output, shape index: {2}]
  %5 = xla_tuple %s2, %s3, %s4
  %s6 = sld [smem:[#allocation0]]
  $region61: #{shallow_cnn_forward.7} parent=0
    _
  %s8 = ssub.s32 1, %s6
  %s9 = scalar_select 0, %s8, %s6
  loop: start=0, step=1, limit=4
  $region2: #{shallow_cnn_forward.7} parent=0 // loop_pre_header
    _
  $region3: #{shallow_cnn_forward.7} parent=0 // loop_header
    %s11 = sphi 0, %s15
    %p12 = scmp.ge.s32.totalorder %s11, 4
    %s18 = sphi 0, %s30
    %s19 = sphi 0, %s26
    %s20 = sphi 0, %s18
    %s21 = sphi 0, %s19
    %s22 = sphi 0, %s20
    %s23 = sphi 0, %s21
    %s35 = sphi 0, %s37
    %s38 = sphi 0, %s35
    %s39 = sphi 0, %s38
    %s55 = sphi 0, %s39
    %s59 = sphi 0, %s59
    %s61 = sphi 0, %s59
    %s62 = sphi 0, %s61
    %s76 = sphi 0, %s62
    %s84 = sphi 0, %s86
    %s87 = sphi 0, %s84
    %s88 = sphi 0, %s87
    %s104 = sphi 0, %s88
    %s110 = sphi 0, %s112
    %s113 = sphi 0, %s110
    %s114 = sphi 0, %s113
    %s130 = sphi 0, %s114
    %s136 = sphi 0, %s138
    %s139 = sphi 0, %s136
    %s140 = sphi 0, %s139
    %s156 = sphi 0, %s140
  $region4: #{shallow_cnn_forward.7} parent=0 // loop_header_branch
    %14 = sbr.rel (%p12) target = $region8
  $region5: #{shallow_cnn_forward.7} parent=0 // loop_body
    %s16 = ssub.s32 %s11, 1
    %s17 = ssub.s32 %s11, 2
    %s24 = sadd.s32 1, %s19
    %p25 = scmp.ge.s32.totalorder %s24, 1
    %s26 = scalar_select %p25, 0, %s24
    %s27 = sadd.s32 1, %s18
    %s28 = scalar_select %p25, %s27, %s18
    %p29 = scmp.ge.s32.totalorder %s28, 2
    %s30 = scalar_select %p29, 0, %s28
    %s31 = sadd.s32 %s18, %s19
    %s32 = sadd.s32 %s30, %s26
    %s33 = ssub.s32 %s31, %s32
    %p34 = scmp.eq.s32.totalorder %s33, 0
    %s36 = sadd.s32 %s35, 1
    %s37 = scalar_select %p34, %s35, %s36
    %p40 = pneg %p34
    %p41 = scmp.eq.s32.totalorder %s11, 1
    %p42 = por %p40, %p41
    %p43 = scmp.ne.s32.totalorder %s35, %s38
    %p44 = scmp.eq.s32.totalorder %s11, 0
    %p45 = por %p43, %p44
    %p46 = scmp.ne.s32.totalorder %s35, %s38
    %p47 = scmp.eq.s32.totalorder %s16, 1
    %p48 = por %p46, %p47
    %p49 = scmp.ne.s32.totalorder %s38, %s39
    %p50 = scmp.eq.s32.totalorder %s16, 0
    %p51 = por %p49, %p50
    %p52 = scmp.ne.s32.totalorder %s38, %s39
    %p53 = scmp.eq.s32.totalorder %s17, 1
    %p54 = por %p52, %p53
    %p56 = scmp.ne.s32.totalorder %s39, %s55
    %p57 = scmp.eq.s32.totalorder %s17, 0
    %p58 = por %p56, %p57
    %s60 = sadd.s32 %s59, 1
    %p63 = scmp.eq.s32.totalorder %s11, 1
    %p64 = scmp.ne.s32.totalorder %s59, %s61
    %p65 = scmp.eq.s32.totalorder %s11, 0
    %p66 = por %p64, %p65
    %p67 = scmp.ne.s32.totalorder %s59, %s61
    %p68 = scmp.eq.s32.totalorder %s16, 1
    %p69 = por %p67, %p68
    %p70 = scmp.ne.s32.totalorder %s61, %s62
    %p71 = scmp.eq.s32.totalorder %s16, 0
    %p72 = por %p70, %p71
    %p73 = scmp.ne.s32.totalorder %s61, %s62
    %p74 = scmp.eq.s32.totalorder %s17, 1
    %p75 = por %p73, %p74
    %p77 = scmp.ne.s32.totalorder %s62, %s76
    %p78 = scmp.eq.s32.totalorder %s17, 0
    %p79 = por %p77, %p78
    %s80 = sadd.s32 %s18, %s19
    %s81 = sadd.s32 %s30, %s26
    %s82 = ssub.s32 %s80, %s81
    %p83 = scmp.eq.s32.totalorder %s82, 0
    %s85 = sadd.s32 %s84, 1
    %s86 = scalar_select %p83, %s84, %s85
    %p89 = pneg %p83
    %p90 = scmp.eq.s32.totalorder %s11, 1
    %p91 = por %p89, %p90
    %p92 = scmp.ne.s32.totalorder %s84, %s87
    %p93 = scmp.eq.s32.totalorder %s11, 0
    %p94 = por %p92, %p93
    %p95 = scmp.ne.s32.totalorder %s84, %s87
    %p96 = scmp.eq.s32.totalorder %s16, 1
    %p97 = por %p95, %p96
    %p98 = scmp.ne.s32.totalorder %s87, %s88
    %p99 = scmp.eq.s32.totalorder %s16, 0
    %p100 = por %p98, %p99
    %p101 = scmp.ne.s32.totalorder %s87, %s88
    %p102 = scmp.eq.s32.totalorder %s17, 1
    %p103 = por %p101, %p102
    %p105 = scmp.ne.s32.totalorder %s88, %s104
    %p106 = scmp.eq.s32.totalorder %s17, 0
    %p107 = por %p105, %p106
    %s108 = ssub.s32 %s18, %s30
    %p109 = scmp.eq.s32.totalorder %s108, 0
    %s111 = sadd.s32 %s110, 1
    %s112 = scalar_select %p109, %s110, %s111
    %p115 = pneg %p109
    %p116 = scmp.eq.s32.totalorder %s11, 1
    %p117 = por %p115, %p116
    %p118 = scmp.ne.s32.totalorder %s110, %s113
    %p119 = scmp.eq.s32.totalorder %s11, 0
    %p120 = por %p118, %p119
    %p121 = scmp.ne.s32.totalorder %s110, %s113
    %p122 = scmp.eq.s32.totalorder %s16, 1
    %p123 = por %p121, %p122
    %p124 = scmp.ne.s32.totalorder %s113, %s114
    %p125 = scmp.eq.s32.totalorder %s16, 0
    %p126 = por %p124, %p125
    %p127 = scmp.ne.s32.totalorder %s113, %s114
    %p128 = scmp.eq.s32.totalorder %s17, 1
    %p129 = por %p127, %p128
    %p131 = scmp.ne.s32.totalorder %s114, %s130
    %p132 = scmp.eq.s32.totalorder %s17, 0
    %p133 = por %p131, %p132
    %s134 = ssub.s32 %s18, %s30
    %p135 = scmp.eq.s32.totalorder %s134, 0
    %s137 = sadd.s32 %s136, 1
    %s138 = scalar_select %p135, %s136, %s137
    %p141 = pneg %p135
    %p142 = scmp.eq.s32.totalorder %s11, 1
    %p143 = por %p141, %p142
    %p144 = scmp.ne.s32.totalorder %s136, %s139
    %p145 = scmp.eq.s32.totalorder %s11, 0
    %p146 = por %p144, %p145
    %p147 = scmp.ne.s32.totalorder %s136, %s139
    %p148 = scmp.eq.s32.totalorder %s16, 1
    %p149 = por %p147, %p148
    %p150 = scmp.ne.s32.totalorder %s139, %s140
    %p151 = scmp.eq.s32.totalorder %s16, 0
    %p152 = por %p150, %p151
    %p153 = scmp.ne.s32.totalorder %s139, %s140
    %p154 = scmp.eq.s32.totalorder %s17, 1
    %p155 = por %p153, %p154
    %p157 = scmp.ne.s32.totalorder %s140, %s156
    %p158 = scmp.eq.s32.totalorder %s17, 0
    %p159 = por %p157, %p158
    %p160 = scmp.le.s32.totalorder 1, %s11
    %p161 = scmp.lt.s32.totalorder %s11, 3
    %p162 = pnand %p160, %p161
    %p163 = pneg %p162
    // Predicated region
    $region9: #{shallow_cnn_forward.7} parent=5 // pred_check
      _
    $region10: #{shallow_cnn_forward.7} parent=5 // pred_check_branch
      %165 = sbr.rel (%p162) target = $region12
    $region11: #{shallow_cnn_forward.7} parent=5 // pred_region
      %s166 = ssub.s32 %s11, 1
      // Predicated region
      $region13: #{shallow_cnn_forward.7} parent=11 // pred_check
        %p167 = pneg %p72
      $region14: #{shallow_cnn_forward.7} parent=11 // pred_check_branch
        %169 = sbr.rel (%p167) target = $region16
      $region15: #{shallow_cnn_forward.7} parent=11 // pred_region
        _
      $region16: #{shallow_cnn_forward.7} parent=11 // pred_fallthru
        _
    $region12: #{shallow_cnn_forward.7} parent=5 // pred_fallthru
      _
    %p170 = scmp.lt.s32.totalorder %s11, 2
    // Predicated region
    $region17: #{shallow_cnn_forward.7} parent=5 // pred_check
      %p171 = pneg %p170
    $region18: #{shallow_cnn_forward.7} parent=5 // pred_check_branch
      %173 = sbr.rel (%p171) target = $region20
    $region19: #{shallow_cnn_forward.7} parent=5 // pred_region
      // Predicated region
      $region21: #{shallow_cnn_forward.7} parent=19 // pred_check
        %p174 = pneg %p45
      $region22: #{shallow_cnn_forward.7} parent=19 // pred_check_branch
        %176 = sbr.rel (%p174) target = $region24
      $region23: #{shallow_cnn_forward.7} parent=19 // pred_region
        %s177 = sadd.s32 %s18, %s19
        %p178 = scmp.lt.s32.totalorder %s177, 1
        %s179 = scalar_select %p178, %s177, 1
        %s180 = smul.addr %s179, 8
        %s181 = smul.addr %s180, 4
        %s182 = scalar_lea.vmem %s0, %s181
        %s183 = sadd.s32 %s18, %s19
      $region24: #{shallow_cnn_forward.7} parent=19 // pred_fallthru
        _
    $region20: #{shallow_cnn_forward.7} parent=5 // pred_fallthru
      _
    %p184 = scmp.le.s32.totalorder 1, %s11
    %p185 = scmp.lt.s32.totalorder %s11, 3
    %p186 = pnand %p184, %p185
    %p187 = pneg %p186
    // Predicated region
    $region25: #{shallow_cnn_forward.7} parent=5 // pred_check
      _
    $region26: #{shallow_cnn_forward.7} parent=5 // pred_check_branch
      %189 = sbr.rel (%p186) target = $region28
    $region27: #{shallow_cnn_forward.7} parent=5 // pred_region
      %s190 = ssub.s32 %s11, 1
      %s191 = sadd.s32 %s20, %s21
      %p192 = scmp.lt.s32.totalorder %s191, 1
      %s193 = scalar_select %p192, %s191, 1
      %s194 = smul.addr %s193, 8
      %s195 = smul.addr %s194, 4
      %s196 = scalar_lea.vmem %s0, %s195
      %p197 = pneg %p51
      %p198 = pneg %p48
      %p199 = pneg %p72
      %p200 = pneg %p69
      %p201 = pneg %p100
      %p202 = pneg %p97
      %s203 = sadd.s32 %s20, %s21
      %p204 = scmp.lt.s32.totalorder %s203, 1
      %s205 = scalar_select %p204, %s203, 1
      %s206 = smul.addr %s205, 3
      %s207 = smul.addr %s206, 4
      %s208 = scalar_lea.vmem %s2, %s207
      %p209 = pneg %p126
      %p210 = pneg %p123
      %p211 = scmp.lt.s32.totalorder %s20, 1
      %s212 = scalar_select %p211, %s20, 1
      %s213 = smul.addr %s212, 8
      %s214 = scalar_lea.vmem %s3, %s213
      %p215 = pneg %p152
      %p216 = pneg %p149
      %p217 = scmp.lt.s32.totalorder %s20, 1
      %s218 = scalar_select %p217, %s20, 1
      %s219 = smul.addr %s218, 8
      %s220 = scalar_lea.vmem %s4, %s219
      %s221 = sadd.s32 %s20, %s21
      %p222 = scmp.lt.s32.totalorder %s221, 1
      %s223 = scalar_select %p222, %s221, 1
      %s224 = smul.addr %s223, 8
      %s225 = smul.addr %s224, 4
      %s226 = scalar_lea.vmem %s0, %s225
      %s227 = sadd.s32 %s20, %s21
      %s228 = sadd.s32 %s20, %s21
      %p229 = scmp.lt.s32.totalorder %s228, 1
      %s230 = scalar_select %p229, %s228, 1
      %s231 = smul.addr %s230, 3
      %s232 = smul.addr %s231, 4
      %s233 = scalar_lea.vmem %s2, %s232
      %s234 = sadd.s32 %s20, %s21
      %p235 = scmp.lt.s32.totalorder %s20, 1
      %s236 = scalar_select %p235, %s20, 1
      %s237 = smul.addr %s236, 8
      %s238 = scalar_lea.vmem %s3, %s237
      %p239 = scmp.lt.s32.totalorder %s20, 1
      %s240 = scalar_select %p239, %s20, 1
      %s241 = smul.addr %s240, 8
      %s242 = scalar_lea.vmem %s4, %s241
      %p243 = scmp.eq.s32.totalorder %s21, 0
      // Predicated region
      $region29: #{shallow_cnn_forward.7} parent=27 // pred_check
        %p244 = pneg %p243
      $region30: #{shallow_cnn_forward.7} parent=27 // pred_check_branch
        %246 = sbr.rel (%p244) target = $region32
      $region31: #{shallow_cnn_forward.7} parent=27 // pred_region
        %247 = vst [vmem:[%s238] sm:$0xff] 0.0
        %248 = vst [vmem:[%s242] sm:$0xff] 0.0
      $region32: #{shallow_cnn_forward.7} parent=27 // pred_fallthru
        _
      %v249 = vlaneseq
      %v250 = vshrl.u32 %v249, 7
      %v251 = vadd.s32 %v250, 8
      %v252 = vadd.s32 %v250, 16
      %vm253 = vcmp.lt.s32.totalorder %v250, 0
      %v254 = vsub.s32 0, %v250
      %v255 = vsel %vm253, %v254, %v250
      %v256 = vand.u32 %v255, 65535
      %v257 = vshrl.u32 %v255, 16
      %v259 = vmul.u32 %v256, 52429
      %v260 = vmul.u32 %v256, 52428
      %v261 = vmul.u32 %v257, 52429
      %v262 = vmul.u32 %v257, 52428
      %v263 = vshll.u32 %v260, 16
      %v264 = vshrl.u32 %v260, 16
      %v265 = vshll.u32 %v261, 16
      %v266 = vshrl.u32 %v261, 16
      %vm267 = vc.u32 %v259, %v263
      %v268 = vsel %vm267, 1, 0
      %v269 = vadd.s32 %v259, %v263
      %v270 = vadd.s32 %v262, %v268
      %vm271 = vc.u32 %v269, %v265
      %v272 = vsel %vm271, 1, 0
      %v273 = vadd.s32 %v269, %v265
      %v274 = vadd.s32 %v270, %v272
      %v275 = vadd.s32 %v274, %v264
      %v276 = vadd.s32 %v275, %v266
      %v277 = vshrl.u32 %v276, 2
      %v278 = vmul.u32 %v277, 5
      %v279 = vsub.s32 %v255, %v278
      %v280 = vsub.s32 0, %v279
      %v281 = vsel %vm253, %v280, %v279
      %vm282 = vcmp.lt.s32.totalorder %v251, 0
      %v283 = vsub.s32 0, %v251
      %v284 = vsel %vm282, %v283, %v251
      %v285 = vand.u32 %v284, 65535
      %v286 = vshrl.u32 %v284, 16
      %v288 = vmul.u32 %v285, 52429
      %v289 = vmul.u32 %v285, 52428
      %v290 = vmul.u32 %v286, 52429
      %v291 = vmul.u32 %v286, 52428
      %v292 = vshll.u32 %v289, 16
      %v293 = vshrl.u32 %v289, 16
      %v294 = vshll.u32 %v290, 16
      %v295 = vshrl.u32 %v290, 16
      %vm296 = vc.u32 %v288, %v292
      %v297 = vsel %vm296, 1, 0
      %v298 = vadd.s32 %v288, %v292
      %v299 = vadd.s32 %v291, %v297
      %vm300 = vc.u32 %v298, %v294
      %v301 = vsel %vm300, 1, 0
      %v302 = vadd.s32 %v298, %v294
      %v303 = vadd.s32 %v299, %v301
      %v304 = vadd.s32 %v303, %v293
      %v305 = vadd.s32 %v304, %v295
      %v306 = vshrl.u32 %v305, 2
      %v307 = vmul.u32 %v306, 5
      %v308 = vsub.s32 %v284, %v307
      %v309 = vsub.s32 0, %v308
      %v310 = vsel %vm282, %v309, %v308
      %vm311 = vcmp.lt.s32.totalorder %v252, 0
      %v312 = vsub.s32 0, %v252
      %v313 = vsel %vm311, %v312, %v252
      %v314 = vand.u32 %v313, 65535
      %v315 = vshrl.u32 %v313, 16
      %v317 = vmul.u32 %v314, 52429
      %v318 = vmul.u32 %v314, 52428
      %v319 = vmul.u32 %v315, 52429
      %v320 = vmul.u32 %v315, 52428
      %v321 = vshll.u32 %v318, 16
      %v322 = vshrl.u32 %v318, 16
      %v323 = vshll.u32 %v319, 16
      %v324 = vshrl.u32 %v319, 16
      %vm325 = vc.u32 %v317, %v321
      %v326 = vsel %vm325, 1, 0
      %v327 = vadd.s32 %v317, %v321
      %v328 = vadd.s32 %v320, %v326
      %vm329 = vc.u32 %v327, %v323
      %v330 = vsel %vm329, 1, 0
      %v331 = vadd.s32 %v327, %v323
      %v332 = vadd.s32 %v328, %v330
      %v333 = vadd.s32 %v332, %v322
      %v334 = vadd.s32 %v333, %v324
      %v335 = vshrl.u32 %v334, 2
      %v336 = vmul.u32 %v335, 5
      %v337 = vsub.s32 %v313, %v336
      %v338 = vsub.s32 0, %v337
      %v339 = vsel %vm311, %v338, %v337
      %vm340 = vcmp.ne.s32.totalorder %v281, 0
      %vm341 = vcmp.ne.s32.totalorder %v310, 0
      %vm342 = vcmp.ne.s32.totalorder %v339, 0
      %vm343 = vcmp.lt.s32.totalorder %v281, 0
      %vm344 = vcmp.lt.s32.totalorder %v310, 0
      %vm345 = vcmp.lt.s32.totalorder %v339, 0
      %vm346 = vmand %vm343, %vm340
      %vm347 = vmand %vm344, %vm341
      %vm348 = vmand %vm345, %vm342
      %v349 = vadd.s32 %v281, 5
      %v350 = vadd.s32 %v310, 5
      %v351 = vadd.s32 %v339, 5
      %v352 = vsel %vm346, %v349, %v281
      %v353 = vsel %vm347, %v350, %v310
      %v354 = vsel %vm348, %v351, %v339
      %vm355 = vcmp.ne.s32.totalorder %v352, 4
      %vm356 = vcmp.ne.s32.totalorder %v353, 4
      %vm357 = vcmp.ne.s32.totalorder %v354, 4
      %v358 = vld [vmem:[%s226] sm:$0xff]
      %v359 = vld [vmem:[%s226 + $0x8] sm:$0xff]
      %v360 = vld [vmem:[%s226 + $0x10] sm:$0x33]
      %v361 = vld [vmem:[%s1] sm:$0xf]
      %v362 = vld [vmem:[%s1 + $0x4] sm:$0xf]
      %v363 = vld [vmem:[%s1 + $0x8] sm:$0xf]
      %v364 = vld [vmem:[%s1 + $0xc] sm:$0xf]
      %v365 = vld [vmem:[%s1 + $0x10] sm:$0xf]
      %v366 = vld [vmem:[%s1 + $0x14] sm:$0xf]
      %v367 = vld [vmem:[%s1 + $0x18] sm:$0xf]
      %v368 = vld [vmem:[%s1 + $0x1c] sm:$0xf]
      %v369 = vld [vmem:[%s1 + $0x20] sm:$0xf]
      %v370 = vld [vmem:[%s1 + $0x24] sm:$0xf]
      %v371 = vld [vmem:[%s1 + $0x28] sm:$0xf]
      %v372 = vld [vmem:[%s1 + $0x2c] sm:$0xf]
      %v373 = vld [vmem:[%s1 + $0x30] sm:$0xf]
      %v374 = vld [vmem:[%s1 + $0x34] sm:$0xf]
      %v375 = vld [vmem:[%s1 + $0x38] sm:$0xf]
      %v376 = vld [vmem:[%s1 + $0x3c] sm:$0xf]
      %v377 = vld [vmem:[%s1 + $0x40] sm:$0xf]
      %v378 = vld [vmem:[%s1 + $0x44] sm:$0xf]
      %v379 = vld [vmem:[%s1 + $0x48] sm:$0xf]
      %v380 = vld [vmem:[%s1 + $0x4c] sm:$0xf]
      %v381 = vld [vmem:[%s1 + $0x50] sm:$0xf]
      %v382 = vld [vmem:[%s1 + $0x54] sm:$0xf]
      %v383 = vld [vmem:[%s1 + $0x58] sm:$0xf]
      %v384 = vld [vmem:[%s1 + $0x5c] sm:$0xf]
      %v385 = vld [vmem:[%s1 + $0x60] sm:$0xf]
      %v386 = vld [vmem:[%s1 + $0x64] sm:$0xf]
      %v387 = vld [vmem:[%s1 + $0x68] sm:$0xf]
      %v388 = vld [vmem:[%s1 + $0x6c] sm:$0xf]
      %v389 = vld [vmem:[%s1 + $0x70] sm:$0xf]
      %v390 = vld [vmem:[%s1 + $0x74] sm:$0xf]
      %v391 = vld [vmem:[%s1 + $0x78] sm:$0xf]
      %v392 = vld [vmem:[%s1 + $0x7c] sm:$0xf]
      %v393 = vld [vmem:[%s226 + $0x10] sm:$0x77]
      %s394 = scalar_lea.vmem %s1, 128
      %v395 = vld [vmem:[%s394] sm:$0xf]
      %v396 = vld [vmem:[%s394 + $0x4] sm:$0xf]
      %v397 = vld [vmem:[%s394 + $0x8] sm:$0xf]
      %v398 = vld [vmem:[%s394 + $0xc] sm:$0xf]
      %v399 = vld [vmem:[%s394 + $0x10] sm:$0xf]
      %v400 = vld [vmem:[%s394 + $0x14] sm:$0xf]
      %v401 = vld [vmem:[%s394 + $0x18] sm:$0xf]
      %v402 = vld [vmem:[%s394 + $0x1c] sm:$0xf]
      %v403 = vld [vmem:[%s394 + $0x20] sm:$0xf]
      %v404 = vld [vmem:[%s394 + $0x24] sm:$0xf]
      %v405 = vld [vmem:[%s394 + $0x28] sm:$0xf]
      %v406 = vld [vmem:[%s394 + $0x2c] sm:$0xf]
      %v407 = vld [vmem:[%s394 + $0x30] sm:$0xf]
      %v408 = vld [vmem:[%s394 + $0x34] sm:$0xf]
      %v409 = vld [vmem:[%s394 + $0x38] sm:$0xf]
      %v410 = vld [vmem:[%s394 + $0x3c] sm:$0xf]
      %v411 = vld [vmem:[%s394 + $0x40] sm:$0xf]
      %v412 = vld [vmem:[%s394 + $0x44] sm:$0xf]
      %v413 = vld [vmem:[%s394 + $0x48] sm:$0xf]
      %v414 = vld [vmem:[%s394 + $0x4c] sm:$0xf]
      %v415 = vld [vmem:[%s394 + $0x50] sm:$0xf]
      %v416 = vld [vmem:[%s394 + $0x54] sm:$0xf]
      %v417 = vld [vmem:[%s394 + $0x58] sm:$0xf]
      %v418 = vld [vmem:[%s394 + $0x5c] sm:$0xf]
      %v419 = vld [vmem:[%s394 + $0x60] sm:$0xf]
      %v420 = vld [vmem:[%s394 + $0x64] sm:$0xf]
      %v421 = vld [vmem:[%s394 + $0x68] sm:$0xf]
      %v422 = vld [vmem:[%s394 + $0x6c] sm:$0xf]
      %v423 = vld [vmem:[%s394 + $0x70] sm:$0xf]
      %v424 = vld [vmem:[%s394 + $0x74] sm:$0xf]
      %v425 = vld [vmem:[%s394 + $0x78] sm:$0xf]
      %v426 = vld [vmem:[%s394 + $0x7c] sm:$0xf]
      %v430 = vunpack.c.l.b16 %v358
      %v431 = vunpack.c.h.b16 %v358
      %v432 = vunpack.c.l.b16 %v359
      %v433 = vunpack.c.h.b16 %v359
      %v434 = vunpack.c.l.b16 %v393
      %v435 = vunpack.c.h.b16 %v393
      %v436 = vpack.c.b16 %v432, %v430
      %v437 = vpack.c.b16 %v433, %v431
      %v438 = vpack.c.b16 %v434, %v434
      %v439 = vpack.c.b16 %v435, %v435
      %vm440 = vsmask.f32 7424
      %v442 = vshrl.u32 %v436, 16
      %v444 = vshll.u32 %v436, 16
      %v446 = vrot.slane %v444, 1
      %v447 = vor.u32 %v442, %v446
      %v449 = vshll.u32 %v438, 16
      %v451 = vrot.slane %v449, 1
      %v452 = vsel %vm440, %v447, %v451
      %v454 = vshrl.u32 %v437, 16
      %v456 = vshll.u32 %v437, 16
      %v458 = vrot.slane %v456, 1
      %v459 = vor.u32 %v454, %v458
      %v461 = vshll.u32 %v439, 16
      %v463 = vrot.slane %v461, 1
      %v464 = vsel %vm440, %v459, %v463
      %v465 = vshrl.u32 %v438, 16
      %v467 = vor.u32 %v465, %v451
      %v468 = vshrl.u32 %v439, 16
      %v470 = vor.u32 %v468, %v463
      %v507 = vunpack.c.l.b16 %v395
      %v508 = vunpack.c.l.b16 %v396
      %v509 = vunpack.c.l.b16 %v397
      %v510 = vunpack.c.l.b16 %v398
      %v511 = vunpack.c.l.b16 %v399
      %v512 = vunpack.c.l.b16 %v400
      %v513 = vunpack.c.l.b16 %v401
      %v514 = vunpack.c.l.b16 %v402
      %v515 = vunpack.c.l.b16 %v403
      %v516 = vunpack.c.l.b16 %v404
      %v517 = vunpack.c.l.b16 %v405
      %v518 = vunpack.c.l.b16 %v406
      %v519 = vunpack.c.l.b16 %v407
      %v520 = vunpack.c.l.b16 %v408
      %v521 = vunpack.c.l.b16 %v409
      %v522 = vunpack.c.l.b16 %v410
      %v523 = vunpack.c.l.b16 %v411
      %v524 = vunpack.c.l.b16 %v412
      %v525 = vunpack.c.l.b16 %v413
      %v526 = vunpack.c.l.b16 %v414
      %v527 = vunpack.c.l.b16 %v415
      %v528 = vunpack.c.l.b16 %v416
      %v529 = vunpack.c.l.b16 %v417
      %v530 = vunpack.c.l.b16 %v418
      %v531 = vunpack.c.l.b16 %v419
      %v532 = vunpack.c.l.b16 %v420
      %v533 = vunpack.c.l.b16 %v421
      %v534 = vunpack.c.l.b16 %v422
      %v535 = vunpack.c.l.b16 %v423
      %v536 = vunpack.c.l.b16 %v424
      %v537 = vunpack.c.l.b16 %v425
      %v538 = vunpack.c.l.b16 %v426
      %v539 = vpack.c.b16 %v508, %v507
      %v540 = vpack.c.b16 %v510, %v509
      %v541 = vpack.c.b16 %v512, %v511
      %v542 = vpack.c.b16 %v514, %v513
      %v543 = vpack.c.b16 %v516, %v515
      %v544 = vpack.c.b16 %v518, %v517
      %v545 = vpack.c.b16 %v520, %v519
      %v546 = vpack.c.b16 %v522, %v521
      %v547 = vpack.c.b16 %v524, %v523
      %v548 = vpack.c.b16 %v526, %v525
      %v549 = vpack.c.b16 %v528, %v527
      %v550 = vpack.c.b16 %v530, %v529
      %v551 = vpack.c.b16 %v532, %v531
      %v552 = vpack.c.b16 %v534, %v533
      %v553 = vpack.c.b16 %v536, %v535
      %v554 = vpack.c.b16 %v538, %v537
      %571 = vmatpush.bf16.msra.mxu0 %v546
      %572 = vmatpush.bf16.msra.mxu0 %v545
      %573 = vmatpush.bf16.msra.mxu0 %v544
      %574 = vmatpush.bf16.msra.mxu0 %v543
      %575 = vmatpush.bf16.msra.mxu0 %v542
      %576 = vmatpush.bf16.msra.mxu0 %v541
      %577 = vmatpush.bf16.msra.mxu0 %v540
      %578 = vmatpush.bf16.msra.mxu0 %v539
      %579 = vmatmul.bf16.gmra.mxu0 %v452
      %v580 = vpop.f32.mrf.mxu0
      %v581 = vadd.f32 0.0, %v580
      %v582 = vpop.f32.mrf.mxu0
      %v583 = vadd.f32 0.0, %v582
      %584 = vmatmul.bf16.gmra.mxu0 %v467
      %v585 = vpop.f32.mrf.mxu0
      %v586 = vadd.f32 0.0, %v585
      %v587 = vpop.f32.mrf.mxu0
      %588 = vdwg.mxu0
      %589 = vmatpush.bf16.msra.mxu0 %v554
      %590 = vmatpush.bf16.msra.mxu0 %v553
      %591 = vmatpush.bf16.msra.mxu0 %v552
      %592 = vmatpush.bf16.msra.mxu0 %v551
      %593 = vmatpush.bf16.msra.mxu0 %v550
      %594 = vmatpush.bf16.msra.mxu0 %v549
      %595 = vmatpush.bf16.msra.mxu0 %v548
      %596 = vmatpush.bf16.msra.mxu0 %v547
      %597 = vmatmul.bf16.gmra.mxu0 %v464
      %v598 = vpop.f32.mrf.mxu0
      %v599 = vadd.f32 %v581, %v598
      %v600 = vpop.f32.mrf.mxu0
      %v601 = vadd.f32 %v583, %v600
      %602 = vmatmul.bf16.gmra.mxu0 %v470
      %v603 = vpop.f32.mrf.mxu0
      %v604 = vadd.f32 %v586, %v603
      %v605 = vpop.f32.mrf.mxu0
      %606 = vdwg.mxu0
      %v608 = vunpack.c.l.b16 %v360
      %v609 = vunpack.c.h.b16 %v360
      %v610 = vpack.c.b16 %v608, %v608
      %v611 = vpack.c.b16 %v609, %v609
      %v648 = vunpack.c.l.b16 %v361
      %v649 = vunpack.c.l.b16 %v362
      %v650 = vunpack.c.l.b16 %v363
      %v651 = vunpack.c.l.b16 %v364
      %v652 = vunpack.c.l.b16 %v365
      %v653 = vunpack.c.l.b16 %v366
      %v654 = vunpack.c.l.b16 %v367
      %v655 = vunpack.c.l.b16 %v368
      %v656 = vunpack.c.l.b16 %v369
      %v657 = vunpack.c.l.b16 %v370
      %v658 = vunpack.c.l.b16 %v371
      %v659 = vunpack.c.l.b16 %v372
      %v660 = vunpack.c.l.b16 %v373
      %v661 = vunpack.c.l.b16 %v374
      %v662 = vunpack.c.l.b16 %v375
      %v663 = vunpack.c.l.b16 %v376
      %v664 = vunpack.c.l.b16 %v377
      %v665 = vunpack.c.l.b16 %v378
      %v666 = vunpack.c.l.b16 %v379
      %v667 = vunpack.c.l.b16 %v380
      %v668 = vunpack.c.l.b16 %v381
      %v669 = vunpack.c.l.b16 %v382
      %v670 = vunpack.c.l.b16 %v383
      %v671 = vunpack.c.l.b16 %v384
      %v672 = vunpack.c.l.b16 %v385
      %v673 = vunpack.c.l.b16 %v386
      %v674 = vunpack.c.l.b16 %v387
      %v675 = vunpack.c.l.b16 %v388
      %v676 = vunpack.c.l.b16 %v389
      %v677 = vunpack.c.l.b16 %v390
      %v678 = vunpack.c.l.b16 %v391
      %v679 = vunpack.c.l.b16 %v392
      %v680 = vpack.c.b16 %v649, %v648
      %v681 = vpack.c.b16 %v651, %v650
      %v682 = vpack.c.b16 %v653, %v652
      %v683 = vpack.c.b16 %v655, %v654
      %v684 = vpack.c.b16 %v657, %v656
      %v685 = vpack.c.b16 %v659, %v658
      %v686 = vpack.c.b16 %v661, %v660
      %v687 = vpack.c.b16 %v663, %v662
      %v688 = vpack.c.b16 %v665, %v664
      %v689 = vpack.c.b16 %v667, %v666
      %v690 = vpack.c.b16 %v669, %v668
      %v691 = vpack.c.b16 %v671, %v670
      %v692 = vpack.c.b16 %v673, %v672
      %v693 = vpack.c.b16 %v675, %v674
      %v694 = vpack.c.b16 %v677, %v676
      %v695 = vpack.c.b16 %v679, %v678
      %712 = vmatpush.bf16.msra.mxu0 %v687
      %713 = vmatpush.bf16.msra.mxu0 %v686
      %714 = vmatpush.bf16.msra.mxu0 %v685
      %715 = vmatpush.bf16.msra.mxu0 %v684
      %716 = vmatpush.bf16.msra.mxu0 %v683
      %717 = vmatpush.bf16.msra.mxu0 %v682
      %718 = vmatpush.bf16.msra.mxu0 %v681
      %719 = vmatpush.bf16.msra.mxu0 %v680
      %720 = vmatmul.bf16.gmra.mxu0 %v436
      %v721 = vpop.f32.mrf.mxu0
      %v722 = vadd.f32 %v599, %v721
      %v723 = vpop.f32.mrf.mxu0
      %v724 = vadd.f32 %v601, %v723
      %725 = vmatmul.bf16.gmra.mxu0 %v610
      %v726 = vpop.f32.mrf.mxu0
      %v727 = vadd.f32 %v604, %v726
      %v728 = vpop.f32.mrf.mxu0
      %729 = vdwg.mxu0
      %730 = vmatpush.bf16.msra.mxu0 %v695
      %731 = vmatpush.bf16.msra.mxu0 %v694
      %732 = vmatpush.bf16.msra.mxu0 %v693
      %733 = vmatpush.bf16.msra.mxu0 %v692
      %734 = vmatpush.bf16.msra.mxu0 %v691
      %735 = vmatpush.bf16.msra.mxu0 %v690
      %736 = vmatpush.bf16.msra.mxu0 %v689
      %737 = vmatpush.bf16.msra.mxu0 %v688
      %738 = vmatmul.bf16.gmra.mxu0 %v437
      %v739 = vpop.f32.mrf.mxu0
      %v740 = vadd.f32 %v722, %v739
      %v741 = vpop.f32.mrf.mxu0
      %v742 = vadd.f32 %v724, %v741
      %743 = vmatmul.bf16.gmra.mxu0 %v611
      %v744 = vpop.f32.mrf.mxu0
      %v745 = vadd.f32 %v727, %v744
      %v746 = vpop.f32.mrf.mxu0
      %747 = vdwg.mxu0
      %v748 = vld [vmem:[%s226] sm:$0xcc]
      %v749 = vld [vmem:[%s226 + $0x8] sm:$0xff]
      %v750 = vld [vmem:[%s226 + $0x10] sm:$0xff]
      %v751 = vld [vmem:[%s226 + $0x18] sm:$0x11]
      %s752 = scalar_lea.vmem %s1, 256
      %v753 = vld [vmem:[%s752] sm:$0xf]
      %v754 = vld [vmem:[%s752 + $0x4] sm:$0xf]
      %v755 = vld [vmem:[%s752 + $0x8] sm:$0xf]
      %v756 = vld [vmem:[%s752 + $0xc] sm:$0xf]
      %v757 = vld [vmem:[%s752 + $0x10] sm:$0xf]
      %v758 = vld [vmem:[%s752 + $0x14] sm:$0xf]
      %v759 = vld [vmem:[%s752 + $0x18] sm:$0xf]
      %v760 = vld [vmem:[%s752 + $0x1c] sm:$0xf]
      %v761 = vld [vmem:[%s752 + $0x20] sm:$0xf]
      %v762 = vld [vmem:[%s752 + $0x24] sm:$0xf]
      %v763 = vld [vmem:[%s752 + $0x28] sm:$0xf]
      %v764 = vld [vmem:[%s752 + $0x2c] sm:$0xf]
      %v765 = vld [vmem:[%s752 + $0x30] sm:$0xf]
      %v766 = vld [vmem:[%s752 + $0x34] sm:$0xf]
      %v767 = vld [vmem:[%s752 + $0x38] sm:$0xf]
      %v768 = vld [vmem:[%s752 + $0x3c] sm:$0xf]
      %v769 = vld [vmem:[%s752 + $0x40] sm:$0xf]
      %v770 = vld [vmem:[%s752 + $0x44] sm:$0xf]
      %v771 = vld [vmem:[%s752 + $0x48] sm:$0xf]
      %v772 = vld [vmem:[%s752 + $0x4c] sm:$0xf]
      %v773 = vld [vmem:[%s752 + $0x50] sm:$0xf]
      %v774 = vld [vmem:[%s752 + $0x54] sm:$0xf]
      %v775 = vld [vmem:[%s752 + $0x58] sm:$0xf]
      %v776 = vld [vmem:[%s752 + $0x5c] sm:$0xf]
      %v777 = vld [vmem:[%s752 + $0x60] sm:$0xf]
      %v778 = vld [vmem:[%s752 + $0x64] sm:$0xf]
      %v779 = vld [vmem:[%s752 + $0x68] sm:$0xf]
      %v780 = vld [vmem:[%s752 + $0x6c] sm:$0xf]
      %v781 = vld [vmem:[%s752 + $0x70] sm:$0xf]
      %v782 = vld [vmem:[%s752 + $0x74] sm:$0xf]
      %v783 = vld [vmem:[%s752 + $0x78] sm:$0xf]
      %v784 = vld [vmem:[%s752 + $0x7c] sm:$0xf]
      %v789 = vunpack.c.l.b16 %v748
      %v790 = vunpack.c.h.b16 %v748
      %v791 = vunpack.c.l.b16 %v749
      %v792 = vunpack.c.h.b16 %v749
      %v793 = vunpack.c.l.b16 %v750
      %v794 = vunpack.c.h.b16 %v750
      %v795 = vunpack.c.l.b16 %v751
      %v796 = vunpack.c.h.b16 %v751
      %v797 = vpack.c.b16 %v791, %v789
      %v798 = vpack.c.b16 %v792, %v790
      %v799 = vpack.c.b16 %v795, %v793
      %v800 = vpack.c.b16 %v796, %v794
      %vm801 = vsmask.f32 5376
      %v803 = vshrl.u32 %v797, 16
      %v805 = vrot.slane %v803, 2
      %v806 = vshll.u32 %v797, 16
      %v808 = vrot.slane %v806, 3
      %v809 = vor.u32 %v805, %v808
      %v811 = vshrl.u32 %v799, 16
      %v813 = vrot.slane %v811, 2
      %v814 = vshll.u32 %v799, 16
      %v816 = vrot.slane %v814, 3
      %v817 = vor.u32 %v813, %v816
      %v818 = vsel %vm801, %v809, %v817
      %v820 = vshrl.u32 %v798, 16
      %v822 = vrot.slane %v820, 2
      %v823 = vshll.u32 %v798, 16
      %v825 = vrot.slane %v823, 3
      %v826 = vor.u32 %v822, %v825
      %v828 = vshrl.u32 %v800, 16
      %v830 = vrot.slane %v828, 2
      %v831 = vshll.u32 %v800, 16
      %v833 = vrot.slane %v831, 3
      %v834 = vor.u32 %v830, %v833
      %v835 = vsel %vm801, %v826, %v834
      %v872 = vunpack.c.l.b16 %v753
      %v873 = vunpack.c.l.b16 %v754
      %v874 = vunpack.c.l.b16 %v755
      %v875 = vunpack.c.l.b16 %v756
      %v876 = vunpack.c.l.b16 %v757
      %v877 = vunpack.c.l.b16 %v758
      %v878 = vunpack.c.l.b16 %v759
      %v879 = vunpack.c.l.b16 %v760
      %v880 = vunpack.c.l.b16 %v761
      %v881 = vunpack.c.l.b16 %v762
      %v882 = vunpack.c.l.b16 %v763
      %v883 = vunpack.c.l.b16 %v764
      %v884 = vunpack.c.l.b16 %v765
      %v885 = vunpack.c.l.b16 %v766
      %v886 = vunpack.c.l.b16 %v767
      %v887 = vunpack.c.l.b16 %v768
      %v888 = vunpack.c.l.b16 %v769
      %v889 = vunpack.c.l.b16 %v770
      %v890 = vunpack.c.l.b16 %v771
      %v891 = vunpack.c.l.b16 %v772
      %v892 = vunpack.c.l.b16 %v773
      %v893 = vunpack.c.l.b16 %v774
      %v894 = vunpack.c.l.b16 %v775
      %v895 = vunpack.c.l.b16 %v776
      %v896 = vunpack.c.l.b16 %v777
      %v897 = vunpack.c.l.b16 %v778
      %v898 = vunpack.c.l.b16 %v779
      %v899 = vunpack.c.l.b16 %v780
      %v900 = vunpack.c.l.b16 %v781
      %v901 = vunpack.c.l.b16 %v782
      %v902 = vunpack.c.l.b16 %v783
      %v903 = vunpack.c.l.b16 %v784
      %v904 = vpack.c.b16 %v873, %v872
      %v905 = vpack.c.b16 %v875, %v874
      %v906 = vpack.c.b16 %v877, %v876
      %v907 = vpack.c.b16 %v879, %v878
      %v908 = vpack.c.b16 %v881, %v880
      %v909 = vpack.c.b16 %v883, %v882
      %v910 = vpack.c.b16 %v885, %v884
      %v911 = vpack.c.b16 %v887, %v886
      %v912 = vpack.c.b16 %v889, %v888
      %v913 = vpack.c.b16 %v891, %v890
      %v914 = vpack.c.b16 %v893, %v892
      %v915 = vpack.c.b16 %v895, %v894
      %v916 = vpack.c.b16 %v897, %v896
      %v917 = vpack.c.b16 %v899, %v898
      %v918 = vpack.c.b16 %v901, %v900
      %v919 = vpack.c.b16 %v903, %v902
      %936 = vmatpush.bf16.msra.mxu0 %v911
      %937 = vmatpush.bf16.msra.mxu0 %v910
      %938 = vmatpush.bf16.msra.mxu0 %v909
      %939 = vmatpush.bf16.msra.mxu0 %v908
      %940 = vmatpush.bf16.msra.mxu0 %v907
      %941 = vmatpush.bf16.msra.mxu0 %v906
      %942 = vmatpush.bf16.msra.mxu0 %v905
      %943 = vmatpush.bf16.msra.mxu0 %v904
      %944 = vmatmul.bf16.gmra.mxu0 %v818
      %v945 = vpop.f32.mrf.mxu0
      %v946 = vadd.f32 0.0, %v945
      %v947 = vpop.f32.mrf.mxu0
      %v948 = vadd.f32 0.0, %v947
      %949 = vmatmul.bf16.gmra.mxu0 %v817
      %v950 = vpop.f32.mrf.mxu0
      %v951 = vadd.f32 0.0, %v950
      %v952 = vpop.f32.mrf.mxu0
      %953 = vdwg.mxu0
      %954 = vmatpush.bf16.msra.mxu0 %v919
      %955 = vmatpush.bf16.msra.mxu0 %v918
      %956 = vmatpush.bf16.msra.mxu0 %v917
      %957 = vmatpush.bf16.msra.mxu0 %v916
      %958 = vmatpush.bf16.msra.mxu0 %v915
      %959 = vmatpush.bf16.msra.mxu0 %v914
      %960 = vmatpush.bf16.msra.mxu0 %v913
      %961 = vmatpush.bf16.msra.mxu0 %v912
      %962 = vmatmul.bf16.gmra.mxu0 %v835
      %v963 = vpop.f32.mrf.mxu0
      %v964 = vadd.f32 %v946, %v963
      %v965 = vpop.f32.mrf.mxu0
      %v966 = vadd.f32 %v948, %v965
      %967 = vmatmul.bf16.gmra.mxu0 %v834
      %v968 = vpop.f32.mrf.mxu0
      %v969 = vadd.f32 %v951, %v968
      %v970 = vpop.f32.mrf.mxu0
      %971 = vdwg.mxu0
      %v972 = vadd.f32 %v740, %v964
      %v973 = vadd.f32 %v742, %v966
      %v974 = vadd.f32 %v745, %v969
      %v975 = vld [vmem:[%s226] sm:$0x88]
      %s976 = scalar_lea.vmem %s1, 384
      %v977 = vld [vmem:[%s976] sm:$0xf]
      %v978 = vld [vmem:[%s976 + $0x4] sm:$0xf]
      %v979 = vld [vmem:[%s976 + $0x8] sm:$0xf]
      %v980 = vld [vmem:[%s976 + $0xc] sm:$0xf]
      %v981 = vld [vmem:[%s976 + $0x10] sm:$0xf]
      %v982 = vld [vmem:[%s976 + $0x14] sm:$0xf]
      %v983 = vld [vmem:[%s976 + $0x18] sm:$0xf]
      %v984 = vld [vmem:[%s976 + $0x1c] sm:$0xf]
      %v985 = vld [vmem:[%s976 + $0x20] sm:$0xf]
      %v986 = vld [vmem:[%s976 + $0x24] sm:$0xf]
      %v987 = vld [vmem:[%s976 + $0x28] sm:$0xf]
      %v988 = vld [vmem:[%s976 + $0x2c] sm:$0xf]
      %v989 = vld [vmem:[%s976 + $0x30] sm:$0xf]
      %v990 = vld [vmem:[%s976 + $0x34] sm:$0xf]
      %v991 = vld [vmem:[%s976 + $0x38] sm:$0xf]
      %v992 = vld [vmem:[%s976 + $0x3c] sm:$0xf]
      %v993 = vld [vmem:[%s976 + $0x40] sm:$0xf]
      %v994 = vld [vmem:[%s976 + $0x44] sm:$0xf]
      %v995 = vld [vmem:[%s976 + $0x48] sm:$0xf]
      %v996 = vld [vmem:[%s976 + $0x4c] sm:$0xf]
      %v997 = vld [vmem:[%s976 + $0x50] sm:$0xf]
      %v998 = vld [vmem:[%s976 + $0x54] sm:$0xf]
      %v999 = vld [vmem:[%s976 + $0x58] sm:$0xf]
      %v1000 = vld [vmem:[%s976 + $0x5c] sm:$0xf]
      %v1001 = vld [vmem:[%s976 + $0x60] sm:$0xf]
      %v1002 = vld [vmem:[%s976 + $0x64] sm:$0xf]
      %v1003 = vld [vmem:[%s976 + $0x68] sm:$0xf]
      %v1004 = vld [vmem:[%s976 + $0x6c] sm:$0xf]
      %v1005 = vld [vmem:[%s976 + $0x70] sm:$0xf]
      %v1006 = vld [vmem:[%s976 + $0x74] sm:$0xf]
      %v1007 = vld [vmem:[%s976 + $0x78] sm:$0xf]
      %v1008 = vld [vmem:[%s976 + $0x7c] sm:$0xf]
      %v1010 = vunpack.c.l.b16 %v975
      %v1011 = vunpack.c.h.b16 %v975
      %v1012 = vpack.c.b16 %v791, %v1010
      %v1013 = vpack.c.b16 %v792, %v1011
      %vm1014 = vcmask 1044480
      %v1015 = vrot.slane %v1012, 3
      %v1016 = vrot.slane %v799, 3
      %v1017 = vsel %vm1014, %v1015, %v1016
      %v1018 = vrot.slane %v1013, 3
      %v1019 = vrot.slane %v800, 3
      %v1020 = vsel %vm1014, %v1018, %v1019
      %v1057 = vunpack.c.l.b16 %v977
      %v1058 = vunpack.c.l.b16 %v978
      %v1059 = vunpack.c.l.b16 %v979
      %v1060 = vunpack.c.l.b16 %v980
      %v1061 = vunpack.c.l.b16 %v981
      %v1062 = vunpack.c.l.b16 %v982
      %v1063 = vunpack.c.l.b16 %v983
      %v1064 = vunpack.c.l.b16 %v984
      %v1065 = vunpack.c.l.b16 %v985
      %v1066 = vunpack.c.l.b16 %v986
      %v1067 = vunpack.c.l.b16 %v987
      %v1068 = vunpack.c.l.b16 %v988
      %v1069 = vunpack.c.l.b16 %v989
      %v1070 = vunpack.c.l.b16 %v990
      %v1071 = vunpack.c.l.b16 %v991
      %v1072 = vunpack.c.l.b16 %v992
      %v1073 = vunpack.c.l.b16 %v993
      %v1074 = vunpack.c.l.b16 %v994
      %v1075 = vunpack.c.l.b16 %v995
      %v1076 = vunpack.c.l.b16 %v996
      %v1077 = vunpack.c.l.b16 %v997
      %v1078 = vunpack.c.l.b16 %v998
      %v1079 = vunpack.c.l.b16 %v999
      %v1080 = vunpack.c.l.b16 %v1000
      %v1081 = vunpack.c.l.b16 %v1001
      %v1082 = vunpack.c.l.b16 %v1002
      %v1083 = vunpack.c.l.b16 %v1003
      %v1084 = vunpack.c.l.b16 %v1004
      %v1085 = vunpack.c.l.b16 %v1005
      %v1086 = vunpack.c.l.b16 %v1006
      %v1087 = vunpack.c.l.b16 %v1007
      %v1088 = vunpack.c.l.b16 %v1008
      %v1089 = vpack.c.b16 %v1058, %v1057
      %v1090 = vpack.c.b16 %v1060, %v1059
      %v1091 = vpack.c.b16 %v1062, %v1061
      %v1092 = vpack.c.b16 %v1064, %v1063
      %v1093 = vpack.c.b16 %v1066, %v1065
      %v1094 = vpack.c.b16 %v1068, %v1067
      %v1095 = vpack.c.b16 %v1070, %v1069
      %v1096 = vpack.c.b16 %v1072, %v1071
      %v1097 = vpack.c.b16 %v1074, %v1073
      %v1098 = vpack.c.b16 %v1076, %v1075
      %v1099 = vpack.c.b16 %v1078, %v1077
      %v1100 = vpack.c.b16 %v1080, %v1079
      %v1101 = vpack.c.b16 %v1082, %v1081
      %v1102 = vpack.c.b16 %v1084, %v1083
      %v1103 = vpack.c.b16 %v1086, %v1085
      %v1104 = vpack.c.b16 %v1088, %v1087
      %1121 = vmatpush.bf16.msra.mxu0 %v1096
      %1122 = vmatpush.bf16.msra.mxu0 %v1095
      %1123 = vmatpush.bf16.msra.mxu0 %v1094
      %1124 = vmatpush.bf16.msra.mxu0 %v1093
      %1125 = vmatpush.bf16.msra.mxu0 %v1092
      %1126 = vmatpush.bf16.msra.mxu0 %v1091
      %1127 = vmatpush.bf16.msra.mxu0 %v1090
      %1128 = vmatpush.bf16.msra.mxu0 %v1089
      %1129 = vmatmul.bf16.gmra.mxu0 %v1017
      %v1130 = vpop.f32.mrf.mxu0
      %v1131 = vadd.f32 0.0, %v1130
      %v1132 = vpop.f32.mrf.mxu0
      %v1133 = vadd.f32 0.0, %v1132
      %1134 = vmatmul.bf16.gmra.mxu0 %v1016
      %v1135 = vpop.f32.mrf.mxu0
      %v1136 = vadd.f32 0.0, %v1135
      %v1137 = vpop.f32.mrf.mxu0
      %1138 = vdwg.mxu0
      %1139 = vmatpush.bf16.msra.mxu0 %v1104
      %1140 = vmatpush.bf16.msra.mxu0 %v1103
      %1141 = vmatpush.bf16.msra.mxu0 %v1102
      %1142 = vmatpush.bf16.msra.mxu0 %v1101
      %1143 = vmatpush.bf16.msra.mxu0 %v1100
      %1144 = vmatpush.bf16.msra.mxu0 %v1099
      %1145 = vmatpush.bf16.msra.mxu0 %v1098
      %1146 = vmatpush.bf16.msra.mxu0 %v1097
      %1147 = vmatmul.bf16.gmra.mxu0 %v1020
      %v1148 = vpop.f32.mrf.mxu0
      %v1149 = vadd.f32 %v1131, %v1148
      %v1150 = vpop.f32.mrf.mxu0
      %v1151 = vadd.f32 %v1133, %v1150
      %1152 = vmatmul.bf16.gmra.mxu0 %v1019
      %v1153 = vpop.f32.mrf.mxu0
      %v1154 = vadd.f32 %v1136, %v1153
      %v1155 = vpop.f32.mrf.mxu0
      %1156 = vdwg.mxu0
      %v1157 = vadd.f32 %v972, %v1149
      %v1158 = vadd.f32 %v973, %v1151
      %v1159 = vadd.f32 %v974, %v1154
      %v1160 = vsel %vm355, %v1157, 0.0
      %v1161 = vsel %vm356, %v1158, 0.0
      %v1162 = vsel %vm357, %v1159, 0.0
      %v1163 = vpack.c.bf16 %v1160, %v1160
      %v1164 = vpack.c.bf16 %v1161, %v1161
      %v1165 = vpack.c.bf16 %v1162, %v1162
      %1166 = vst [vmem:[%s233] sm:$0xf] %v1163
      %1167 = vst [vmem:[%s233 + $0x4] sm:$0xf] %v1164
      %1168 = vst [vmem:[%s233 + $0x8] sm:$0x3] %v1165
      %v1169 = vadd.f32 %v1160, %v1161
      %vm1170 = vcmask 1043456
      %v1171 = vsel %vm1170, %v1162, 0.0
      %v1172 = vadd.f32 %v1169, %v1171
      %v1173 = vrot.slane %v1172, 4
      %v1174 = vadd.f32 %v1172, %v1173
      %v1175 = vrot.slane %v1174, 2
      %v1176 = vadd.f32 %v1174, %v1175
      %v1177 = vrot.slane %v1176, 1
      %v1178 = vadd.f32 %v1176, %v1177
      %v1179 = vadd.f32 %v1178, 0.0
      %v1180 = vmul.f32 %v1160, %v1160
      %v1181 = vmul.f32 %v1161, %v1161
      %v1182 = vmul.f32 %v1162, %v1162
      %v1183 = vadd.f32 %v1180, %v1181
      %v1184 = vsel %vm1170, %v1182, 0.0
      %v1185 = vadd.f32 %v1183, %v1184
      %v1186 = vrot.slane %v1185, 4
      %v1187 = vadd.f32 %v1185, %v1186
      %v1188 = vrot.slane %v1187, 2
      %v1189 = vadd.f32 %v1187, %v1188
      %v1190 = vrot.slane %v1189, 1
      %v1191 = vadd.f32 %v1189, %v1190
      %v1192 = vadd.f32 %v1191, 0.0
      %v1193 = vld [vmem:[%s238] sm:$0xff]
      %v1194 = vadd.f32 %v1193, %v1179
      %1195 = vst [vmem:[%s238] sm:$0xff] %v1194
      %v1196 = vld [vmem:[%s242] sm:$0xff]
      %v1197 = vadd.f32 %v1196, %v1192
      %1198 = vst [vmem:[%s242] sm:$0xff] %v1197
      %s1199 = sadd.s32 %s20, %s21
      %p1200 = scmp.lt.s32.totalorder %s1199, 1
      %s1201 = scalar_select %p1200, %s1199, 1
      %s1202 = smul.addr %s1201, 3
      %s1203 = smul.addr %s1202, 4
      %s1204 = scalar_lea.vmem %s2, %s1203
      %p1205 = scmp.lt.s32.totalorder %s20, 1
      %s1206 = scalar_select %p1205, %s20, 1
      %s1207 = smul.addr %s1206, 8
      %s1208 = scalar_lea.vmem %s3, %s1207
      %p1209 = scmp.lt.s32.totalorder %s20, 1
      %s1210 = scalar_select %p1209, %s20, 1
      %s1211 = smul.addr %s1210, 8
      %s1212 = scalar_lea.vmem %s4, %s1211
      // Predicated region
      $region33: #{shallow_cnn_forward.7} parent=27 // pred_check
        %p1213 = pneg %p97
      $region34: #{shallow_cnn_forward.7} parent=27 // pred_check_branch
        %1215 = sbr.rel (%p1213) target = $region36
      $region35: #{shallow_cnn_forward.7} parent=27 // pred_region
        %s1216 = sadd.s32 %s20, %s21
      $region36: #{shallow_cnn_forward.7} parent=27 // pred_fallthru
        _
      // Predicated region
      $region37: #{shallow_cnn_forward.7} parent=27 // pred_check
        %p1217 = pneg %p123
      $region38: #{shallow_cnn_forward.7} parent=27 // pred_check_branch
        %1219 = sbr.rel (%p1217) target = $region40
      $region39: #{shallow_cnn_forward.7} parent=27 // pred_region
        _
      $region40: #{shallow_cnn_forward.7} parent=27 // pred_fallthru
        _
      // Predicated region
      $region41: #{shallow_cnn_forward.7} parent=27 // pred_check
        %p1220 = pneg %p149
      $region42: #{shallow_cnn_forward.7} parent=27 // pred_check_branch
        %1222 = sbr.rel (%p1220) target = $region44
      $region43: #{shallow_cnn_forward.7} parent=27 // pred_region
        _
      $region44: #{shallow_cnn_forward.7} parent=27 // pred_fallthru
        _
    $region28: #{shallow_cnn_forward.7} parent=5 // pred_fallthru
      _
    %p1223 = scmp.le.s32.totalorder 2, %s11
    // Predicated region
    $region45: #{shallow_cnn_forward.7} parent=5 // pred_check
      %p1224 = pneg %p1223
    $region46: #{shallow_cnn_forward.7} parent=5 // pred_check_branch
      %1226 = sbr.rel (%p1224) target = $region48
    $region47: #{shallow_cnn_forward.7} parent=5 // pred_region
      %s1227 = ssub.s32 %s11, 2
      // Predicated region
      $region49: #{shallow_cnn_forward.7} parent=47 // pred_check
        %p1228 = pneg %p103
      $region50: #{shallow_cnn_forward.7} parent=47 // pred_check_branch
        %1230 = sbr.rel (%p1228) target = $region52
      $region51: #{shallow_cnn_forward.7} parent=47 // pred_region
        %s1231 = sadd.s32 %s22, %s23
        %p1232 = scmp.lt.s32.totalorder %s1231, 1
        %s1233 = scalar_select %p1232, %s1231, 1
        %s1234 = smul.addr %s1233, 3
        %s1235 = smul.addr %s1234, 4
        %s1236 = scalar_lea.vmem %s2, %s1235
      $region52: #{shallow_cnn_forward.7} parent=47 // pred_fallthru
        _
      // Predicated region
      $region53: #{shallow_cnn_forward.7} parent=47 // pred_check
        %p1237 = pneg %p129
      $region54: #{shallow_cnn_forward.7} parent=47 // pred_check_branch
        %1239 = sbr.rel (%p1237) target = $region56
      $region55: #{shallow_cnn_forward.7} parent=47 // pred_region
        %p1240 = scmp.lt.s32.totalorder %s22, 1
        %s1241 = scalar_select %p1240, %s22, 1
        %s1242 = smul.addr %s1241, 8
        %s1243 = scalar_lea.vmem %s3, %s1242
      $region56: #{shallow_cnn_forward.7} parent=47 // pred_fallthru
        _
      // Predicated region
      $region57: #{shallow_cnn_forward.7} parent=47 // pred_check
        %p1244 = pneg %p155
      $region58: #{shallow_cnn_forward.7} parent=47 // pred_check_branch
        %1246 = sbr.rel (%p1244) target = $region60
      $region59: #{shallow_cnn_forward.7} parent=47 // pred_region
        %p1247 = scmp.lt.s32.totalorder %s22, 1
        %s1248 = scalar_select %p1247, %s22, 1
        %s1249 = smul.addr %s1248, 8
        %s1250 = scalar_lea.vmem %s4, %s1249
      $region60: #{shallow_cnn_forward.7} parent=47 // pred_fallthru
        _
    $region48: #{shallow_cnn_forward.7} parent=5 // pred_fallthru
      _
  $region6: #{shallow_cnn_forward.7} parent=0 // loop_footer
    %s15 = sadd.s32 1, %s11
  $region7: #{shallow_cnn_forward.7} parent=0 // loop_footer_branch
    %10 = sbr.rel target = $region3
  $region8: #{shallow_cnn_forward.7} parent=0 // loop_exit
    _

// kernel: shallow_cnn_forward.9
$region0: #{shallow_cnn_forward.9}
  #allocation0 [shape = 'u32[]', space=smem, size = 0x4, offset = 0x4, fixed_abs, tag = 'smem constant byte address 0x4 - core index']
  #allocation1 [shape = 'u32[72,128]{1,0:T(1,128)}', space=vmem, size = 0x9000, scoped, tag = 'internal scratch']
  %s0 = inlined_call_operand.vmem [shape: bf16[2,2048], index: 0, kind: input, shape index: {}]
  %s1 = inlined_call_operand.vmem [shape: bf16[2048,16], index: 1, kind: input, shape index: {}]
  %s2 = inlined_call_operand.vmem [shape: f32[1,16], index: 2, kind: input, shape index: {}]
  %s3 = inlined_call_operand.hbm [shape: f32[2,16], index: 3, kind: output, shape index: {}]
  %s4 = sld [smem:[#allocation0]]
  $region22: #{shallow_cnn_forward.9} parent=0
    _
  %s6 = ssub.s32 1, %s4
  %s7 = scalar_select 0, %s6, %s4
  $region1: #{shallow_cnn_forward.9} parent=0
    #allocation2 [shape = 'u8[1024]{0}', space=vmem, size = 0x400, scoped, tag = 'output window, operand 0, single buffered']
    #allocation3 [shape = 's32[1]{0}', space=sflag, size = 0x4, scoped, tag = 'scoped memory for shallow_cnn_forward.9']
    %8 = vsyncpa [#allocation3], 0
    // Predicated region
    $region2: #{shallow_cnn_forward.9} parent=1 // pred_check
      _
    $region3: #{shallow_cnn_forward.9} parent=1 // pred_check_branch
      %10 = sbr.rel (0) target = $region5
    $region4: #{shallow_cnn_forward.9} parent=1 // pred_region
      _
    $region5: #{shallow_cnn_forward.9} parent=1 // pred_fallthru
      _
    // Predicated region
    $region6: #{shallow_cnn_forward.9} parent=1 // pred_check
      _
    $region7: #{shallow_cnn_forward.9} parent=1 // pred_check_branch
      %12 = sbr.rel (0) target = $region9
    $region8: #{shallow_cnn_forward.9} parent=1 // pred_region
      _
    $region9: #{shallow_cnn_forward.9} parent=1 // pred_fallthru
      _
    // Predicated region
    $region10: #{shallow_cnn_forward.9} parent=1 // pred_check
      _
    $region11: #{shallow_cnn_forward.9} parent=1 // pred_check_branch
      %14 = sbr.rel (0) target = $region13
    $region12: #{shallow_cnn_forward.9} parent=1 // pred_region
      _
    $region13: #{shallow_cnn_forward.9} parent=1 // pred_fallthru
      _
    %v15 = vld [vmem:[%s0] sm:$0xff]
    %v16 = vld [vmem:[%s0 + $0x8] sm:$0xff]
    %v17 = vld [vmem:[%s1] sm:$0xf]
    %v18 = vld [vmem:[%s1 + $0x4] sm:$0xf]
    %v19 = vld [vmem:[%s1 + $0x8] sm:$0xf]
    %v20 = vld [vmem:[%s1 + $0xc] sm:$0xf]
    %v21 = vld [vmem:[%s1 + $0x10] sm:$0xf]
    %v22 = vld [vmem:[%s1 + $0x14] sm:$0xf]
    %v23 = vld [vmem:[%s1 + $0x18] sm:$0xf]
    %v24 = vld [vmem:[%s1 + $0x1c] sm:$0xf]
    %v25 = vld [vmem:[%s1 + $0x20] sm:$0xf]
    %v26 = vld [vmem:[%s1 + $0x24] sm:$0xf]
    %v27 = vld [vmem:[%s1 + $0x28] sm:$0xf]
    %v28 = vld [vmem:[%s1 + $0x2c] sm:$0xf]
    %v29 = vld [vmem:[%s1 + $0x30] sm:$0xf]
    %v30 = vld [vmem:[%s1 + $0x34] sm:$0xf]
    %v31 = vld [vmem:[%s1 + $0x38] sm:$0xf]
    %v32 = vld [vmem:[%s1 + $0x3c] sm:$0xf]
    %v33 = vld [vmem:[%s1 + $0x40] sm:$0xf]
    %v34 = vld [vmem:[%s1 + $0x44] sm:$0xf]
    %v35 = vld [vmem:[%s1 + $0x48] sm:$0xf]
    %v36 = vld [vmem:[%s1 + $0x4c] sm:$0xf]
    %v37 = vld [vmem:[%s1 + $0x50] sm:$0xf]
    %v38 = vld [vmem:[%s1 + $0x54] sm:$0xf]
    %v39 = vld [vmem:[%s1 + $0x58] sm:$0xf]
    %v40 = vld [vmem:[%s1 + $0x5c] sm:$0xf]
    %v41 = vld [vmem:[%s1 + $0x60] sm:$0xf]
    %v42 = vld [vmem:[%s1 + $0x64] sm:$0xf]
    %v43 = vld [vmem:[%s1 + $0x68] sm:$0xf]
    %v44 = vld [vmem:[%s1 + $0x6c] sm:$0xf]
    %v45 = vld [vmem:[%s1 + $0x70] sm:$0xf]
    %v46 = vld [vmem:[%s1 + $0x74] sm:$0xf]
    %v47 = vld [vmem:[%s1 + $0x78] sm:$0xf]
    %v48 = vld [vmem:[%s1 + $0x7c] sm:$0xf]
    %v49 = vld [vmem:[%s1 + $0x80] sm:$0xf]
    %v50 = vld [vmem:[%s1 + $0x84] sm:$0xf]
    %v51 = vld [vmem:[%s1 + $0x88] sm:$0xf]
    %v52 = vld [vmem:[%s1 + $0x8c] sm:$0xf]
    %v53 = vld [vmem:[%s1 + $0x90] sm:$0xf]
    %v54 = vld [vmem:[%s1 + $0x94] sm:$0xf]
    %v55 = vld [vmem:[%s1 + $0x98] sm:$0xf]
    %v56 = vld [vmem:[%s1 + $0x9c] sm:$0xf]
    %v57 = vld [vmem:[%s1 + $0xa0] sm:$0xf]
    %v58 = vld [vmem:[%s1 + $0xa4] sm:$0xf]
    %v59 = vld [vmem:[%s1 + $0xa8] sm:$0xf]
    %v60 = vld [vmem:[%s1 + $0xac] sm:$0xf]
    %v61 = vld [vmem:[%s1 + $0xb0] sm:$0xf]
    %v62 = vld [vmem:[%s1 + $0xb4] sm:$0xf]
    %v63 = vld [vmem:[%s1 + $0xb8] sm:$0xf]
    %v64 = vld [vmem:[%s1 + $0xbc] sm:$0xf]
    %v65 = vld [vmem:[%s1 + $0xc0] sm:$0xf]
    %v66 = vld [vmem:[%s1 + $0xc4] sm:$0xf]
    %v67 = vld [vmem:[%s1 + $0xc8] sm:$0xf]
    %v68 = vld [vmem:[%s1 + $0xcc] sm:$0xf]
    %v69 = vld [vmem:[%s1 + $0xd0] sm:$0xf]
    %v70 = vld [vmem:[%s1 + $0xd4] sm:$0xf]
    %v71 = vld [vmem:[%s1 + $0xd8] sm:$0xf]
    %v72 = vld [vmem:[%s1 + $0xdc] sm:$0xf]
    %v73 = vld [vmem:[%s1 + $0xe0] sm:$0xf]
    %v74 = vld [vmem:[%s1 + $0xe4] sm:$0xf]
    %v75 = vld [vmem:[%s1 + $0xe8] sm:$0xf]
    %v76 = vld [vmem:[%s1 + $0xec] sm:$0xf]
    %v77 = vld [vmem:[%s1 + $0xf0] sm:$0xf]
    %v78 = vld [vmem:[%s1 + $0xf4] sm:$0xf]
    %v79 = vld [vmem:[%s1 + $0xf8] sm:$0xf]
    %v80 = vld [vmem:[%s1 + $0xfc] sm:$0xf]
    %v81 = vld [vmem:[%s1 + $0x100] sm:$0xf]
    %v82 = vld [vmem:[%s1 + $0x104] sm:$0xf]
    %v83 = vld [vmem:[%s1 + $0x108] sm:$0xf]
    %v84 = vld [vmem:[%s1 + $0x10c] sm:$0xf]
    %v85 = vld [vmem:[%s1 + $0x110] sm:$0xf]
    %v86 = vld [vmem:[%s1 + $0x114] sm:$0xf]
    %v87 = vld [vmem:[%s1 + $0x118] sm:$0xf]
    %v88 = vld [vmem:[%s1 + $0x11c] sm:$0xf]
    %v89 = vld [vmem:[%s1 + $0x120] sm:$0xf]
    %v90 = vld [vmem:[%s1 + $0x124] sm:$0xf]
    %v91 = vld [vmem:[%s1 + $0x128] sm:$0xf]
    %v92 = vld [vmem:[%s1 + $0x12c] sm:$0xf]
    %v93 = vld [vmem:[%s1 + $0x130] sm:$0xf]
    %v94 = vld [vmem:[%s1 + $0x134] sm:$0xf]
    %v95 = vld [vmem:[%s1 + $0x138] sm:$0xf]
    %v96 = vld [vmem:[%s1 + $0x13c] sm:$0xf]
    %v97 = vld [vmem:[%s1 + $0x140] sm:$0xf]
    %v98 = vld [vmem:[%s1 + $0x144] sm:$0xf]
    %v99 = vld [vmem:[%s1 + $0x148] sm:$0xf]
    %v100 = vld [vmem:[%s1 + $0x14c] sm:$0xf]
    %v101 = vld [vmem:[%s1 + $0x150] sm:$0xf]
    %v102 = vld [vmem:[%s1 + $0x154] sm:$0xf]
    %v103 = vld [vmem:[%s1 + $0x158] sm:$0xf]
    %v104 = vld [vmem:[%s1 + $0x15c] sm:$0xf]
    %v105 = vld [vmem:[%s1 + $0x160] sm:$0xf]
    %v106 = vld [vmem:[%s1 + $0x164] sm:$0xf]
    %v107 = vld [vmem:[%s1 + $0x168] sm:$0xf]
    %v108 = vld [vmem:[%s1 + $0x16c] sm:$0xf]
    %v109 = vld [vmem:[%s1 + $0x170] sm:$0xf]
    %v110 = vld [vmem:[%s1 + $0x174] sm:$0xf]
    %v111 = vld [vmem:[%s1 + $0x178] sm:$0xf]
    %v112 = vld [vmem:[%s1 + $0x17c] sm:$0xf]
    %v113 = vld [vmem:[%s1 + $0x180] sm:$0xf]
    %v114 = vld [vmem:[%s1 + $0x184] sm:$0xf]
    %v115 = vld [vmem:[%s1 + $0x188] sm:$0xf]
    %v116 = vld [vmem:[%s1 + $0x18c] sm:$0xf]
    %v117 = vld [vmem:[%s1 + $0x190] sm:$0xf]
    %v118 = vld [vmem:[%s1 + $0x194] sm:$0xf]
    %v119 = vld [vmem:[%s1 + $0x198] sm:$0xf]
    %v120 = vld [vmem:[%s1 + $0x19c] sm:$0xf]
    %v121 = vld [vmem:[%s1 + $0x1a0] sm:$0xf]
    %v122 = vld [vmem:[%s1 + $0x1a4] sm:$0xf]
    %v123 = vld [vmem:[%s1 + $0x1a8] sm:$0xf]
    %v124 = vld [vmem:[%s1 + $0x1ac] sm:$0xf]
    %v125 = vld [vmem:[%s1 + $0x1b0] sm:$0xf]
    %v126 = vld [vmem:[%s1 + $0x1b4] sm:$0xf]
    %v127 = vld [vmem:[%s1 + $0x1b8] sm:$0xf]
    %v128 = vld [vmem:[%s1 + $0x1bc] sm:$0xf]
    %v129 = vld [vmem:[%s1 + $0x1c0] sm:$0xf]
    %v130 = vld [vmem:[%s1 + $0x1c4] sm:$0xf]
    %v131 = vld [vmem:[%s1 + $0x1c8] sm:$0xf]
    %v132 = vld [vmem:[%s1 + $0x1cc] sm:$0xf]
    %v133 = vld [vmem:[%s1 + $0x1d0] sm:$0xf]
    %v134 = vld [vmem:[%s1 + $0x1d4] sm:$0xf]
    %v135 = vld [vmem:[%s1 + $0x1d8] sm:$0xf]
    %v136 = vld [vmem:[%s1 + $0x1dc] sm:$0xf]
    %v137 = vld [vmem:[%s1 + $0x1e0] sm:$0xf]
    %v138 = vld [vmem:[%s1 + $0x1e4] sm:$0xf]
    %v139 = vld [vmem:[%s1 + $0x1e8] sm:$0xf]
    %v140 = vld [vmem:[%s1 + $0x1ec] sm:$0xf]
    %v141 = vld [vmem:[%s1 + $0x1f0] sm:$0xf]
    %v142 = vld [vmem:[%s1 + $0x1f4] sm:$0xf]
    %v143 = vld [vmem:[%s1 + $0x1f8] sm:$0xf]
    %v144 = vld [vmem:[%s1 + $0x1fc] sm:$0xf]
    %v145 = vld [vmem:[%s1 + $0x200] sm:$0xf]
    %v146 = vld [vmem:[%s1 + $0x204] sm:$0xf]
    %v147 = vld [vmem:[%s1 + $0x208] sm:$0xf]
    %v148 = vld [vmem:[%s1 + $0x20c] sm:$0xf]
    %v149 = vld [vmem:[%s1 + $0x210] sm:$0xf]
    %v150 = vld [vmem:[%s1 + $0x214] sm:$0xf]
    %v151 = vld [vmem:[%s1 + $0x218] sm:$0xf]
    %v152 = vld [vmem:[%s1 + $0x21c] sm:$0xf]
    %v153 = vld [vmem:[%s1 + $0x220] sm:$0xf]
    %v154 = vld [vmem:[%s1 + $0x224] sm:$0xf]
    %v155 = vld [vmem:[%s1 + $0x228] sm:$0xf]
    %v156 = vld [vmem:[%s1 + $0x22c] sm:$0xf]
    %v157 = vld [vmem:[%s1 + $0x230] sm:$0xf]
    %v158 = vld [vmem:[%s1 + $0x234] sm:$0xf]
    %v159 = vld [vmem:[%s1 + $0x238] sm:$0xf]
    %v160 = vld [vmem:[%s1 + $0x23c] sm:$0xf]
    %v161 = vld [vmem:[%s1 + $0x240] sm:$0xf]
    %v162 = vld [vmem:[%s1 + $0x244] sm:$0xf]
    %v163 = vld [vmem:[%s1 + $0x248] sm:$0xf]
    %v164 = vld [vmem:[%s1 + $0x24c] sm:$0xf]
    %v165 = vld [vmem:[%s1 + $0x250] sm:$0xf]
    %v166 = vld [vmem:[%s1 + $0x254] sm:$0xf]
    %v167 = vld [vmem:[%s1 + $0x258] sm:$0xf]
    %v168 = vld [vmem:[%s1 + $0x25c] sm:$0xf]
    %v169 = vld [vmem:[%s1 + $0x260] sm:$0xf]
    %v170 = vld [vmem:[%s1 + $0x264] sm:$0xf]
    %v171 = vld [vmem:[%s1 + $0x268] sm:$0xf]
    %v172 = vld [vmem:[%s1 + $0x26c] sm:$0xf]
    %v173 = vld [vmem:[%s1 + $0x270] sm:$0xf]
    %v174 = vld [vmem:[%s1 + $0x274] sm:$0xf]
    %v175 = vld [vmem:[%s1 + $0x278] sm:$0xf]
    %v176 = vld [vmem:[%s1 + $0x27c] sm:$0xf]
    %v177 = vld [vmem:[%s1 + $0x280] sm:$0xf]
    %v178 = vld [vmem:[%s1 + $0x284] sm:$0xf]
    %v179 = vld [vmem:[%s1 + $0x288] sm:$0xf]
    %v180 = vld [vmem:[%s1 + $0x28c] sm:$0xf]
    %v181 = vld [vmem:[%s1 + $0x290] sm:$0xf]
    %v182 = vld [vmem:[%s1 + $0x294] sm:$0xf]
    %v183 = vld [vmem:[%s1 + $0x298] sm:$0xf]
    %v184 = vld [vmem:[%s1 + $0x29c] sm:$0xf]
    %v185 = vld [vmem:[%s1 + $0x2a0] sm:$0xf]
    %v186 = vld [vmem:[%s1 + $0x2a4] sm:$0xf]
    %v187 = vld [vmem:[%s1 + $0x2a8] sm:$0xf]
    %v188 = vld [vmem:[%s1 + $0x2ac] sm:$0xf]
    %v189 = vld [vmem:[%s1 + $0x2b0] sm:$0xf]
    %v190 = vld [vmem:[%s1 + $0x2b4] sm:$0xf]
    %v191 = vld [vmem:[%s1 + $0x2b8] sm:$0xf]
    %v192 = vld [vmem:[%s1 + $0x2bc] sm:$0xf]
    %v193 = vld [vmem:[%s1 + $0x2c0] sm:$0xf]
    %v194 = vld [vmem:[%s1 + $0x2c4] sm:$0xf]
    %v195 = vld [vmem:[%s1 + $0x2c8] sm:$0xf]
    %v196 = vld [vmem:[%s1 + $0x2cc] sm:$0xf]
    %v197 = vld [vmem:[%s1 + $0x2d0] sm:$0xf]
    %v198 = vld [vmem:[%s1 + $0x2d4] sm:$0xf]
    %v199 = vld [vmem:[%s1 + $0x2d8] sm:$0xf]
    %v200 = vld [vmem:[%s1 + $0x2dc] sm:$0xf]
    %v201 = vld [vmem:[%s1 + $0x2e0] sm:$0xf]
    %v202 = vld [vmem:[%s1 + $0x2e4] sm:$0xf]
    %v203 = vld [vmem:[%s1 + $0x2e8] sm:$0xf]
    %v204 = vld [vmem:[%s1 + $0x2ec] sm:$0xf]
    %v205 = vld [vmem:[%s1 + $0x2f0] sm:$0xf]
    %v206 = vld [vmem:[%s1 + $0x2f4] sm:$0xf]
    %v207 = vld [vmem:[%s1 + $0x2f8] sm:$0xf]
    %v208 = vld [vmem:[%s1 + $0x2fc] sm:$0xf]
    %v209 = vld [vmem:[%s1 + $0x300] sm:$0xf]
    %v210 = vld [vmem:[%s1 + $0x304] sm:$0xf]
    %v211 = vld [vmem:[%s1 + $0x308] sm:$0xf]
    %v212 = vld [vmem:[%s1 + $0x30c] sm:$0xf]
    %v213 = vld [vmem:[%s1 + $0x310] sm:$0xf]
    %v214 = vld [vmem:[%s1 + $0x314] sm:$0xf]
    %v215 = vld [vmem:[%s1 + $0x318] sm:$0xf]
    %v216 = vld [vmem:[%s1 + $0x31c] sm:$0xf]
    %v217 = vld [vmem:[%s1 + $0x320] sm:$0xf]
    %v218 = vld [vmem:[%s1 + $0x324] sm:$0xf]
    %v219 = vld [vmem:[%s1 + $0x328] sm:$0xf]
    %v220 = vld [vmem:[%s1 + $0x32c] sm:$0xf]
    %v221 = vld [vmem:[%s1 + $0x330] sm:$0xf]
    %v222 = vld [vmem:[%s1 + $0x334] sm:$0xf]
    %v223 = vld [vmem:[%s1 + $0x338] sm:$0xf]
    %v224 = vld [vmem:[%s1 + $0x33c] sm:$0xf]
    %v225 = vld [vmem:[%s1 + $0x340] sm:$0xf]
    %v226 = vld [vmem:[%s1 + $0x344] sm:$0xf]
    %v227 = vld [vmem:[%s1 + $0x348] sm:$0xf]
    %v228 = vld [vmem:[%s1 + $0x34c] sm:$0xf]
    %v229 = vld [vmem:[%s1 + $0x350] sm:$0xf]
    %v230 = vld [vmem:[%s1 + $0x354] sm:$0xf]
    %v231 = vld [vmem:[%s1 + $0x358] sm:$0xf]
    %v232 = vld [vmem:[%s1 + $0x35c] sm:$0xf]
    %v233 = vld [vmem:[%s1 + $0x360] sm:$0xf]
    %v234 = vld [vmem:[%s1 + $0x364] sm:$0xf]
    %v235 = vld [vmem:[%s1 + $0x368] sm:$0xf]
    %v236 = vld [vmem:[%s1 + $0x36c] sm:$0xf]
    %v237 = vld [vmem:[%s1 + $0x370] sm:$0xf]
    %v238 = vld [vmem:[%s1 + $0x374] sm:$0xf]
    %v239 = vld [vmem:[%s1 + $0x378] sm:$0xf]
    %v240 = vld [vmem:[%s1 + $0x37c] sm:$0xf]
    %v241 = vld [vmem:[%s1 + $0x380] sm:$0xf]
    %v242 = vld [vmem:[%s1 + $0x384] sm:$0xf]
    %v243 = vld [vmem:[%s1 + $0x388] sm:$0xf]
    %v244 = vld [vmem:[%s1 + $0x38c] sm:$0xf]
    %v245 = vld [vmem:[%s1 + $0x390] sm:$0xf]
    %v246 = vld [vmem:[%s1 + $0x394] sm:$0xf]
    %v247 = vld [vmem:[%s1 + $0x398] sm:$0xf]
    %v248 = vld [vmem:[%s1 + $0x39c] sm:$0xf]
    %v249 = vld [vmem:[%s1 + $0x3a0] sm:$0xf]
    %v250 = vld [vmem:[%s1 + $0x3a4] sm:$0xf]
    %v251 = vld [vmem:[%s1 + $0x3a8] sm:$0xf]
    %v252 = vld [vmem:[%s1 + $0x3ac] sm:$0xf]
    %v253 = vld [vmem:[%s1 + $0x3b0] sm:$0xf]
    %v254 = vld [vmem:[%s1 + $0x3b4] sm:$0xf]
    %v255 = vld [vmem:[%s1 + $0x3b8] sm:$0xf]
    %v256 = vld [vmem:[%s1 + $0x3bc] sm:$0xf]
    %v257 = vld [vmem:[%s1 + $0x3c0] sm:$0xf]
    %v258 = vld [vmem:[%s1 + $0x3c4] sm:$0xf]
    %v259 = vld [vmem:[%s1 + $0x3c8] sm:$0xf]
    %v260 = vld [vmem:[%s1 + $0x3cc] sm:$0xf]
    %v261 = vld [vmem:[%s1 + $0x3d0] sm:$0xf]
    %v262 = vld [vmem:[%s1 + $0x3d4] sm:$0xf]
    %v263 = vld [vmem:[%s1 + $0x3d8] sm:$0xf]
    %v264 = vld [vmem:[%s1 + $0x3dc] sm:$0xf]
    %v265 = vld [vmem:[%s1 + $0x3e0] sm:$0xf]
    %v266 = vld [vmem:[%s1 + $0x3e4] sm:$0xf]
    %v267 = vld [vmem:[%s1 + $0x3e8] sm:$0xf]
    %v268 = vld [vmem:[%s1 + $0x3ec] sm:$0xf]
    %v269 = vld [vmem:[%s1 + $0x3f0] sm:$0xf]
    %v270 = vld [vmem:[%s1 + $0x3f4] sm:$0xf]
    %v271 = vld [vmem:[%s1 + $0x3f8] sm:$0xf]
    %v272 = vld [vmem:[%s1 + $0x3fc] sm:$0xf]
    %v273 = vld [vmem:[%s2] sm:$0x1]
    %v275 = vperm.slane %v273, 0
    %278 = vst [vmem:[#allocation1] ss:$9 sm:$0xff] %v15
    %v279 = vld [vmem:[#allocation1] sm:$0xff]
    %v280 = vld [vmem:[#allocation1 + $0x9] sm:$0xff]
    %v281 = vld [vmem:[#allocation1 + $0x12] sm:$0xff]
    %v282 = vld [vmem:[#allocation1 + $0x1b] sm:$0xff]
    %v283 = vld [vmem:[#allocation1 + $0x24] sm:$0xff]
    %v284 = vld [vmem:[#allocation1 + $0x2d] sm:$0xff]
    %v285 = vld [vmem:[#allocation1 + $0x36] sm:$0xff]
    %v286 = vld [vmem:[#allocation1 + $0x3f] sm:$0xff]
    %288 = vst [vmem:[#allocation1] ss:$9 sm:$0xff] %v16
    %v289 = vld [vmem:[#allocation1] sm:$0xff]
    %v290 = vld [vmem:[#allocation1 + $0x9] sm:$0xff]
    %v291 = vld [vmem:[#allocation1 + $0x12] sm:$0xff]
    %v292 = vld [vmem:[#allocation1 + $0x1b] sm:$0xff]
    %v293 = vld [vmem:[#allocation1 + $0x24] sm:$0xff]
    %v294 = vld [vmem:[#allocation1 + $0x2d] sm:$0xff]
    %v295 = vld [vmem:[#allocation1 + $0x36] sm:$0xff]
    %v296 = vld [vmem:[#allocation1 + $0x3f] sm:$0xff]
    %v569 = vunpack.c.l.b16 %v17
    %v570 = vunpack.c.l.b16 %v18
    %v571 = vunpack.c.l.b16 %v19
    %v572 = vunpack.c.l.b16 %v20
    %v573 = vunpack.c.l.b16 %v21
    %v574 = vunpack.c.l.b16 %v22
    %v575 = vunpack.c.l.b16 %v23
    %v576 = vunpack.c.l.b16 %v24
    %v577 = vunpack.c.l.b16 %v25
    %v578 = vunpack.c.l.b16 %v26
    %v579 = vunpack.c.l.b16 %v27
    %v580 = vunpack.c.l.b16 %v28
    %v581 = vunpack.c.l.b16 %v29
    %v582 = vunpack.c.l.b16 %v30
    %v583 = vunpack.c.l.b16 %v31
    %v584 = vunpack.c.l.b16 %v32
    %v585 = vunpack.c.l.b16 %v33
    %v586 = vunpack.c.l.b16 %v34
    %v587 = vunpack.c.l.b16 %v35
    %v588 = vunpack.c.l.b16 %v36
    %v589 = vunpack.c.l.b16 %v37
    %v590 = vunpack.c.l.b16 %v38
    %v591 = vunpack.c.l.b16 %v39
    %v592 = vunpack.c.l.b16 %v40
    %v593 = vunpack.c.l.b16 %v41
    %v594 = vunpack.c.l.b16 %v42
    %v595 = vunpack.c.l.b16 %v43
    %v596 = vunpack.c.l.b16 %v44
    %v597 = vunpack.c.l.b16 %v45
    %v598 = vunpack.c.l.b16 %v46
    %v599 = vunpack.c.l.b16 %v47
    %v600 = vunpack.c.l.b16 %v48
    %v601 = vunpack.c.l.b16 %v49
    %v602 = vunpack.c.l.b16 %v50
    %v603 = vunpack.c.l.b16 %v51
    %v604 = vunpack.c.l.b16 %v52
    %v605 = vunpack.c.l.b16 %v53
    %v606 = vunpack.c.l.b16 %v54
    %v607 = vunpack.c.l.b16 %v55
    %v608 = vunpack.c.l.b16 %v56
    %v609 = vunpack.c.l.b16 %v57
    %v610 = vunpack.c.l.b16 %v58
    %v611 = vunpack.c.l.b16 %v59
    %v612 = vunpack.c.l.b16 %v60
    %v613 = vunpack.c.l.b16 %v61
    %v614 = vunpack.c.l.b16 %v62
    %v615 = vunpack.c.l.b16 %v63
    %v616 = vunpack.c.l.b16 %v64
    %v617 = vunpack.c.l.b16 %v65
    %v618 = vunpack.c.l.b16 %v66
    %v619 = vunpack.c.l.b16 %v67
    %v620 = vunpack.c.l.b16 %v68
    %v621 = vunpack.c.l.b16 %v69
    %v622 = vunpack.c.l.b16 %v70
    %v623 = vunpack.c.l.b16 %v71
    %v624 = vunpack.c.l.b16 %v72
    %v625 = vunpack.c.l.b16 %v73
    %v626 = vunpack.c.l.b16 %v74
    %v627 = vunpack.c.l.b16 %v75
    %v628 = vunpack.c.l.b16 %v76
    %v629 = vunpack.c.l.b16 %v77
    %v630 = vunpack.c.l.b16 %v78
    %v631 = vunpack.c.l.b16 %v79
    %v632 = vunpack.c.l.b16 %v80
    %v633 = vunpack.c.l.b16 %v81
    %v634 = vunpack.c.l.b16 %v82
    %v635 = vunpack.c.l.b16 %v83
    %v636 = vunpack.c.l.b16 %v84
    %v637 = vunpack.c.l.b16 %v85
    %v638 = vunpack.c.l.b16 %v86
    %v639 = vunpack.c.l.b16 %v87
    %v640 = vunpack.c.l.b16 %v88
    %v641 = vunpack.c.l.b16 %v89
    %v642 = vunpack.c.l.b16 %v90
    %v643 = vunpack.c.l.b16 %v91
    %v644 = vunpack.c.l.b16 %v92
    %v645 = vunpack.c.l.b16 %v93
    %v646 = vunpack.c.l.b16 %v94
    %v647 = vunpack.c.l.b16 %v95
    %v648 = vunpack.c.l.b16 %v96
    %v649 = vunpack.c.l.b16 %v97
    %v650 = vunpack.c.l.b16 %v98
    %v651 = vunpack.c.l.b16 %v99
    %v652 = vunpack.c.l.b16 %v100
    %v653 = vunpack.c.l.b16 %v101
    %v654 = vunpack.c.l.b16 %v102
    %v655 = vunpack.c.l.b16 %v103
    %v656 = vunpack.c.l.b16 %v104
    %v657 = vunpack.c.l.b16 %v105
    %v658 = vunpack.c.l.b16 %v106
    %v659 = vunpack.c.l.b16 %v107
    %v660 = vunpack.c.l.b16 %v108
    %v661 = vunpack.c.l.b16 %v109
    %v662 = vunpack.c.l.b16 %v110
    %v663 = vunpack.c.l.b16 %v111
    %v664 = vunpack.c.l.b16 %v112
    %v665 = vunpack.c.l.b16 %v113
    %v666 = vunpack.c.l.b16 %v114
    %v667 = vunpack.c.l.b16 %v115
    %v668 = vunpack.c.l.b16 %v116
    %v669 = vunpack.c.l.b16 %v117
    %v670 = vunpack.c.l.b16 %v118
    %v671 = vunpack.c.l.b16 %v119
    %v672 = vunpack.c.l.b16 %v120
    %v673 = vunpack.c.l.b16 %v121
    %v674 = vunpack.c.l.b16 %v122
    %v675 = vunpack.c.l.b16 %v123
    %v676 = vunpack.c.l.b16 %v124
    %v677 = vunpack.c.l.b16 %v125
    %v678 = vunpack.c.l.b16 %v126
    %v679 = vunpack.c.l.b16 %v127
    %v680 = vunpack.c.l.b16 %v128
    %v681 = vunpack.c.l.b16 %v129
    %v682 = vunpack.c.l.b16 %v130
    %v683 = vunpack.c.l.b16 %v131
    %v684 = vunpack.c.l.b16 %v132
    %v685 = vunpack.c.l.b16 %v133
    %v686 = vunpack.c.l.b16 %v134
    %v687 = vunpack.c.l.b16 %v135
    %v688 = vunpack.c.l.b16 %v136
    %v689 = vunpack.c.l.b16 %v137
    %v690 = vunpack.c.l.b16 %v138
    %v691 = vunpack.c.l.b16 %v139
    %v692 = vunpack.c.l.b16 %v140
    %v693 = vunpack.c.l.b16 %v141
    %v694 = vunpack.c.l.b16 %v142
    %v695 = vunpack.c.l.b16 %v143
    %v696 = vunpack.c.l.b16 %v144
    %v697 = vunpack.c.l.b16 %v145
    %v698 = vunpack.c.l.b16 %v146
    %v699 = vunpack.c.l.b16 %v147
    %v700 = vunpack.c.l.b16 %v148
    %v701 = vunpack.c.l.b16 %v149
    %v702 = vunpack.c.l.b16 %v150
    %v703 = vunpack.c.l.b16 %v151
    %v704 = vunpack.c.l.b16 %v152
    %v705 = vunpack.c.l.b16 %v153
    %v706 = vunpack.c.l.b16 %v154
    %v707 = vunpack.c.l.b16 %v155
    %v708 = vunpack.c.l.b16 %v156
    %v709 = vunpack.c.l.b16 %v157
    %v710 = vunpack.c.l.b16 %v158
    %v711 = vunpack.c.l.b16 %v159
    %v712 = vunpack.c.l.b16 %v160
    %v713 = vunpack.c.l.b16 %v161
    %v714 = vunpack.c.l.b16 %v162
    %v715 = vunpack.c.l.b16 %v163
    %v716 = vunpack.c.l.b16 %v164
    %v717 = vunpack.c.l.b16 %v165
    %v718 = vunpack.c.l.b16 %v166
    %v719 = vunpack.c.l.b16 %v167
    %v720 = vunpack.c.l.b16 %v168
    %v721 = vunpack.c.l.b16 %v169
    %v722 = vunpack.c.l.b16 %v170
    %v723 = vunpack.c.l.b16 %v171
    %v724 = vunpack.c.l.b16 %v172
    %v725 = vunpack.c.l.b16 %v173
    %v726 = vunpack.c.l.b16 %v174
    %v727 = vunpack.c.l.b16 %v175
    %v728 = vunpack.c.l.b16 %v176
    %v729 = vunpack.c.l.b16 %v177
    %v730 = vunpack.c.l.b16 %v178
    %v731 = vunpack.c.l.b16 %v179
    %v732 = vunpack.c.l.b16 %v180
    %v733 = vunpack.c.l.b16 %v181
    %v734 = vunpack.c.l.b16 %v182
    %v735 = vunpack.c.l.b16 %v183
    %v736 = vunpack.c.l.b16 %v184
    %v737 = vunpack.c.l.b16 %v185
    %v738 = vunpack.c.l.b16 %v186
    %v739 = vunpack.c.l.b16 %v187
    %v740 = vunpack.c.l.b16 %v188
    %v741 = vunpack.c.l.b16 %v189
    %v742 = vunpack.c.l.b16 %v190
    %v743 = vunpack.c.l.b16 %v191
    %v744 = vunpack.c.l.b16 %v192
    %v745 = vunpack.c.l.b16 %v193
    %v746 = vunpack.c.l.b16 %v194
    %v747 = vunpack.c.l.b16 %v195
    %v748 = vunpack.c.l.b16 %v196
    %v749 = vunpack.c.l.b16 %v197
    %v750 = vunpack.c.l.b16 %v198
    %v751 = vunpack.c.l.b16 %v199
    %v752 = vunpack.c.l.b16 %v200
    %v753 = vunpack.c.l.b16 %v201
    %v754 = vunpack.c.l.b16 %v202
    %v755 = vunpack.c.l.b16 %v203
    %v756 = vunpack.c.l.b16 %v204
    %v757 = vunpack.c.l.b16 %v205
    %v758 = vunpack.c.l.b16 %v206
    %v759 = vunpack.c.l.b16 %v207
    %v760 = vunpack.c.l.b16 %v208
    %v761 = vunpack.c.l.b16 %v209
    %v762 = vunpack.c.l.b16 %v210
    %v763 = vunpack.c.l.b16 %v211
    %v764 = vunpack.c.l.b16 %v212
    %v765 = vunpack.c.l.b16 %v213
    %v766 = vunpack.c.l.b16 %v214
    %v767 = vunpack.c.l.b16 %v215
    %v768 = vunpack.c.l.b16 %v216
    %v769 = vunpack.c.l.b16 %v217
    %v770 = vunpack.c.l.b16 %v218
    %v771 = vunpack.c.l.b16 %v219
    %v772 = vunpack.c.l.b16 %v220
    %v773 = vunpack.c.l.b16 %v221
    %v774 = vunpack.c.l.b16 %v222
    %v775 = vunpack.c.l.b16 %v223
    %v776 = vunpack.c.l.b16 %v224
    %v777 = vunpack.c.l.b16 %v225
    %v778 = vunpack.c.l.b16 %v226
    %v779 = vunpack.c.l.b16 %v227
    %v780 = vunpack.c.l.b16 %v228
    %v781 = vunpack.c.l.b16 %v229
    %v782 = vunpack.c.l.b16 %v230
    %v783 = vunpack.c.l.b16 %v231
    %v784 = vunpack.c.l.b16 %v232
    %v785 = vunpack.c.l.b16 %v233
    %v786 = vunpack.c.l.b16 %v234
    %v787 = vunpack.c.l.b16 %v235
    %v788 = vunpack.c.l.b16 %v236
    %v789 = vunpack.c.l.b16 %v237
    %v790 = vunpack.c.l.b16 %v238
    %v791 = vunpack.c.l.b16 %v239
    %v792 = vunpack.c.l.b16 %v240
    %v793 = vunpack.c.l.b16 %v241
    %v794 = vunpack.c.l.b16 %v242
    %v795 = vunpack.c.l.b16 %v243
    %v796 = vunpack.c.l.b16 %v244
    %v797 = vunpack.c.l.b16 %v245
    %v798 = vunpack.c.l.b16 %v246
    %v799 = vunpack.c.l.b16 %v247
    %v800 = vunpack.c.l.b16 %v248
    %v801 = vunpack.c.l.b16 %v249
    %v802 = vunpack.c.l.b16 %v250
    %v803 = vunpack.c.l.b16 %v251
    %v804 = vunpack.c.l.b16 %v252
    %v805 = vunpack.c.l.b16 %v253
    %v806 = vunpack.c.l.b16 %v254
    %v807 = vunpack.c.l.b16 %v255
    %v808 = vunpack.c.l.b16 %v256
    %v809 = vunpack.c.l.b16 %v257
    %v810 = vunpack.c.l.b16 %v258
    %v811 = vunpack.c.l.b16 %v259
    %v812 = vunpack.c.l.b16 %v260
    %v813 = vunpack.c.l.b16 %v261
    %v814 = vunpack.c.l.b16 %v262
    %v815 = vunpack.c.l.b16 %v263
    %v816 = vunpack.c.l.b16 %v264
    %v817 = vunpack.c.l.b16 %v265
    %v818 = vunpack.c.l.b16 %v266
    %v819 = vunpack.c.l.b16 %v267
    %v820 = vunpack.c.l.b16 %v268
    %v821 = vunpack.c.l.b16 %v269
    %v822 = vunpack.c.l.b16 %v270
    %v823 = vunpack.c.l.b16 %v271
    %v824 = vunpack.c.l.b16 %v272
    %v825 = vpack.c.b16 %v570, %v569
    %v826 = vpack.c.b16 %v572, %v571
    %v827 = vpack.c.b16 %v574, %v573
    %v828 = vpack.c.b16 %v576, %v575
    %v829 = vpack.c.b16 %v578, %v577
    %v830 = vpack.c.b16 %v580, %v579
    %v831 = vpack.c.b16 %v582, %v581
    %v832 = vpack.c.b16 %v584, %v583
    %v833 = vpack.c.b16 %v586, %v585
    %v834 = vpack.c.b16 %v588, %v587
    %v835 = vpack.c.b16 %v590, %v589
    %v836 = vpack.c.b16 %v592, %v591
    %v837 = vpack.c.b16 %v594, %v593
    %v838 = vpack.c.b16 %v596, %v595
    %v839 = vpack.c.b16 %v598, %v597
    %v840 = vpack.c.b16 %v600, %v599
    %v841 = vpack.c.b16 %v602, %v601
    %v842 = vpack.c.b16 %v604, %v603
    %v843 = vpack.c.b16 %v606, %v605
    %v844 = vpack.c.b16 %v608, %v607
    %v845 = vpack.c.b16 %v610, %v609
    %v846 = vpack.c.b16 %v612, %v611
    %v847 = vpack.c.b16 %v614, %v613
    %v848 = vpack.c.b16 %v616, %v615
    %v849 = vpack.c.b16 %v618, %v617
    %v850 = vpack.c.b16 %v620, %v619
    %v851 = vpack.c.b16 %v622, %v621
    %v852 = vpack.c.b16 %v624, %v623
    %v853 = vpack.c.b16 %v626, %v625
    %v854 = vpack.c.b16 %v628, %v627
    %v855 = vpack.c.b16 %v630, %v629
    %v856 = vpack.c.b16 %v632, %v631
    %v857 = vpack.c.b16 %v634, %v633
    %v858 = vpack.c.b16 %v636, %v635
    %v859 = vpack.c.b16 %v638, %v637
    %v860 = vpack.c.b16 %v640, %v639
    %v861 = vpack.c.b16 %v642, %v641
    %v862 = vpack.c.b16 %v644, %v643
    %v863 = vpack.c.b16 %v646, %v645
    %v864 = vpack.c.b16 %v648, %v647
    %v865 = vpack.c.b16 %v650, %v649
    %v866 = vpack.c.b16 %v652, %v651
    %v867 = vpack.c.b16 %v654, %v653
    %v868 = vpack.c.b16 %v656, %v655
    %v869 = vpack.c.b16 %v658, %v657
    %v870 = vpack.c.b16 %v660, %v659
    %v871 = vpack.c.b16 %v662, %v661
    %v872 = vpack.c.b16 %v664, %v663
    %v873 = vpack.c.b16 %v666, %v665
    %v874 = vpack.c.b16 %v668, %v667
    %v875 = vpack.c.b16 %v670, %v669
    %v876 = vpack.c.b16 %v672, %v671
    %v877 = vpack.c.b16 %v674, %v673
    %v878 = vpack.c.b16 %v676, %v675
    %v879 = vpack.c.b16 %v678, %v677
    %v880 = vpack.c.b16 %v680, %v679
    %v881 = vpack.c.b16 %v682, %v681
    %v882 = vpack.c.b16 %v684, %v683
    %v883 = vpack.c.b16 %v686, %v685
    %v884 = vpack.c.b16 %v688, %v687
    %v885 = vpack.c.b16 %v690, %v689
    %v886 = vpack.c.b16 %v692, %v691
    %v887 = vpack.c.b16 %v694, %v693
    %v888 = vpack.c.b16 %v696, %v695
    %v889 = vpack.c.b16 %v698, %v697
    %v890 = vpack.c.b16 %v700, %v699
    %v891 = vpack.c.b16 %v702, %v701
    %v892 = vpack.c.b16 %v704, %v703
    %v893 = vpack.c.b16 %v706, %v705
    %v894 = vpack.c.b16 %v708, %v707
    %v895 = vpack.c.b16 %v710, %v709
    %v896 = vpack.c.b16 %v712, %v711
    %v897 = vpack.c.b16 %v714, %v713
    %v898 = vpack.c.b16 %v716, %v715
    %v899 = vpack.c.b16 %v718, %v717
    %v900 = vpack.c.b16 %v720, %v719
    %v901 = vpack.c.b16 %v722, %v721
    %v902 = vpack.c.b16 %v724, %v723
    %v903 = vpack.c.b16 %v726, %v725
    %v904 = vpack.c.b16 %v728, %v727
    %v905 = vpack.c.b16 %v730, %v729
    %v906 = vpack.c.b16 %v732, %v731
    %v907 = vpack.c.b16 %v734, %v733
    %v908 = vpack.c.b16 %v736, %v735
    %v909 = vpack.c.b16 %v738, %v737
    %v910 = vpack.c.b16 %v740, %v739
    %v911 = vpack.c.b16 %v742, %v741
    %v912 = vpack.c.b16 %v744, %v743
    %v913 = vpack.c.b16 %v746, %v745
    %v914 = vpack.c.b16 %v748, %v747
    %v915 = vpack.c.b16 %v750, %v749
    %v916 = vpack.c.b16 %v752, %v751
    %v917 = vpack.c.b16 %v754, %v753
    %v918 = vpack.c.b16 %v756, %v755
    %v919 = vpack.c.b16 %v758, %v757
    %v920 = vpack.c.b16 %v760, %v759
    %v921 = vpack.c.b16 %v762, %v761
    %v922 = vpack.c.b16 %v764, %v763
    %v923 = vpack.c.b16 %v766, %v765
    %v924 = vpack.c.b16 %v768, %v767
    %v925 = vpack.c.b16 %v770, %v769
    %v926 = vpack.c.b16 %v772, %v771
    %v927 = vpack.c.b16 %v774, %v773
    %v928 = vpack.c.b16 %v776, %v775
    %v929 = vpack.c.b16 %v778, %v777
    %v930 = vpack.c.b16 %v780, %v779
    %v931 = vpack.c.b16 %v782, %v781
    %v932 = vpack.c.b16 %v784, %v783
    %v933 = vpack.c.b16 %v786, %v785
    %v934 = vpack.c.b16 %v788, %v787
    %v935 = vpack.c.b16 %v790, %v789
    %v936 = vpack.c.b16 %v792, %v791
    %v937 = vpack.c.b16 %v794, %v793
    %v938 = vpack.c.b16 %v796, %v795
    %v939 = vpack.c.b16 %v798, %v797
    %v940 = vpack.c.b16 %v800, %v799
    %v941 = vpack.c.b16 %v802, %v801
    %v942 = vpack.c.b16 %v804, %v803
    %v943 = vpack.c.b16 %v806, %v805
    %v944 = vpack.c.b16 %v808, %v807
    %v945 = vpack.c.b16 %v810, %v809
    %v946 = vpack.c.b16 %v812, %v811
    %v947 = vpack.c.b16 %v814, %v813
    %v948 = vpack.c.b16 %v816, %v815
    %v949 = vpack.c.b16 %v818, %v817
    %v950 = vpack.c.b16 %v820, %v819
    %v951 = vpack.c.b16 %v822, %v821
    %v952 = vpack.c.b16 %v824, %v823
    %1081 = vmatpush.bf16.msra.mxu0 %v832
    %1082 = vmatpush.bf16.msra.mxu0 %v831
    %1083 = vmatpush.bf16.msra.mxu0 %v830
    %1084 = vmatpush.bf16.msra.mxu0 %v829
    %1085 = vmatpush.bf16.msra.mxu0 %v828
    %1086 = vmatpush.bf16.msra.mxu0 %v827
    %1087 = vmatpush.bf16.msra.mxu0 %v826
    %1088 = vmatpush.bf16.msra.mxu0 %v825
    %1089 = vmatmul.bf16.gmra.mxu0 %v279
    %v1090 = vpop.f32.mrf.mxu0
    %v1091 = vadd.f32 %v275, %v1090
    %v1092 = vpop.f32.mrf.mxu0
    %1093 = vdwg.mxu0
    %1094 = vmatpush.bf16.msra.mxu0 %v840
    %1095 = vmatpush.bf16.msra.mxu0 %v839
    %1096 = vmatpush.bf16.msra.mxu0 %v838
    %1097 = vmatpush.bf16.msra.mxu0 %v837
    %1098 = vmatpush.bf16.msra.mxu0 %v836
    %1099 = vmatpush.bf16.msra.mxu0 %v835
    %1100 = vmatpush.bf16.msra.mxu0 %v834
    %1101 = vmatpush.bf16.msra.mxu0 %v833
    %1102 = vmatmul.bf16.gmra.mxu0 %v280
    %v1103 = vpop.f32.mrf.mxu0
    %v1104 = vadd.f32 %v1091, %v1103
    %v1105 = vpop.f32.mrf.mxu0
    %1106 = vdwg.mxu0
    %1107 = vmatpush.bf16.msra.mxu0 %v848
    %1108 = vmatpush.bf16.msra.mxu0 %v847
    %1109 = vmatpush.bf16.msra.mxu0 %v846
    %1110 = vmatpush.bf16.msra.mxu0 %v845
    %1111 = vmatpush.bf16.msra.mxu0 %v844
    %1112 = vmatpush.bf16.msra.mxu0 %v843
    %1113 = vmatpush.bf16.msra.mxu0 %v842
    %1114 = vmatpush.bf16.msra.mxu0 %v841
    %1115 = vmatmul.bf16.gmra.mxu0 %v281
    %v1116 = vpop.f32.mrf.mxu0
    %v1117 = vadd.f32 %v1104, %v1116
    %v1118 = vpop.f32.mrf.mxu0
    %1119 = vdwg.mxu0
    %1120 = vmatpush.bf16.msra.mxu0 %v856
    %1121 = vmatpush.bf16.msra.mxu0 %v855
    %1122 = vmatpush.bf16.msra.mxu0 %v854
    %1123 = vmatpush.bf16.msra.mxu0 %v853
    %1124 = vmatpush.bf16.msra.mxu0 %v852
    %1125 = vmatpush.bf16.msra.mxu0 %v851
    %1126 = vmatpush.bf16.msra.mxu0 %v850
    %1127 = vmatpush.bf16.msra.mxu0 %v849
    %1128 = vmatmul.bf16.gmra.mxu0 %v282
    %v1129 = vpop.f32.mrf.mxu0
    %v1130 = vadd.f32 %v1117, %v1129
    %v1131 = vpop.f32.mrf.mxu0
    %1132 = vdwg.mxu0
    %1133 = vmatpush.bf16.msra.mxu0 %v864
    %1134 = vmatpush.bf16.msra.mxu0 %v863
    %1135 = vmatpush.bf16.msra.mxu0 %v862
    %1136 = vmatpush.bf16.msra.mxu0 %v861
    %1137 = vmatpush.bf16.msra.mxu0 %v860
    %1138 = vmatpush.bf16.msra.mxu0 %v859
    %1139 = vmatpush.bf16.msra.mxu0 %v858
    %1140 = vmatpush.bf16.msra.mxu0 %v857
    %1141 = vmatmul.bf16.gmra.mxu0 %v283
    %v1142 = vpop.f32.mrf.mxu0
    %v1143 = vadd.f32 %v1130, %v1142
    %v1144 = vpop.f32.mrf.mxu0
    %1145 = vdwg.mxu0
    %1146 = vmatpush.bf16.msra.mxu0 %v872
    %1147 = vmatpush.bf16.msra.mxu0 %v871
    %1148 = vmatpush.bf16.msra.mxu0 %v870
    %1149 = vmatpush.bf16.msra.mxu0 %v869
    %1150 = vmatpush.bf16.msra.mxu0 %v868
    %1151 = vmatpush.bf16.msra.mxu0 %v867
    %1152 = vmatpush.bf16.msra.mxu0 %v866
    %1153 = vmatpush.bf16.msra.mxu0 %v865
    %1154 = vmatmul.bf16.gmra.mxu0 %v284
    %v1155 = vpop.f32.mrf.mxu0
    %v1156 = vadd.f32 %v1143, %v1155
    %v1157 = vpop.f32.mrf.mxu0
    %1158 = vdwg.mxu0
    %1159 = vmatpush.bf16.msra.mxu0 %v880
    %1160 = vmatpush.bf16.msra.mxu0 %v879
    %1161 = vmatpush.bf16.msra.mxu0 %v878
    %1162 = vmatpush.bf16.msra.mxu0 %v877
    %1163 = vmatpush.bf16.msra.mxu0 %v876
    %1164 = vmatpush.bf16.msra.mxu0 %v875
    %1165 = vmatpush.bf16.msra.mxu0 %v874
    %1166 = vmatpush.bf16.msra.mxu0 %v873
    %1167 = vmatmul.bf16.gmra.mxu0 %v285
    %v1168 = vpop.f32.mrf.mxu0
    %v1169 = vadd.f32 %v1156, %v1168
    %v1170 = vpop.f32.mrf.mxu0
    %1171 = vdwg.mxu0
    %1172 = vmatpush.bf16.msra.mxu0 %v888
    %1173 = vmatpush.bf16.msra.mxu0 %v887
    %1174 = vmatpush.bf16.msra.mxu0 %v886
    %1175 = vmatpush.bf16.msra.mxu0 %v885
    %1176 = vmatpush.bf16.msra.mxu0 %v884
    %1177 = vmatpush.bf16.msra.mxu0 %v883
    %1178 = vmatpush.bf16.msra.mxu0 %v882
    %1179 = vmatpush.bf16.msra.mxu0 %v881
    %1180 = vmatmul.bf16.gmra.mxu0 %v286
    %v1181 = vpop.f32.mrf.mxu0
    %v1182 = vadd.f32 %v1169, %v1181
    %v1183 = vpop.f32.mrf.mxu0
    %1184 = vdwg.mxu0
    %1185 = vmatpush.bf16.msra.mxu0 %v896
    %1186 = vmatpush.bf16.msra.mxu0 %v895
    %1187 = vmatpush.bf16.msra.mxu0 %v894
    %1188 = vmatpush.bf16.msra.mxu0 %v893
    %1189 = vmatpush.bf16.msra.mxu0 %v892
    %1190 = vmatpush.bf16.msra.mxu0 %v891
    %1191 = vmatpush.bf16.msra.mxu0 %v890
    %1192 = vmatpush.bf16.msra.mxu0 %v889
    %1193 = vmatmul.bf16.gmra.mxu0 %v289
    %v1194 = vpop.f32.mrf.mxu0
    %v1195 = vadd.f32 %v1182, %v1194
    %v1196 = vpop.f32.mrf.mxu0
    %1197 = vdwg.mxu0
    %1198 = vmatpush.bf16.msra.mxu0 %v904
    %1199 = vmatpush.bf16.msra.mxu0 %v903
    %1200 = vmatpush.bf16.msra.mxu0 %v902
    %1201 = vmatpush.bf16.msra.mxu0 %v901
    %1202 = vmatpush.bf16.msra.mxu0 %v900
    %1203 = vmatpush.bf16.msra.mxu0 %v899
    %1204 = vmatpush.bf16.msra.mxu0 %v898
    %1205 = vmatpush.bf16.msra.mxu0 %v897
    %1206 = vmatmul.bf16.gmra.mxu0 %v290
    %v1207 = vpop.f32.mrf.mxu0
    %v1208 = vadd.f32 %v1195, %v1207
    %v1209 = vpop.f32.mrf.mxu0
    %1210 = vdwg.mxu0
    %1211 = vmatpush.bf16.msra.mxu0 %v912
    %1212 = vmatpush.bf16.msra.mxu0 %v911
    %1213 = vmatpush.bf16.msra.mxu0 %v910
    %1214 = vmatpush.bf16.msra.mxu0 %v909
    %1215 = vmatpush.bf16.msra.mxu0 %v908
    %1216 = vmatpush.bf16.msra.mxu0 %v907
    %1217 = vmatpush.bf16.msra.mxu0 %v906
    %1218 = vmatpush.bf16.msra.mxu0 %v905
    %1219 = vmatmul.bf16.gmra.mxu0 %v291
    %v1220 = vpop.f32.mrf.mxu0
    %v1221 = vadd.f32 %v1208, %v1220
    %v1222 = vpop.f32.mrf.mxu0
    %1223 = vdwg.mxu0
    %1224 = vmatpush.bf16.msra.mxu0 %v920
    %1225 = vmatpush.bf16.msra.mxu0 %v919
    %1226 = vmatpush.bf16.msra.mxu0 %v918
    %1227 = vmatpush.bf16.msra.mxu0 %v917
    %1228 = vmatpush.bf16.msra.mxu0 %v916
    %1229 = vmatpush.bf16.msra.mxu0 %v915
    %1230 = vmatpush.bf16.msra.mxu0 %v914
    %1231 = vmatpush.bf16.msra.mxu0 %v913
    %1232 = vmatmul.bf16.gmra.mxu0 %v292
    %v1233 = vpop.f32.mrf.mxu0
    %v1234 = vadd.f32 %v1221, %v1233
    %v1235 = vpop.f32.mrf.mxu0
    %1236 = vdwg.mxu0
    %1237 = vmatpush.bf16.msra.mxu0 %v928
    %1238 = vmatpush.bf16.msra.mxu0 %v927
    %1239 = vmatpush.bf16.msra.mxu0 %v926
    %1240 = vmatpush.bf16.msra.mxu0 %v925
    %1241 = vmatpush.bf16.msra.mxu0 %v924
    %1242 = vmatpush.bf16.msra.mxu0 %v923
    %1243 = vmatpush.bf16.msra.mxu0 %v922
    %1244 = vmatpush.bf16.msra.mxu0 %v921
    %1245 = vmatmul.bf16.gmra.mxu0 %v293
    %v1246 = vpop.f32.mrf.mxu0
    %v1247 = vadd.f32 %v1234, %v1246
    %v1248 = vpop.f32.mrf.mxu0
    %1249 = vdwg.mxu0
    %1250 = vmatpush.bf16.msra.mxu0 %v936
    %1251 = vmatpush.bf16.msra.mxu0 %v935
    %1252 = vmatpush.bf16.msra.mxu0 %v934
    %1253 = vmatpush.bf16.msra.mxu0 %v933
    %1254 = vmatpush.bf16.msra.mxu0 %v932
    %1255 = vmatpush.bf16.msra.mxu0 %v931
    %1256 = vmatpush.bf16.msra.mxu0 %v930
    %1257 = vmatpush.bf16.msra.mxu0 %v929
    %1258 = vmatmul.bf16.gmra.mxu0 %v294
    %v1259 = vpop.f32.mrf.mxu0
    %v1260 = vadd.f32 %v1247, %v1259
    %v1261 = vpop.f32.mrf.mxu0
    %1262 = vdwg.mxu0
    %1263 = vmatpush.bf16.msra.mxu0 %v944
    %1264 = vmatpush.bf16.msra.mxu0 %v943
    %1265 = vmatpush.bf16.msra.mxu0 %v942
    %1266 = vmatpush.bf16.msra.mxu0 %v941
    %1267 = vmatpush.bf16.msra.mxu0 %v940
    %1268 = vmatpush.bf16.msra.mxu0 %v939
    %1269 = vmatpush.bf16.msra.mxu0 %v938
    %1270 = vmatpush.bf16.msra.mxu0 %v937
    %1271 = vmatmul.bf16.gmra.mxu0 %v295
    %v1272 = vpop.f32.mrf.mxu0
    %v1273 = vadd.f32 %v1260, %v1272
    %v1274 = vpop.f32.mrf.mxu0
    %1275 = vdwg.mxu0
    %1276 = vmatpush.bf16.msra.mxu0 %v952
    %1277 = vmatpush.bf16.msra.mxu0 %v951
    %1278 = vmatpush.bf16.msra.mxu0 %v950
    %1279 = vmatpush.bf16.msra.mxu0 %v949
    %1280 = vmatpush.bf16.msra.mxu0 %v948
    %1281 = vmatpush.bf16.msra.mxu0 %v947
    %1282 = vmatpush.bf16.msra.mxu0 %v946
    %1283 = vmatpush.bf16.msra.mxu0 %v945
    %1284 = vmatmul.bf16.gmra.mxu0 %v296
    %v1285 = vpop.f32.mrf.mxu0
    %v1286 = vadd.f32 %v1273, %v1285
    %v1287 = vpop.f32.mrf.mxu0
    %1288 = vdwg.mxu0
    %vm1289 = vcmask 123904
    %1290 = vst.msk [vmem:[#allocation2] sm:$0x3] %vm1289, %v1286
    // Predicated region
    $region14: #{shallow_cnn_forward.9} parent=1 // pred_check
      _
    $region15: #{shallow_cnn_forward.9} parent=1 // pred_check_branch
      %1292 = sbr.rel (0) target = $region17
    $region16: #{shallow_cnn_forward.9} parent=1 // pred_region
      %1294 = vsyncadd [#allocation3], 0
      %s1296 = sshll.u32 [#allocation2], 4
      %s1297 = int_to_ptr.vmem [resolvable:$true] %s1296
      %s1298 = sshll.u32 %s3, 4
      %s1299 = int_to_ptr.hbm [resolvable:$true] %s1298
      %1301 = dma.vmem_to_hbm [thread:$0]  %s1297, 32, %s1299, [#allocation3]
    $region17: #{shallow_cnn_forward.9} parent=1 // pred_fallthru
      _
    // Predicated region
    $region18: #{shallow_cnn_forward.9} parent=1 // pred_check
      _
    $region19: #{shallow_cnn_forward.9} parent=1 // pred_check_branch
      %1303 = sbr.rel (0) target = $region21
    $region20: #{shallow_cnn_forward.9} parent=1 // pred_region
      %1305 = dma.done [#allocation3], 32
    $region21: #{shallow_cnn_forward.9} parent=1 // pred_fallthru
      _
    %1306 = vsyncpa [#allocation3], 1

</llo_original>
